<compile_context>
chip_gen: v7x
topology: tpu7x:2x2x1
jax: 0.10.0
libtpu: 0.0.40
codegen_flags: <defaults>
</compile_context>

<pallas_src>
import functools

import jax
import jax.numpy as jnp
from jax import lax
from jax.experimental import pallas as pl
from jax.experimental.pallas import tpu as pltpu


# --------------------------------------------------------------------------- #
# Kernels
# --------------------------------------------------------------------------- #
def _logm_mxu_kernel(u_ref, logw_ref, o_ref):
    """Reconstruct U diag(log w) U^T for a block of TB matrices (MXU path).

    u_ref:    (TB, N, N) eigenvectors.
    logw_ref: (TB, 1, N) clamped log-eigenvalues (computed in the wrapper).
    o_ref:    (TB, N, N) matrix log.
    """
    # Column-scale by log(w) on the VPU, in f32.
    scaled = u_ref[...].astype(jnp.float32) * logw_ref[...]
    # Batched  S @ U^T, contracting the eigen-index of U against itself
    # (no second pre-transposed operand -> one less (B,N,N) HBM read).
    out = lax.dot_general(
        scaled.astype(u_ref.dtype), u_ref[...],
        dimension_numbers=(((2,), (2,)), ((0,), (0,))),
        preferred_element_type=jnp.float32)
    o_ref[...] = out.astype(o_ref.dtype)


def _logm_lane_batch_kernel(ut_ref, logw_ref, o_ref, *, n):
    """Batch-on-lane VPU path for small N (lane-dense stores, no MXU).

    ut_ref:   (N, N, TB)  [k, i, b] = U_b[i, k]   (batch on the lane axis)
    logw_ref: (N, TB)     [k, b]    = log(w_b[k])
    o_ref:    (N, N, TB)  [i, j, b] = logm(X_b)[i, j]
    """
    u = ut_ref[...]                                    # (k, i, b)
    s = u * logw_ref[...][:, None, :]                  # (k, j, b): slab k scaled by log w_k
    acc = jnp.zeros(o_ref.shape, jnp.float32)
    for k in range(n):                                 # static unroll (n <= 32)
        # acc[i, j, b] += U_b[i, k] * log(w_b[k]) * U_b[j, k]
        acc = acc + u[k][:, None, :] * s[k][None, :, :]
    o_ref[...] = acc.astype(o_ref.dtype)


# --------------------------------------------------------------------------- #
# Generation-aware sizing helpers
# --------------------------------------------------------------------------- #
def _round_up(x, m):
    return -(-x // m) * m


def _vmem_budget_and_limit():
    """(tile-sizing budget, scoped vmem_limit_bytes), derived from the chip's VMEM."""
    try:
        cap = int(pltpu.get_tpu_info().vmem_capacity_bytes)
    except Exception:
        cap = 64 * 1024 * 1024                       # conservative (v7x-sized) fallback
    budget = min(cap // 3, 44 * 1024 * 1024)         # ~21 MiB on v7x, ~42 MiB on v5e/v6e
    limit = min(cap // 2, 64 * 1024 * 1024)          # raise scoped limit on v5e/v6e, cap on v7x
    return budget, max(limit, budget + (4 << 20))


def _num_tensorcores():
    """Best-effort TensorCores-per-device probe (v7x: 2, v5e/v6e: 1)."""
    try:
        dev = jax.devices()[0]
        for attr in ("num_cores", "core_count"):
            v = getattr(dev, attr, None)
            if isinstance(v, int) and v > 0:
                return v
    except Exception:
        pass
    return 1


# --------------------------------------------------------------------------- #
# Path builders
# --------------------------------------------------------------------------- #
def _spd_logm_mxu(u, logw, out_dtype):
    """General-N path: batched MXU reconstruction. u: (B,N,N); logw: (B,1,N)."""
    B, N, _ = u.shape
    budget, vmem_limit = _vmem_budget_and_limit()

    n_sub = _round_up(N, 8)
    n_lane = _round_up(N, 128)
    mat_in = n_sub * n_lane * u.dtype.itemsize       # one padded (N,N) input tile in VMEM
    mat_out = n_sub * n_lane * 4                     # f32 output tile
    row_lw = 8 * n_lane * 4                          # (1,N) log-eigenvalue row (padded)
    # Double-buffered pipeline blocks (u, logw, out) + ~one block for the scaled
    # temporary / compiler slack.
    per_elem = 2 * (mat_in + row_lw + mat_out) + max(mat_in, mat_out)
    tb = max(1, min(B, budget // per_elem))

    cores = _num_tensorcores()
    if cores > 1 and B >= cores:
        # Only cap when the chip actually has >1 TensorCore.
        tb = min(tb, max(1, _round_up(B, cores) // cores))
    # TODO(synk): on v7x, CORE_PARALLEL / an explicit core_map over the 2-TC mesh
    # would shard the batch axis across cores; plain "parallel" kept for portability.

    Bp = _round_up(B, tb)
    if Bp != B:
        pad = Bp - B
        u = jnp.pad(u, ((0, pad), (0, 0), (0, 0)))
        logw = jnp.pad(logw, ((0, pad), (0, 0), (0, 0)))

    out = pl.pallas_call(
        _logm_mxu_kernel,
        out_shape=jax.ShapeDtypeStruct((Bp, N, N), out_dtype),
        grid_spec=pltpu.PrefetchScalarGridSpec(
            num_scalar_prefetch=0,
            grid=(Bp // tb,),
            in_specs=[
                pl.BlockSpec((tb, N, N), lambda b: (b, 0, 0)),   # U
                pl.BlockSpec((tb, 1, N), lambda b: (b, 0, 0)),   # log(w)
            ],
            out_specs=pl.BlockSpec((tb, N, N), lambda b: (b, 0, 0)),
        ),
        compiler_params=pltpu.CompilerParams(
            dimension_semantics=("parallel",),
            vmem_limit_bytes=vmem_limit),
    )(u, logw)
    return out[:B]


def _spd_logm_lane_batch(u, logw, out_dtype):
    """Small-N path: batch on the lane axis. u: (B,N,N); logw: (B,N)."""
    B, N, _ = u.shape
    budget, vmem_limit = _vmem_budget_and_limit()

    ut = jnp.transpose(u, (2, 1, 0))                 # (N_k, N_i, B): [k,i,b] = U_b[i,k]
    lw = jnp.transpose(logw, (1, 0))                 # (N_k, B)

    n_sub = _round_up(N, 8)
    u_blk = N * n_sub * 128 * 4                      # (N,N,128) f32 block bytes
    lw_blk = n_sub * 128 * 4
    # Double-buffered pipeline blocks (ut, lw, out) + ~3 blocks of in-kernel
    # temporaries (scaled copy, accumulator, slack), per 128 lanes of batch.
    per128 = 2 * (2 * u_blk + lw_blk) + 3 * u_blk
    tb_units = max(1, budget // per128)
    tb = 128 * min(tb_units, 16)                     # cap at 2048 batch lanes per step
    tb = min(tb, _round_up(B, 128))

    cores = _num_tensorcores()
    if cores > 1 and B > 128:
        tb = min(tb, 128 * max(1, _round_up(B, 128) // (128 * cores)))

    Bp = _round_up(B, tb)
    if Bp != B:
        pad = Bp - B
        ut = jnp.pad(ut, ((0, 0), (0, 0), (0, pad)))
        lw = jnp.pad(lw, ((0, 0), (0, pad)))

    out = pl.pallas_call(
        functools.partial(_logm_lane_batch_kernel, n=N),
        out_shape=jax.ShapeDtypeStruct((N, N, Bp), out_dtype),
        grid_spec=pltpu.PrefetchScalarGridSpec(
            num_scalar_prefetch=0,
            grid=(Bp // tb,),
            in_specs=[
                pl.BlockSpec((N, N, tb), lambda b: (0, 0, b)),   # U^T, batch on lanes
                pl.BlockSpec((N, tb), lambda b: (0, b)),         # log(w), batch on lanes
            ],
            out_specs=pl.BlockSpec((N, N, tb), lambda b: (0, 0, b)),
        ),
        compiler_params=pltpu.CompilerParams(
            dimension_semantics=("parallel",),
            vmem_limit_bytes=vmem_limit),
    )(ut, lw)
    return jnp.transpose(out[:, :, :B], (2, 0, 1))


# --------------------------------------------------------------------------- #
# Public wrapper
# --------------------------------------------------------------------------- #
def spd_tangent_space(x, *, eps=1e-12, use_bf16_eigvecs=False):
    """matrix_log of a batch of SPD matrices. x: (B, N, N)."""
    B, N, _ = x.shape
    # TODO(synk): the symmetric eigendecomposition (jnp.linalg.eigh) has no clean
    # Pallas equivalent; it runs as plain JAX glue (and typically dominates
    # end-to-end wall clock). The reconstruction hot path runs in Pallas below.
    w, u = jnp.linalg.eigh(x.astype(jnp.float32))
    u = u.astype(jnp.float32)
    # Clamp before log: eigh noise on ill-conditioned SPD inputs can produce tiny
    # negative eigenvalues -> NaN. Hoisted to the wrapper so XLA fuses it with the
    # eigh epilogue.
    logw = jnp.log(jnp.maximum(w, eps)).astype(jnp.float32)        # (B, N)

    if N <= 32:
        # Lane-packing fast path: avoids masked partial stores and <10% MXU
        # utilization of tiny padded matmuls.
        return _spd_logm_lane_batch(u, logw, jnp.float32)

    if use_bf16_eigvecs:
        # Optional: halves eigenvector HBM traffic and uses the native single-pass
        # bf16 MXU rate. Off by default (loosens accuracy to ~bf16 level).
        u = u.astype(jnp.bfloat16)
    return _spd_logm_mxu(u, logw.reshape(B, 1, N), jnp.float32)


# --------------------------------------------------------------------------- #
# Demo / self-check
# --------------------------------------------------------------------------- #
if __name__ == "__main__":
    key = jax.random.PRNGKey(0)

    def make_spd(k, b, n):
        a = jax.random.normal(k, (b, n, n), dtype=jnp.float32)
        # A A^T + n I: strictly positive eigenvalues.
        return jnp.einsum("bij,bkj->bik", a, a,
                          precision=lax.Precision.HIGHEST) \
            + n * jnp.eye(n, dtype=jnp.float32)[None]

    def reference(xx):
        wr, ur = jnp.linalg.eigh(xx)
        return jnp.einsum("bij,bj,bkj->bik", ur, jnp.log(wr), ur,
                          precision=lax.Precision.HIGHEST)

    # Small-N (batch-on-lane VPU) path.
    x1 = make_spd(key, 4, 16)
    y1 = jax.block_until_ready(spd_tangent_space(x1))
    assert y1.shape == (4, 16, 16) and y1.dtype == jnp.float32
    assert jnp.allclose(y1, reference(x1), atol=1e-4, rtol=1e-4)

    # Larger-N (MXU self-contraction) path.
    x2 = make_spd(jax.random.fold_in(key, 1), 3, 40)
    y2 = jax.block_until_ready(spd_tangent_space(x2))
    assert y2.shape == (3, 40, 40) and y2.dtype == jnp.float32
    assert jnp.allclose(y2, reference(x2), atol=1e-4, rtol=1e-4)

    print("KERNEL_OK")
</pallas_src>

<mosaic_0001>
module attributes {stable_mosaic.version = 11 : i64} {
  func.func @_logm_lane_batch_kernel(%arg0: i32, %arg1: memref<16x16x128xf32, #tpu.memory_space<vmem>>, %arg2: memref<16x128xf32, #tpu.memory_space<vmem>>, %arg3: memref<16x16x128xf32, #tpu.memory_space<vmem>>) attributes {dimension_semantics = [#tpu.dimension_semantics<parallel>], iteration_bounds = array<i64: 1>, scalar_prefetch = 0 : i64, scratch_operands = 0 : i64, tpu.core_type = #tpu.core_type<tc>, window_params = [{transform_indices = @transform_0, window_bounds = array<i64: 16, 16, 128>}, {transform_indices = @transform_1, window_bounds = array<i64: 16, 128>}, {transform_indices = @transform_2, window_bounds = array<i64: 16, 16, 128>}]} {
    %c0 = arith.constant 0 : index
    %c0_0 = arith.constant 0 : index
    %c0_1 = arith.constant 0 : index
    %0 = vector.load %arg1[%c0, %c0_0, %c0_1] : memref<16x16x128xf32, #tpu.memory_space<vmem>>, vector<16x16x128xf32>
    %c0_2 = arith.constant 0 : index
    %c0_3 = arith.constant 0 : index
    %1 = vector.load %arg2[%c0_2, %c0_3] : memref<16x128xf32, #tpu.memory_space<vmem>>, vector<16x128xf32>
    %2 = vector.shape_cast %1 : vector<16x128xf32> to vector<16x1x128xf32>
    %3 = vector.broadcast %2 : vector<16x1x128xf32> to vector<16x16x128xf32>
    %4 = arith.mulf %0, %3 : vector<16x16x128xf32>
    %cst = arith.constant 0.000000e+00 : f32
    %5 = vector.broadcast %cst : f32 to vector<16x16x128xf32>
    %6 = vector.extract_strided_slice %0 {offsets = [0, 0, 0], sizes = [1, 16, 128], strides = [1, 1, 1]} : vector<16x16x128xf32> to vector<1x16x128xf32>
    %7 = vector.shape_cast %6 : vector<1x16x128xf32> to vector<16x128xf32>
    %8 = vector.shape_cast %7 : vector<16x128xf32> to vector<16x1x128xf32>
    %9 = vector.extract_strided_slice %4 {offsets = [0, 0, 0], sizes = [1, 16, 128], strides = [1, 1, 1]} : vector<16x16x128xf32> to vector<1x16x128xf32>
    %10 = vector.shape_cast %9 : vector<1x16x128xf32> to vector<16x128xf32>
    %11 = vector.shape_cast %10 : vector<16x128xf32> to vector<1x16x128xf32>
    %12 = vector.broadcast %8 : vector<16x1x128xf32> to vector<16x16x128xf32>
    %13 = vector.broadcast %11 : vector<1x16x128xf32> to vector<16x16x128xf32>
    %14 = arith.mulf %12, %13 : vector<16x16x128xf32>
    %15 = arith.addf %5, %14 : vector<16x16x128xf32>
    %16 = vector.extract_strided_slice %0 {offsets = [1, 0, 0], sizes = [1, 16, 128], strides = [1, 1, 1]} : vector<16x16x128xf32> to vector<1x16x128xf32>
    %17 = vector.shape_cast %16 : vector<1x16x128xf32> to vector<16x128xf32>
    %18 = vector.shape_cast %17 : vector<16x128xf32> to vector<16x1x128xf32>
    %19 = vector.extract_strided_slice %4 {offsets = [1, 0, 0], sizes = [1, 16, 128], strides = [1, 1, 1]} : vector<16x16x128xf32> to vector<1x16x128xf32>
    %20 = vector.shape_cast %19 : vector<1x16x128xf32> to vector<16x128xf32>
    %21 = vector.shape_cast %20 : vector<16x128xf32> to vector<1x16x128xf32>
    %22 = vector.broadcast %18 : vector<16x1x128xf32> to vector<16x16x128xf32>
    %23 = vector.broadcast %21 : vector<1x16x128xf32> to vector<16x16x128xf32>
    %24 = arith.mulf %22, %23 : vector<16x16x128xf32>
    %25 = arith.addf %15, %24 : vector<16x16x128xf32>
    %26 = vector.extract_strided_slice %0 {offsets = [2, 0, 0], sizes = [1, 16, 128], strides = [1, 1, 1]} : vector<16x16x128xf32> to vector<1x16x128xf32>
    %27 = vector.shape_cast %26 : vector<1x16x128xf32> to vector<16x128xf32>
    %28 = vector.shape_cast %27 : vector<16x128xf32> to vector<16x1x128xf32>
    %29 = vector.extract_strided_slice %4 {offsets = [2, 0, 0], sizes = [1, 16, 128], strides = [1, 1, 1]} : vector<16x16x128xf32> to vector<1x16x128xf32>
    %30 = vector.shape_cast %29 : vector<1x16x128xf32> to vector<16x128xf32>
    %31 = vector.shape_cast %30 : vector<16x128xf32> to vector<1x16x128xf32>
    %32 = vector.broadcast %28 : vector<16x1x128xf32> to vector<16x16x128xf32>
    %33 = vector.broadcast %31 : vector<1x16x128xf32> to vector<16x16x128xf32>
    %34 = arith.mulf %32, %33 : vector<16x16x128xf32>
    %35 = arith.addf %25, %34 : vector<16x16x128xf32>
    %36 = vector.extract_strided_slice %0 {offsets = [3, 0, 0], sizes = [1, 16, 128], strides = [1, 1, 1]} : vector<16x16x128xf32> to vector<1x16x128xf32>
    %37 = vector.shape_cast %36 : vector<1x16x128xf32> to vector<16x128xf32>
    %38 = vector.shape_cast %37 : vector<16x128xf32> to vector<16x1x128xf32>
    %39 = vector.extract_strided_slice %4 {offsets = [3, 0, 0], sizes = [1, 16, 128], strides = [1, 1, 1]} : vector<16x16x128xf32> to vector<1x16x128xf32>
    %40 = vector.shape_cast %39 : vector<1x16x128xf32> to vector<16x128xf32>
    %41 = vector.shape_cast %40 : vector<16x128xf32> to vector<1x16x128xf32>
    %42 = vector.broadcast %38 : vector<16x1x128xf32> to vector<16x16x128xf32>
    %43 = vector.broadcast %41 : vector<1x16x128xf32> to vector<16x16x128xf32>
    %44 = arith.mulf %42, %43 : vector<16x16x128xf32>
    %45 = arith.addf %35, %44 : vector<16x16x128xf32>
    %46 = vector.extract_strided_slice %0 {offsets = [4, 0, 0], sizes = [1, 16, 128], strides = [1, 1, 1]} : vector<16x16x128xf32> to vector<1x16x128xf32>
    %47 = vector.shape_cast %46 : vector<1x16x128xf32> to vector<16x128xf32>
    %48 = vector.shape_cast %47 : vector<16x128xf32> to vector<16x1x128xf32>
    %49 = vector.extract_strided_slice %4 {offsets = [4, 0, 0], sizes = [1, 16, 128], strides = [1, 1, 1]} : vector<16x16x128xf32> to vector<1x16x128xf32>
    %50 = vector.shape_cast %49 : vector<1x16x128xf32> to vector<16x128xf32>
    %51 = vector.shape_cast %50 : vector<16x128xf32> to vector<1x16x128xf32>
    %52 = vector.broadcast %48 : vector<16x1x128xf32> to vector<16x16x128xf32>
    %53 = vector.broadcast %51 : vector<1x16x128xf32> to vector<16x16x128xf32>
    %54 = arith.mulf %52, %53 : vector<16x16x128xf32>
    %55 = arith.addf %45, %54 : vector<16x16x128xf32>
    %56 = vector.extract_strided_slice %0 {offsets = [5, 0, 0], sizes = [1, 16, 128], strides = [1, 1, 1]} : vector<16x16x128xf32> to vector<1x16x128xf32>
    %57 = vector.shape_cast %56 : vector<1x16x128xf32> to vector<16x128xf32>
    %58 = vector.shape_cast %57 : vector<16x128xf32> to vector<16x1x128xf32>
    %59 = vector.extract_strided_slice %4 {offsets = [5, 0, 0], sizes = [1, 16, 128], strides = [1, 1, 1]} : vector<16x16x128xf32> to vector<1x16x128xf32>
    %60 = vector.shape_cast %59 : vector<1x16x128xf32> to vector<16x128xf32>
    %61 = vector.shape_cast %60 : vector<16x128xf32> to vector<1x16x128xf32>
    %62 = vector.broadcast %58 : vector<16x1x128xf32> to vector<16x16x128xf32>
    %63 = vector.broadcast %61 : vector<1x16x128xf32> to vector<16x16x128xf32>
    %64 = arith.mulf %62, %63 : vector<16x16x128xf32>
    %65 = arith.addf %55, %64 : vector<16x16x128xf32>
    %66 = vector.extract_strided_slice %0 {offsets = [6, 0, 0], sizes = [1, 16, 128], strides = [1, 1, 1]} : vector<16x16x128xf32> to vector<1x16x128xf32>
    %67 = vector.shape_cast %66 : vector<1x16x128xf32> to vector<16x128xf32>
    %68 = vector.shape_cast %67 : vector<16x128xf32> to vector<16x1x128xf32>
    %69 = vector.extract_strided_slice %4 {offsets = [6, 0, 0], sizes = [1, 16, 128], strides = [1, 1, 1]} : vector<16x16x128xf32> to vector<1x16x128xf32>
    %70 = vector.shape_cast %69 : vector<1x16x128xf32> to vector<16x128xf32>
    %71 = vector.shape_cast %70 : vector<16x128xf32> to vector<1x16x128xf32>
    %72 = vector.broadcast %68 : vector<16x1x128xf32> to vector<16x16x128xf32>
    %73 = vector.broadcast %71 : vector<1x16x128xf32> to vector<16x16x128xf32>
    %74 = arith.mulf %72, %73 : vector<16x16x128xf32>
    %75 = arith.addf %65, %74 : vector<16x16x128xf32>
    %76 = vector.extract_strided_slice %0 {offsets = [7, 0, 0], sizes = [1, 16, 128], strides = [1, 1, 1]} : vector<16x16x128xf32> to vector<1x16x128xf32>
    %77 = vector.shape_cast %76 : vector<1x16x128xf32> to vector<16x128xf32>
    %78 = vector.shape_cast %77 : vector<16x128xf32> to vector<16x1x128xf32>
    %79 = vector.extract_strided_slice %4 {offsets = [7, 0, 0], sizes = [1, 16, 128], strides = [1, 1, 1]} : vector<16x16x128xf32> to vector<1x16x128xf32>
    %80 = vector.shape_cast %79 : vector<1x16x128xf32> to vector<16x128xf32>
    %81 = vector.shape_cast %80 : vector<16x128xf32> to vector<1x16x128xf32>
    %82 = vector.broadcast %78 : vector<16x1x128xf32> to vector<16x16x128xf32>
    %83 = vector.broadcast %81 : vector<1x16x128xf32> to vector<16x16x128xf32>
    %84 = arith.mulf %82, %83 : vector<16x16x128xf32>
    %85 = arith.addf %75, %84 : vector<16x16x128xf32>
    %86 = vector.extract_strided_slice %0 {offsets = [8, 0, 0], sizes = [1, 16, 128], strides = [1, 1, 1]} : vector<16x16x128xf32> to vector<1x16x128xf32>
    %87 = vector.shape_cast %86 : vector<1x16x128xf32> to vector<16x128xf32>
    %88 = vector.shape_cast %87 : vector<16x128xf32> to vector<16x1x128xf32>
    %89 = vector.extract_strided_slice %4 {offsets = [8, 0, 0], sizes = [1, 16, 128], strides = [1, 1, 1]} : vector<16x16x128xf32> to vector<1x16x128xf32>
    %90 = vector.shape_cast %89 : vector<1x16x128xf32> to vector<16x128xf32>
    %91 = vector.shape_cast %90 : vector<16x128xf32> to vector<1x16x128xf32>
    %92 = vector.broadcast %88 : vector<16x1x128xf32> to vector<16x16x128xf32>
    %93 = vector.broadcast %91 : vector<1x16x128xf32> to vector<16x16x128xf32>
    %94 = arith.mulf %92, %93 : vector<16x16x128xf32>
    %95 = arith.addf %85, %94 : vector<16x16x128xf32>
    %96 = vector.extract_strided_slice %0 {offsets = [9, 0, 0], sizes = [1, 16, 128], strides = [1, 1, 1]} : vector<16x16x128xf32> to vector<1x16x128xf32>
    %97 = vector.shape_cast %96 : vector<1x16x128xf32> to vector<16x128xf32>
    %98 = vector.shape_cast %97 : vector<16x128xf32> to vector<16x1x128xf32>
    %99 = vector.extract_strided_slice %4 {offsets = [9, 0, 0], sizes = [1, 16, 128], strides = [1, 1, 1]} : vector<16x16x128xf32> to vector<1x16x128xf32>
    %100 = vector.shape_cast %99 : vector<1x16x128xf32> to vector<16x128xf32>
    %101 = vector.shape_cast %100 : vector<16x128xf32> to vector<1x16x128xf32>
    %102 = vector.broadcast %98 : vector<16x1x128xf32> to vector<16x16x128xf32>
    %103 = vector.broadcast %101 : vector<1x16x128xf32> to vector<16x16x128xf32>
    %104 = arith.mulf %102, %103 : vector<16x16x128xf32>
    %105 = arith.addf %95, %104 : vector<16x16x128xf32>
    %106 = vector.extract_strided_slice %0 {offsets = [10, 0, 0], sizes = [1, 16, 128], strides = [1, 1, 1]} : vector<16x16x128xf32> to vector<1x16x128xf32>
    %107 = vector.shape_cast %106 : vector<1x16x128xf32> to vector<16x128xf32>
    %108 = vector.shape_cast %107 : vector<16x128xf32> to vector<16x1x128xf32>
    %109 = vector.extract_strided_slice %4 {offsets = [10, 0, 0], sizes = [1, 16, 128], strides = [1, 1, 1]} : vector<16x16x128xf32> to vector<1x16x128xf32>
    %110 = vector.shape_cast %109 : vector<1x16x128xf32> to vector<16x128xf32>
    %111 = vector.shape_cast %110 : vector<16x128xf32> to vector<1x16x128xf32>
    %112 = vector.broadcast %108 : vector<16x1x128xf32> to vector<16x16x128xf32>
    %113 = vector.broadcast %111 : vector<1x16x128xf32> to vector<16x16x128xf32>
    %114 = arith.mulf %112, %113 : vector<16x16x128xf32>
    %115 = arith.addf %105, %114 : vector<16x16x128xf32>
    %116 = vector.extract_strided_slice %0 {offsets = [11, 0, 0], sizes = [1, 16, 128], strides = [1, 1, 1]} : vector<16x16x128xf32> to vector<1x16x128xf32>
    %117 = vector.shape_cast %116 : vector<1x16x128xf32> to vector<16x128xf32>
    %118 = vector.shape_cast %117 : vector<16x128xf32> to vector<16x1x128xf32>
    %119 = vector.extract_strided_slice %4 {offsets = [11, 0, 0], sizes = [1, 16, 128], strides = [1, 1, 1]} : vector<16x16x128xf32> to vector<1x16x128xf32>
    %120 = vector.shape_cast %119 : vector<1x16x128xf32> to vector<16x128xf32>
    %121 = vector.shape_cast %120 : vector<16x128xf32> to vector<1x16x128xf32>
    %122 = vector.broadcast %118 : vector<16x1x128xf32> to vector<16x16x128xf32>
    %123 = vector.broadcast %121 : vector<1x16x128xf32> to vector<16x16x128xf32>
    %124 = arith.mulf %122, %123 : vector<16x16x128xf32>
    %125 = arith.addf %115, %124 : vector<16x16x128xf32>
    %126 = vector.extract_strided_slice %0 {offsets = [12, 0, 0], sizes = [1, 16, 128], strides = [1, 1, 1]} : vector<16x16x128xf32> to vector<1x16x128xf32>
    %127 = vector.shape_cast %126 : vector<1x16x128xf32> to vector<16x128xf32>
    %128 = vector.shape_cast %127 : vector<16x128xf32> to vector<16x1x128xf32>
    %129 = vector.extract_strided_slice %4 {offsets = [12, 0, 0], sizes = [1, 16, 128], strides = [1, 1, 1]} : vector<16x16x128xf32> to vector<1x16x128xf32>
    %130 = vector.shape_cast %129 : vector<1x16x128xf32> to vector<16x128xf32>
    %131 = vector.shape_cast %130 : vector<16x128xf32> to vector<1x16x128xf32>
    %132 = vector.broadcast %128 : vector<16x1x128xf32> to vector<16x16x128xf32>
    %133 = vector.broadcast %131 : vector<1x16x128xf32> to vector<16x16x128xf32>
    %134 = arith.mulf %132, %133 : vector<16x16x128xf32>
    %135 = arith.addf %125, %134 : vector<16x16x128xf32>
    %136 = vector.extract_strided_slice %0 {offsets = [13, 0, 0], sizes = [1, 16, 128], strides = [1, 1, 1]} : vector<16x16x128xf32> to vector<1x16x128xf32>
    %137 = vector.shape_cast %136 : vector<1x16x128xf32> to vector<16x128xf32>
    %138 = vector.shape_cast %137 : vector<16x128xf32> to vector<16x1x128xf32>
    %139 = vector.extract_strided_slice %4 {offsets = [13, 0, 0], sizes = [1, 16, 128], strides = [1, 1, 1]} : vector<16x16x128xf32> to vector<1x16x128xf32>
    %140 = vector.shape_cast %139 : vector<1x16x128xf32> to vector<16x128xf32>
    %141 = vector.shape_cast %140 : vector<16x128xf32> to vector<1x16x128xf32>
    %142 = vector.broadcast %138 : vector<16x1x128xf32> to vector<16x16x128xf32>
    %143 = vector.broadcast %141 : vector<1x16x128xf32> to vector<16x16x128xf32>
    %144 = arith.mulf %142, %143 : vector<16x16x128xf32>
    %145 = arith.addf %135, %144 : vector<16x16x128xf32>
    %146 = vector.extract_strided_slice %0 {offsets = [14, 0, 0], sizes = [1, 16, 128], strides = [1, 1, 1]} : vector<16x16x128xf32> to vector<1x16x128xf32>
    %147 = vector.shape_cast %146 : vector<1x16x128xf32> to vector<16x128xf32>
    %148 = vector.shape_cast %147 : vector<16x128xf32> to vector<16x1x128xf32>
    %149 = vector.extract_strided_slice %4 {offsets = [14, 0, 0], sizes = [1, 16, 128], strides = [1, 1, 1]} : vector<16x16x128xf32> to vector<1x16x128xf32>
    %150 = vector.shape_cast %149 : vector<1x16x128xf32> to vector<16x128xf32>
    %151 = vector.shape_cast %150 : vector<16x128xf32> to vector<1x16x128xf32>
    %152 = vector.broadcast %148 : vector<16x1x128xf32> to vector<16x16x128xf32>
    %153 = vector.broadcast %151 : vector<1x16x128xf32> to vector<16x16x128xf32>
    %154 = arith.mulf %152, %153 : vector<16x16x128xf32>
    %155 = arith.addf %145, %154 : vector<16x16x128xf32>
    %156 = vector.extract_strided_slice %0 {offsets = [15, 0, 0], sizes = [1, 16, 128], strides = [1, 1, 1]} : vector<16x16x128xf32> to vector<1x16x128xf32>
    %157 = vector.shape_cast %156 : vector<1x16x128xf32> to vector<16x128xf32>
    %158 = vector.shape_cast %157 : vector<16x128xf32> to vector<16x1x128xf32>
    %159 = vector.extract_strided_slice %4 {offsets = [15, 0, 0], sizes = [1, 16, 128], strides = [1, 1, 1]} : vector<16x16x128xf32> to vector<1x16x128xf32>
    %160 = vector.shape_cast %159 : vector<1x16x128xf32> to vector<16x128xf32>
    %161 = vector.shape_cast %160 : vector<16x128xf32> to vector<1x16x128xf32>
    %162 = vector.broadcast %158 : vector<16x1x128xf32> to vector<16x16x128xf32>
    %163 = vector.broadcast %161 : vector<1x16x128xf32> to vector<16x16x128xf32>
    %164 = arith.mulf %162, %163 : vector<16x16x128xf32>
    %165 = arith.addf %155, %164 : vector<16x16x128xf32>
    %c0_4 = arith.constant 0 : index
    %c0_5 = arith.constant 0 : index
    %c0_6 = arith.constant 0 : index
    %166 = vector.load %arg3[%c0_4, %c0_5, %c0_6] : memref<16x16x128xf32, #tpu.memory_space<vmem>>, vector<16x16x128xf32>
    tpu.vector_store %arg3[%c0_4, %c0_5, %c0_6], %165 {strides = array<i32>} : memref<16x16x128xf32, #tpu.memory_space<vmem>>, vector<16x16x128xf32>,
    return
  }
  func.func @transform_0(%arg0: i32) -> (i32, i32, i32) {
    %c0_i32 = arith.constant 0 : i32
    %c0_i32_0 = arith.constant 0 : i32
    %c0_i32_1 = arith.constant 0 : i32
    return %c0_i32, %c0_i32_0, %arg0 : i32, i32, i32
  }
  func.func @transform_1(%arg0: i32) -> (i32, i32) {
    %c0_i32 = arith.constant 0 : i32
    %c0_i32_0 = arith.constant 0 : i32
    return %c0_i32, %arg0 : i32, i32
  }
  func.func @transform_2(%arg0: i32) -> (i32, i32, i32) {
    %c0_i32 = arith.constant 0 : i32
    %c0_i32_0 = arith.constant 0 : i32
    %c0_i32_1 = arith.constant 0 : i32
    return %c0_i32, %c0_i32_0, %arg0 : i32, i32, i32
  }
}

</mosaic_0001>

<llo_original>
// kernel: tpu_custom_call.1
$region0: #{tpu_custom_call.1}
  #allocation0 [shape = 'u32[]', space=smem, size = 0x4, offset = 0x4, fixed_abs, tag = 'smem constant byte address 0x4 - core index']
  #allocation1 [shape = 'u32[144,128]{1,0:T(1,128)}', space=vmem, size = 0x12000, scoped, tag = 'internal scratch']
  %s0 = inlined_call_operand.hbm [shape: f32[16,16,128], index: 0, kind: input, shape index: {}]
  %s1 = inlined_call_operand.hbm [shape: f32[16,128], index: 1, kind: input, shape index: {}]
  %s2 = inlined_call_operand.hbm [shape: f32[16,16,128], index: 2, kind: output, shape index: {}]
  %s3 = sld [smem:[#allocation0]]
  $region26: #{tpu_custom_call.1} parent=0
    _
  %s5 = ssub.s32 1, %s3
  %s6 = scalar_select 0, %s5, %s3
  $region1: #{tpu_custom_call.1} parent=0
    #allocation2 [shape = 'u8[131072]{0}', space=vmem, size = 0x20000, scoped, tag = 'input window, operand 0, single buffered']
    #allocation3 [shape = 's32[1]{0}', space=sflag, size = 0x4, scoped, tag = 'scoped memory for tpu_custom_call.1']
    #allocation4 [shape = 's32[1]{0}', space=sflag, size = 0x4, scoped, tag = 'scoped memory for tpu_custom_call.1']
    #allocation5 [shape = 'u8[8192]{0}', space=vmem, size = 0x2000, scoped, tag = 'input window, operand 1, single buffered']
    #allocation6 [shape = 's32[1]{0}', space=sflag, size = 0x4, scoped, tag = 'scoped memory for tpu_custom_call.1']
    #allocation7 [shape = 'u8[131072]{0}', space=vmem, size = 0x20000, scoped, tag = 'output window, operand 0, single buffered']
    %7 = vsyncpa [#allocation3], 0
    %8 = vsyncpa [#allocation6], 0
    %9 = vsyncpa [#allocation4], 0
    // Predicated region
    $region2: #{tpu_custom_call.1} parent=1 // pred_check
      _
    $region3: #{tpu_custom_call.1} parent=1 // pred_check_branch
      %11 = sbr.rel (0) target = $region5
    $region4: #{tpu_custom_call.1} parent=1 // pred_region
      %s13 = ssub.s32 4096, 4096
      %14 = vsyncadd [#allocation3], %s13
      %s15 = sshll.u32 [#allocation2], 4
      %s16 = int_to_ptr.vmem [resolvable:$true] %s15
      %21 = dma.hbm_to_vmem [thread:$0]  %s0, 4096, %s16, [#allocation3], 128, 128, 8
    $region5: #{tpu_custom_call.1} parent=1 // pred_fallthru
      _
    // Predicated region
    $region6: #{tpu_custom_call.1} parent=1 // pred_check
      _
    $region7: #{tpu_custom_call.1} parent=1 // pred_check_branch
      %23 = sbr.rel (0) target = $region9
    $region8: #{tpu_custom_call.1} parent=1 // pred_region
      %s25 = ssub.s32 256, 256
      %26 = vsyncadd [#allocation6], %s25
      %s27 = sshll.u32 [#allocation5], 4
      %s28 = int_to_ptr.vmem [resolvable:$true] %s27
      %33 = dma.hbm_to_vmem [thread:$0]  %s1, 256, %s28, [#allocation6], 128, 128, 8
    $region9: #{tpu_custom_call.1} parent=1 // pred_fallthru
      _
    // Predicated region
    $region10: #{tpu_custom_call.1} parent=1 // pred_check
      _
    $region11: #{tpu_custom_call.1} parent=1 // pred_check_branch
      %35 = sbr.rel (0) target = $region13
    $region12: #{tpu_custom_call.1} parent=1 // pred_region
      %36 = dma.done [#allocation3], 4096
    $region13: #{tpu_custom_call.1} parent=1 // pred_fallthru
      _
    // Predicated region
    $region14: #{tpu_custom_call.1} parent=1 // pred_check
      _
    $region15: #{tpu_custom_call.1} parent=1 // pred_check_branch
      %38 = sbr.rel (0) target = $region17
    $region16: #{tpu_custom_call.1} parent=1 // pred_region
      %39 = dma.done [#allocation6], 256
    $region17: #{tpu_custom_call.1} parent=1 // pred_fallthru
      _
    %v40 = vld [vmem:[#allocation2] sm:$0xff]
    %v41 = vld [vmem:[#allocation2 + $0x8] sm:$0xff]
    %v42 = vld [vmem:[#allocation2 + $0x10] sm:$0xff]
    %v43 = vld [vmem:[#allocation2 + $0x18] sm:$0xff]
    %v44 = vld [vmem:[#allocation2 + $0x20] sm:$0xff]
    %v45 = vld [vmem:[#allocation2 + $0x28] sm:$0xff]
    %v46 = vld [vmem:[#allocation2 + $0x30] sm:$0xff]
    %v47 = vld [vmem:[#allocation2 + $0x38] sm:$0xff]
    %v48 = vld [vmem:[#allocation2 + $0x40] sm:$0xff]
    %v49 = vld [vmem:[#allocation2 + $0x48] sm:$0xff]
    %v50 = vld [vmem:[#allocation2 + $0x50] sm:$0xff]
    %v51 = vld [vmem:[#allocation2 + $0x58] sm:$0xff]
    %v52 = vld [vmem:[#allocation2 + $0x60] sm:$0xff]
    %v53 = vld [vmem:[#allocation2 + $0x68] sm:$0xff]
    %v54 = vld [vmem:[#allocation2 + $0x70] sm:$0xff]
    %v55 = vld [vmem:[#allocation2 + $0x78] sm:$0xff]
    %v56 = vld [vmem:[#allocation2 + $0x80] sm:$0xff]
    %v57 = vld [vmem:[#allocation2 + $0x88] sm:$0xff]
    %v58 = vld [vmem:[#allocation2 + $0x90] sm:$0xff]
    %v59 = vld [vmem:[#allocation2 + $0x98] sm:$0xff]
    %v60 = vld [vmem:[#allocation2 + $0xa0] sm:$0xff]
    %v61 = vld [vmem:[#allocation2 + $0xa8] sm:$0xff]
    %v62 = vld [vmem:[#allocation2 + $0xb0] sm:$0xff]
    %v63 = vld [vmem:[#allocation2 + $0xb8] sm:$0xff]
    %v64 = vld [vmem:[#allocation2 + $0xc0] sm:$0xff]
    %v65 = vld [vmem:[#allocation2 + $0xc8] sm:$0xff]
    %v66 = vld [vmem:[#allocation2 + $0xd0] sm:$0xff]
    %v67 = vld [vmem:[#allocation2 + $0xd8] sm:$0xff]
    %v68 = vld [vmem:[#allocation2 + $0xe0] sm:$0xff]
    %v69 = vld [vmem:[#allocation2 + $0xe8] sm:$0xff]
    %v70 = vld [vmem:[#allocation2 + $0xf0] sm:$0xff]
    %v71 = vld [vmem:[#allocation2 + $0xf8] sm:$0xff]
    %v72 = vld [vmem:[#allocation5] sm:$0xff]
    %v73 = vld [vmem:[#allocation5 + $0x8] sm:$0xff]
    %v76 = vcombine.high %v72, %v72
    %v78 = vunpack.c.l.s4 1966171168
    %v79 = vunpack.c.0.s8 %v78
    %v80 = vlaneseq
    %v81 = vshrl.u32 %v80, 7
    %v82 = vsub.s32 %v79, %v81
    %v83 = vrot.slane %v72, %v82
    %v85 = vunpack.c.l.s4 1966171168
    %v86 = vunpack.c.0.s8 %v85
    %v87 = vlaneseq
    %v88 = vshrl.u32 %v87, 7
    %v89 = vsub.s32 %v86, %v88
    %v90 = vrot.slane %v76, %v89
    %v91 = vcombine.high %v83, %v83
    %v92 = vcombine.high %v90, %v90
    %v94 = vunpack.c.l.s4 1966171168
    %v95 = vunpack.c.0.s8 %v94
    %v96 = vlaneseq
    %v97 = vshrl.u32 %v96, 7
    %v98 = vsub.s32 %v95, %v97
    %v99 = vrot.slane %v83, %v98
    %v101 = vunpack.c.l.s4 1966171168
    %v102 = vunpack.c.0.s8 %v101
    %v103 = vlaneseq
    %v104 = vshrl.u32 %v103, 7
    %v105 = vsub.s32 %v102, %v104
    %v106 = vrot.slane %v90, %v105
    %v108 = vunpack.c.l.s4 1966171168
    %v109 = vunpack.c.0.s8 %v108
    %v110 = vlaneseq
    %v111 = vshrl.u32 %v110, 7
    %v112 = vsub.s32 %v109, %v111
    %v113 = vrot.slane %v91, %v112
    %v115 = vunpack.c.l.s4 1966171168
    %v116 = vunpack.c.0.s8 %v115
    %v117 = vlaneseq
    %v118 = vshrl.u32 %v117, 7
    %v119 = vsub.s32 %v116, %v118
    %v120 = vrot.slane %v92, %v119
    %v121 = vcombine.high %v99, %v99
    %v122 = vcombine.high %v106, %v106
    %v123 = vcombine.high %v113, %v113
    %v124 = vcombine.high %v120, %v120
    %v125 = vcombine.high %v73, %v73
    %v127 = vunpack.c.l.s4 1966171168
    %v128 = vunpack.c.0.s8 %v127
    %v129 = vlaneseq
    %v130 = vshrl.u32 %v129, 7
    %v131 = vsub.s32 %v128, %v130
    %v132 = vrot.slane %v73, %v131
    %v134 = vunpack.c.l.s4 1966171168
    %v135 = vunpack.c.0.s8 %v134
    %v136 = vlaneseq
    %v137 = vshrl.u32 %v136, 7
    %v138 = vsub.s32 %v135, %v137
    %v139 = vrot.slane %v125, %v138
    %v140 = vcombine.high %v132, %v132
    %v141 = vcombine.high %v139, %v139
    %v143 = vunpack.c.l.s4 1966171168
    %v144 = vunpack.c.0.s8 %v143
    %v145 = vlaneseq
    %v146 = vshrl.u32 %v145, 7
    %v147 = vsub.s32 %v144, %v146
    %v148 = vrot.slane %v132, %v147
    %v150 = vunpack.c.l.s4 1966171168
    %v151 = vunpack.c.0.s8 %v150
    %v152 = vlaneseq
    %v153 = vshrl.u32 %v152, 7
    %v154 = vsub.s32 %v151, %v153
    %v155 = vrot.slane %v139, %v154
    %v157 = vunpack.c.l.s4 1966171168
    %v158 = vunpack.c.0.s8 %v157
    %v159 = vlaneseq
    %v160 = vshrl.u32 %v159, 7
    %v161 = vsub.s32 %v158, %v160
    %v162 = vrot.slane %v140, %v161
    %v164 = vunpack.c.l.s4 1966171168
    %v165 = vunpack.c.0.s8 %v164
    %v166 = vlaneseq
    %v167 = vshrl.u32 %v166, 7
    %v168 = vsub.s32 %v165, %v167
    %v169 = vrot.slane %v141, %v168
    %v170 = vcombine.high %v148, %v148
    %v171 = vcombine.high %v155, %v155
    %v172 = vcombine.high %v162, %v162
    %v173 = vcombine.high %v169, %v169
    %v174 = vlaneseq
    %v175 = vshrl.u32 %v174, 7
    %v176 = vsub.s32 0, %v175
    %v177 = vrot.slane %v99, %v176
    %v178 = vlaneseq
    %v179 = vshrl.u32 %v178, 7
    %v180 = vsub.s32 0, %v179
    %v181 = vrot.slane %v113, %v180
    %v182 = vlaneseq
    %v183 = vshrl.u32 %v182, 7
    %v184 = vsub.s32 0, %v183
    %v185 = vrot.slane %v121, %v184
    %v186 = vlaneseq
    %v187 = vshrl.u32 %v186, 7
    %v188 = vsub.s32 0, %v187
    %v189 = vrot.slane %v123, %v188
    %v190 = vlaneseq
    %v191 = vshrl.u32 %v190, 7
    %v192 = vsub.s32 0, %v191
    %v193 = vrot.slane %v106, %v192
    %v194 = vlaneseq
    %v195 = vshrl.u32 %v194, 7
    %v196 = vsub.s32 0, %v195
    %v197 = vrot.slane %v120, %v196
    %v198 = vlaneseq
    %v199 = vshrl.u32 %v198, 7
    %v200 = vsub.s32 0, %v199
    %v201 = vrot.slane %v122, %v200
    %v202 = vlaneseq
    %v203 = vshrl.u32 %v202, 7
    %v204 = vsub.s32 0, %v203
    %v205 = vrot.slane %v124, %v204
    %v206 = vlaneseq
    %v207 = vshrl.u32 %v206, 7
    %v208 = vsub.s32 0, %v207
    %v209 = vrot.slane %v148, %v208
    %v210 = vlaneseq
    %v211 = vshrl.u32 %v210, 7
    %v212 = vsub.s32 0, %v211
    %v213 = vrot.slane %v162, %v212
    %v214 = vlaneseq
    %v215 = vshrl.u32 %v214, 7
    %v216 = vsub.s32 0, %v215
    %v217 = vrot.slane %v170, %v216
    %v218 = vlaneseq
    %v219 = vshrl.u32 %v218, 7
    %v220 = vsub.s32 0, %v219
    %v221 = vrot.slane %v172, %v220
    %v222 = vlaneseq
    %v223 = vshrl.u32 %v222, 7
    %v224 = vsub.s32 0, %v223
    %v225 = vrot.slane %v155, %v224
    %v226 = vlaneseq
    %v227 = vshrl.u32 %v226, 7
    %v228 = vsub.s32 0, %v227
    %v229 = vrot.slane %v169, %v228
    %v230 = vlaneseq
    %v231 = vshrl.u32 %v230, 7
    %v232 = vsub.s32 0, %v231
    %v233 = vrot.slane %v171, %v232
    %v234 = vlaneseq
    %v235 = vshrl.u32 %v234, 7
    %v236 = vsub.s32 0, %v235
    %v237 = vrot.slane %v173, %v236
    %v254 = vmul.f32 %v40, %v177
    %v255 = vmul.f32 %v41, %v177
    %v256 = vmul.f32 %v42, %v181
    %v257 = vmul.f32 %v43, %v181
    %v258 = vmul.f32 %v44, %v185
    %v259 = vmul.f32 %v45, %v185
    %v260 = vmul.f32 %v46, %v189
    %v261 = vmul.f32 %v47, %v189
    %v262 = vmul.f32 %v48, %v193
    %v263 = vmul.f32 %v49, %v193
    %v264 = vmul.f32 %v50, %v197
    %v265 = vmul.f32 %v51, %v197
    %v266 = vmul.f32 %v52, %v201
    %v267 = vmul.f32 %v53, %v201
    %v268 = vmul.f32 %v54, %v205
    %v269 = vmul.f32 %v55, %v205
    %v270 = vmul.f32 %v56, %v209
    %v271 = vmul.f32 %v57, %v209
    %v272 = vmul.f32 %v58, %v213
    %v273 = vmul.f32 %v59, %v213
    %v274 = vmul.f32 %v60, %v217
    %v275 = vmul.f32 %v61, %v217
    %v276 = vmul.f32 %v62, %v221
    %v277 = vmul.f32 %v63, %v221
    %v278 = vmul.f32 %v64, %v225
    %v279 = vmul.f32 %v65, %v225
    %v280 = vmul.f32 %v66, %v229
    %v281 = vmul.f32 %v67, %v229
    %v282 = vmul.f32 %v68, %v233
    %v283 = vmul.f32 %v69, %v233
    %v284 = vmul.f32 %v70, %v237
    %v285 = vmul.f32 %v71, %v237
    %v288 = vcombine.high %v40, %v40
    %v290 = vunpack.c.l.s4 1966171168
    %v291 = vunpack.c.0.s8 %v290
    %v292 = vlaneseq
    %v293 = vshrl.u32 %v292, 7
    %v294 = vsub.s32 %v291, %v293
    %v295 = vrot.slane %v40, %v294
    %v297 = vunpack.c.l.s4 1966171168
    %v298 = vunpack.c.0.s8 %v297
    %v299 = vlaneseq
    %v300 = vshrl.u32 %v299, 7
    %v301 = vsub.s32 %v298, %v300
    %v302 = vrot.slane %v288, %v301
    %v303 = vcombine.high %v295, %v295
    %v304 = vcombine.high %v302, %v302
    %v306 = vunpack.c.l.s4 1966171168
    %v307 = vunpack.c.0.s8 %v306
    %v308 = vlaneseq
    %v309 = vshrl.u32 %v308, 7
    %v310 = vsub.s32 %v307, %v309
    %v311 = vrot.slane %v295, %v310
    %v313 = vunpack.c.l.s4 1966171168
    %v314 = vunpack.c.0.s8 %v313
    %v315 = vlaneseq
    %v316 = vshrl.u32 %v315, 7
    %v317 = vsub.s32 %v314, %v316
    %v318 = vrot.slane %v302, %v317
    %v320 = vunpack.c.l.s4 1966171168
    %v321 = vunpack.c.0.s8 %v320
    %v322 = vlaneseq
    %v323 = vshrl.u32 %v322, 7
    %v324 = vsub.s32 %v321, %v323
    %v325 = vrot.slane %v303, %v324
    %v327 = vunpack.c.l.s4 1966171168
    %v328 = vunpack.c.0.s8 %v327
    %v329 = vlaneseq
    %v330 = vshrl.u32 %v329, 7
    %v331 = vsub.s32 %v328, %v330
    %v332 = vrot.slane %v304, %v331
    %v333 = vcombine.high %v311, %v311
    %v334 = vcombine.high %v318, %v318
    %v335 = vcombine.high %v325, %v325
    %v336 = vcombine.high %v332, %v332
    %v337 = vcombine.high %v41, %v41
    %v339 = vunpack.c.l.s4 1966171168
    %v340 = vunpack.c.0.s8 %v339
    %v341 = vlaneseq
    %v342 = vshrl.u32 %v341, 7
    %v343 = vsub.s32 %v340, %v342
    %v344 = vrot.slane %v41, %v343
    %v346 = vunpack.c.l.s4 1966171168
    %v347 = vunpack.c.0.s8 %v346
    %v348 = vlaneseq
    %v349 = vshrl.u32 %v348, 7
    %v350 = vsub.s32 %v347, %v349
    %v351 = vrot.slane %v337, %v350
    %v352 = vcombine.high %v344, %v344
    %v353 = vcombine.high %v351, %v351
    %v355 = vunpack.c.l.s4 1966171168
    %v356 = vunpack.c.0.s8 %v355
    %v357 = vlaneseq
    %v358 = vshrl.u32 %v357, 7
    %v359 = vsub.s32 %v356, %v358
    %v360 = vrot.slane %v344, %v359
    %v362 = vunpack.c.l.s4 1966171168
    %v363 = vunpack.c.0.s8 %v362
    %v364 = vlaneseq
    %v365 = vshrl.u32 %v364, 7
    %v366 = vsub.s32 %v363, %v365
    %v367 = vrot.slane %v351, %v366
    %v369 = vunpack.c.l.s4 1966171168
    %v370 = vunpack.c.0.s8 %v369
    %v371 = vlaneseq
    %v372 = vshrl.u32 %v371, 7
    %v373 = vsub.s32 %v370, %v372
    %v374 = vrot.slane %v352, %v373
    %v376 = vunpack.c.l.s4 1966171168
    %v377 = vunpack.c.0.s8 %v376
    %v378 = vlaneseq
    %v379 = vshrl.u32 %v378, 7
    %v380 = vsub.s32 %v377, %v379
    %v381 = vrot.slane %v353, %v380
    %v382 = vcombine.high %v360, %v360
    %v383 = vcombine.high %v367, %v367
    %v384 = vcombine.high %v374, %v374
    %v385 = vcombine.high %v381, %v381
    %v386 = vlaneseq
    %v387 = vshrl.u32 %v386, 7
    %v388 = vsub.s32 0, %v387
    %v389 = vrot.slane %v311, %v388
    %v390 = vlaneseq
    %v391 = vshrl.u32 %v390, 7
    %v392 = vsub.s32 0, %v391
    %v393 = vrot.slane %v325, %v392
    %v394 = vlaneseq
    %v395 = vshrl.u32 %v394, 7
    %v396 = vsub.s32 0, %v395
    %v397 = vrot.slane %v333, %v396
    %v398 = vlaneseq
    %v399 = vshrl.u32 %v398, 7
    %v400 = vsub.s32 0, %v399
    %v401 = vrot.slane %v335, %v400
    %v402 = vlaneseq
    %v403 = vshrl.u32 %v402, 7
    %v404 = vsub.s32 0, %v403
    %v405 = vrot.slane %v318, %v404
    %v406 = vlaneseq
    %v407 = vshrl.u32 %v406, 7
    %v408 = vsub.s32 0, %v407
    %v409 = vrot.slane %v332, %v408
    %v410 = vlaneseq
    %v411 = vshrl.u32 %v410, 7
    %v412 = vsub.s32 0, %v411
    %v413 = vrot.slane %v334, %v412
    %v414 = vlaneseq
    %v415 = vshrl.u32 %v414, 7
    %v416 = vsub.s32 0, %v415
    %v417 = vrot.slane %v336, %v416
    %v418 = vlaneseq
    %v419 = vshrl.u32 %v418, 7
    %v420 = vsub.s32 0, %v419
    %v421 = vrot.slane %v360, %v420
    %v422 = vlaneseq
    %v423 = vshrl.u32 %v422, 7
    %v424 = vsub.s32 0, %v423
    %v425 = vrot.slane %v374, %v424
    %v426 = vlaneseq
    %v427 = vshrl.u32 %v426, 7
    %v428 = vsub.s32 0, %v427
    %v429 = vrot.slane %v382, %v428
    %v430 = vlaneseq
    %v431 = vshrl.u32 %v430, 7
    %v432 = vsub.s32 0, %v431
    %v433 = vrot.slane %v384, %v432
    %v434 = vlaneseq
    %v435 = vshrl.u32 %v434, 7
    %v436 = vsub.s32 0, %v435
    %v437 = vrot.slane %v367, %v436
    %v438 = vlaneseq
    %v439 = vshrl.u32 %v438, 7
    %v440 = vsub.s32 0, %v439
    %v441 = vrot.slane %v381, %v440
    %v442 = vlaneseq
    %v443 = vshrl.u32 %v442, 7
    %v444 = vsub.s32 0, %v443
    %v445 = vrot.slane %v383, %v444
    %v446 = vlaneseq
    %v447 = vshrl.u32 %v446, 7
    %v448 = vsub.s32 0, %v447
    %v449 = vrot.slane %v385, %v448
    %v466 = vmul.f32 %v389, %v254
    %v467 = vmul.f32 %v389, %v255
    %v468 = vmul.f32 %v393, %v254
    %v469 = vmul.f32 %v393, %v255
    %v470 = vmul.f32 %v397, %v254
    %v471 = vmul.f32 %v397, %v255
    %v472 = vmul.f32 %v401, %v254
    %v473 = vmul.f32 %v401, %v255
    %v474 = vmul.f32 %v405, %v254
    %v475 = vmul.f32 %v405, %v255
    %v476 = vmul.f32 %v409, %v254
    %v477 = vmul.f32 %v409, %v255
    %v478 = vmul.f32 %v413, %v254
    %v479 = vmul.f32 %v413, %v255
    %v480 = vmul.f32 %v417, %v254
    %v481 = vmul.f32 %v417, %v255
    %v482 = vmul.f32 %v421, %v254
    %v483 = vmul.f32 %v421, %v255
    %v484 = vmul.f32 %v425, %v254
    %v485 = vmul.f32 %v425, %v255
    %v486 = vmul.f32 %v429, %v254
    %v487 = vmul.f32 %v429, %v255
    %v488 = vmul.f32 %v433, %v254
    %v489 = vmul.f32 %v433, %v255
    %v490 = vmul.f32 %v437, %v254
    %v491 = vmul.f32 %v437, %v255
    %v492 = vmul.f32 %v441, %v254
    %v493 = vmul.f32 %v441, %v255
    %v494 = vmul.f32 %v445, %v254
    %v495 = vmul.f32 %v445, %v255
    %v496 = vmul.f32 %v449, %v254
    %v497 = vmul.f32 %v449, %v255
    %v498 = vadd.f32 %v466, 0.0
    %v499 = vadd.f32 %v467, 0.0
    %v500 = vadd.f32 %v468, 0.0
    %v501 = vadd.f32 %v469, 0.0
    %v502 = vadd.f32 %v470, 0.0
    %v503 = vadd.f32 %v471, 0.0
    %v504 = vadd.f32 %v472, 0.0
    %v505 = vadd.f32 %v473, 0.0
    %v506 = vadd.f32 %v474, 0.0
    %v507 = vadd.f32 %v475, 0.0
    %v508 = vadd.f32 %v476, 0.0
    %v509 = vadd.f32 %v477, 0.0
    %v510 = vadd.f32 %v478, 0.0
    %v511 = vadd.f32 %v479, 0.0
    %v512 = vadd.f32 %v480, 0.0
    %v513 = vadd.f32 %v481, 0.0
    %v514 = vadd.f32 %v482, 0.0
    %v515 = vadd.f32 %v483, 0.0
    %v516 = vadd.f32 %v484, 0.0
    %v517 = vadd.f32 %v485, 0.0
    %v518 = vadd.f32 %v486, 0.0
    %v519 = vadd.f32 %v487, 0.0
    %v520 = vadd.f32 %v488, 0.0
    %v521 = vadd.f32 %v489, 0.0
    %v522 = vadd.f32 %v490, 0.0
    %v523 = vadd.f32 %v491, 0.0
    %v524 = vadd.f32 %v492, 0.0
    %v525 = vadd.f32 %v493, 0.0
    %v526 = vadd.f32 %v494, 0.0
    %v527 = vadd.f32 %v495, 0.0
    %v528 = vadd.f32 %v496, 0.0
    %v529 = vadd.f32 %v497, 0.0
    %v532 = vcombine.high %v42, %v42
    %v534 = vunpack.c.l.s4 1966171168
    %v535 = vunpack.c.0.s8 %v534
    %v536 = vlaneseq
    %v537 = vshrl.u32 %v536, 7
    %v538 = vsub.s32 %v535, %v537
    %v539 = vrot.slane %v42, %v538
    %v541 = vunpack.c.l.s4 1966171168
    %v542 = vunpack.c.0.s8 %v541
    %v543 = vlaneseq
    %v544 = vshrl.u32 %v543, 7
    %v545 = vsub.s32 %v542, %v544
    %v546 = vrot.slane %v532, %v545
    %v547 = vcombine.high %v539, %v539
    %v548 = vcombine.high %v546, %v546
    %v550 = vunpack.c.l.s4 1966171168
    %v551 = vunpack.c.0.s8 %v550
    %v552 = vlaneseq
    %v553 = vshrl.u32 %v552, 7
    %v554 = vsub.s32 %v551, %v553
    %v555 = vrot.slane %v539, %v554
    %v557 = vunpack.c.l.s4 1966171168
    %v558 = vunpack.c.0.s8 %v557
    %v559 = vlaneseq
    %v560 = vshrl.u32 %v559, 7
    %v561 = vsub.s32 %v558, %v560
    %v562 = vrot.slane %v546, %v561
    %v564 = vunpack.c.l.s4 1966171168
    %v565 = vunpack.c.0.s8 %v564
    %v566 = vlaneseq
    %v567 = vshrl.u32 %v566, 7
    %v568 = vsub.s32 %v565, %v567
    %v569 = vrot.slane %v547, %v568
    %v571 = vunpack.c.l.s4 1966171168
    %v572 = vunpack.c.0.s8 %v571
    %v573 = vlaneseq
    %v574 = vshrl.u32 %v573, 7
    %v575 = vsub.s32 %v572, %v574
    %v576 = vrot.slane %v548, %v575
    %v577 = vcombine.high %v555, %v555
    %v578 = vcombine.high %v562, %v562
    %v579 = vcombine.high %v569, %v569
    %v580 = vcombine.high %v576, %v576
    %v581 = vcombine.high %v43, %v43
    %v583 = vunpack.c.l.s4 1966171168
    %v584 = vunpack.c.0.s8 %v583
    %v585 = vlaneseq
    %v586 = vshrl.u32 %v585, 7
    %v587 = vsub.s32 %v584, %v586
    %v588 = vrot.slane %v43, %v587
    %v590 = vunpack.c.l.s4 1966171168
    %v591 = vunpack.c.0.s8 %v590
    %v592 = vlaneseq
    %v593 = vshrl.u32 %v592, 7
    %v594 = vsub.s32 %v591, %v593
    %v595 = vrot.slane %v581, %v594
    %v596 = vcombine.high %v588, %v588
    %v597 = vcombine.high %v595, %v595
    %v599 = vunpack.c.l.s4 1966171168
    %v600 = vunpack.c.0.s8 %v599
    %v601 = vlaneseq
    %v602 = vshrl.u32 %v601, 7
    %v603 = vsub.s32 %v600, %v602
    %v604 = vrot.slane %v588, %v603
    %v606 = vunpack.c.l.s4 1966171168
    %v607 = vunpack.c.0.s8 %v606
    %v608 = vlaneseq
    %v609 = vshrl.u32 %v608, 7
    %v610 = vsub.s32 %v607, %v609
    %v611 = vrot.slane %v595, %v610
    %v613 = vunpack.c.l.s4 1966171168
    %v614 = vunpack.c.0.s8 %v613
    %v615 = vlaneseq
    %v616 = vshrl.u32 %v615, 7
    %v617 = vsub.s32 %v614, %v616
    %v618 = vrot.slane %v596, %v617
    %v620 = vunpack.c.l.s4 1966171168
    %v621 = vunpack.c.0.s8 %v620
    %v622 = vlaneseq
    %v623 = vshrl.u32 %v622, 7
    %v624 = vsub.s32 %v621, %v623
    %v625 = vrot.slane %v597, %v624
    %v626 = vcombine.high %v604, %v604
    %v627 = vcombine.high %v611, %v611
    %v628 = vcombine.high %v618, %v618
    %v629 = vcombine.high %v625, %v625
    %v630 = vlaneseq
    %v631 = vshrl.u32 %v630, 7
    %v632 = vsub.s32 0, %v631
    %v633 = vrot.slane %v555, %v632
    %v634 = vlaneseq
    %v635 = vshrl.u32 %v634, 7
    %v636 = vsub.s32 0, %v635
    %v637 = vrot.slane %v569, %v636
    %v638 = vlaneseq
    %v639 = vshrl.u32 %v638, 7
    %v640 = vsub.s32 0, %v639
    %v641 = vrot.slane %v577, %v640
    %v642 = vlaneseq
    %v643 = vshrl.u32 %v642, 7
    %v644 = vsub.s32 0, %v643
    %v645 = vrot.slane %v579, %v644
    %v646 = vlaneseq
    %v647 = vshrl.u32 %v646, 7
    %v648 = vsub.s32 0, %v647
    %v649 = vrot.slane %v562, %v648
    %v650 = vlaneseq
    %v651 = vshrl.u32 %v650, 7
    %v652 = vsub.s32 0, %v651
    %v653 = vrot.slane %v576, %v652
    %v654 = vlaneseq
    %v655 = vshrl.u32 %v654, 7
    %v656 = vsub.s32 0, %v655
    %v657 = vrot.slane %v578, %v656
    %v658 = vlaneseq
    %v659 = vshrl.u32 %v658, 7
    %v660 = vsub.s32 0, %v659
    %v661 = vrot.slane %v580, %v660
    %v662 = vlaneseq
    %v663 = vshrl.u32 %v662, 7
    %v664 = vsub.s32 0, %v663
    %v665 = vrot.slane %v604, %v664
    %v666 = vlaneseq
    %v667 = vshrl.u32 %v666, 7
    %v668 = vsub.s32 0, %v667
    %v669 = vrot.slane %v618, %v668
    %v670 = vlaneseq
    %v671 = vshrl.u32 %v670, 7
    %v672 = vsub.s32 0, %v671
    %v673 = vrot.slane %v626, %v672
    %v674 = vlaneseq
    %v675 = vshrl.u32 %v674, 7
    %v676 = vsub.s32 0, %v675
    %v677 = vrot.slane %v628, %v676
    %v678 = vlaneseq
    %v679 = vshrl.u32 %v678, 7
    %v680 = vsub.s32 0, %v679
    %v681 = vrot.slane %v611, %v680
    %v682 = vlaneseq
    %v683 = vshrl.u32 %v682, 7
    %v684 = vsub.s32 0, %v683
    %v685 = vrot.slane %v625, %v684
    %v686 = vlaneseq
    %v687 = vshrl.u32 %v686, 7
    %v688 = vsub.s32 0, %v687
    %v689 = vrot.slane %v627, %v688
    %v690 = vlaneseq
    %v691 = vshrl.u32 %v690, 7
    %v692 = vsub.s32 0, %v691
    %v693 = vrot.slane %v629, %v692
    %v710 = vmul.f32 %v633, %v256
    %v711 = vmul.f32 %v633, %v257
    %v712 = vmul.f32 %v637, %v256
    %v713 = vmul.f32 %v637, %v257
    %v714 = vmul.f32 %v641, %v256
    %v715 = vmul.f32 %v641, %v257
    %v716 = vmul.f32 %v645, %v256
    %v717 = vmul.f32 %v645, %v257
    %v718 = vmul.f32 %v649, %v256
    %v719 = vmul.f32 %v649, %v257
    %v720 = vmul.f32 %v653, %v256
    %v721 = vmul.f32 %v653, %v257
    %v722 = vmul.f32 %v657, %v256
    %v723 = vmul.f32 %v657, %v257
    %v724 = vmul.f32 %v661, %v256
    %v725 = vmul.f32 %v661, %v257
    %v726 = vmul.f32 %v665, %v256
    %v727 = vmul.f32 %v665, %v257
    %v728 = vmul.f32 %v669, %v256
    %v729 = vmul.f32 %v669, %v257
    %v730 = vmul.f32 %v673, %v256
    %v731 = vmul.f32 %v673, %v257
    %v732 = vmul.f32 %v677, %v256
    %v733 = vmul.f32 %v677, %v257
    %v734 = vmul.f32 %v681, %v256
    %v735 = vmul.f32 %v681, %v257
    %v736 = vmul.f32 %v685, %v256
    %v737 = vmul.f32 %v685, %v257
    %v738 = vmul.f32 %v689, %v256
    %v739 = vmul.f32 %v689, %v257
    %v740 = vmul.f32 %v693, %v256
    %v741 = vmul.f32 %v693, %v257
    %v742 = vadd.f32 %v498, %v710
    %v743 = vadd.f32 %v499, %v711
    %v744 = vadd.f32 %v500, %v712
    %v745 = vadd.f32 %v501, %v713
    %v746 = vadd.f32 %v502, %v714
    %v747 = vadd.f32 %v503, %v715
    %v748 = vadd.f32 %v504, %v716
    %v749 = vadd.f32 %v505, %v717
    %v750 = vadd.f32 %v506, %v718
    %v751 = vadd.f32 %v507, %v719
    %v752 = vadd.f32 %v508, %v720
    %v753 = vadd.f32 %v509, %v721
    %v754 = vadd.f32 %v510, %v722
    %v755 = vadd.f32 %v511, %v723
    %v756 = vadd.f32 %v512, %v724
    %v757 = vadd.f32 %v513, %v725
    %v758 = vadd.f32 %v514, %v726
    %v759 = vadd.f32 %v515, %v727
    %v760 = vadd.f32 %v516, %v728
    %v761 = vadd.f32 %v517, %v729
    %v762 = vadd.f32 %v518, %v730
    %v763 = vadd.f32 %v519, %v731
    %v764 = vadd.f32 %v520, %v732
    %v765 = vadd.f32 %v521, %v733
    %v766 = vadd.f32 %v522, %v734
    %v767 = vadd.f32 %v523, %v735
    %v768 = vadd.f32 %v524, %v736
    %v769 = vadd.f32 %v525, %v737
    %v770 = vadd.f32 %v526, %v738
    %v771 = vadd.f32 %v527, %v739
    %v772 = vadd.f32 %v528, %v740
    %v773 = vadd.f32 %v529, %v741
    %v776 = vcombine.high %v44, %v44
    %v778 = vunpack.c.l.s4 1966171168
    %v779 = vunpack.c.0.s8 %v778
    %v780 = vlaneseq
    %v781 = vshrl.u32 %v780, 7
    %v782 = vsub.s32 %v779, %v781
    %v783 = vrot.slane %v44, %v782
    %v785 = vunpack.c.l.s4 1966171168
    %v786 = vunpack.c.0.s8 %v785
    %v787 = vlaneseq
    %v788 = vshrl.u32 %v787, 7
    %v789 = vsub.s32 %v786, %v788
    %v790 = vrot.slane %v776, %v789
    %v791 = vcombine.high %v783, %v783
    %v792 = vcombine.high %v790, %v790
    %v794 = vunpack.c.l.s4 1966171168
    %v795 = vunpack.c.0.s8 %v794
    %v796 = vlaneseq
    %v797 = vshrl.u32 %v796, 7
    %v798 = vsub.s32 %v795, %v797
    %v799 = vrot.slane %v783, %v798
    %v801 = vunpack.c.l.s4 1966171168
    %v802 = vunpack.c.0.s8 %v801
    %v803 = vlaneseq
    %v804 = vshrl.u32 %v803, 7
    %v805 = vsub.s32 %v802, %v804
    %v806 = vrot.slane %v790, %v805
    %v808 = vunpack.c.l.s4 1966171168
    %v809 = vunpack.c.0.s8 %v808
    %v810 = vlaneseq
    %v811 = vshrl.u32 %v810, 7
    %v812 = vsub.s32 %v809, %v811
    %v813 = vrot.slane %v791, %v812
    %v815 = vunpack.c.l.s4 1966171168
    %v816 = vunpack.c.0.s8 %v815
    %v817 = vlaneseq
    %v818 = vshrl.u32 %v817, 7
    %v819 = vsub.s32 %v816, %v818
    %v820 = vrot.slane %v792, %v819
    %v821 = vcombine.high %v799, %v799
    %v822 = vcombine.high %v806, %v806
    %v823 = vcombine.high %v813, %v813
    %v824 = vcombine.high %v820, %v820
    %v825 = vcombine.high %v45, %v45
    %v827 = vunpack.c.l.s4 1966171168
    %v828 = vunpack.c.0.s8 %v827
    %v829 = vlaneseq
    %v830 = vshrl.u32 %v829, 7
    %v831 = vsub.s32 %v828, %v830
    %v832 = vrot.slane %v45, %v831
    %v834 = vunpack.c.l.s4 1966171168
    %v835 = vunpack.c.0.s8 %v834
    %v836 = vlaneseq
    %v837 = vshrl.u32 %v836, 7
    %v838 = vsub.s32 %v835, %v837
    %v839 = vrot.slane %v825, %v838
    %v840 = vcombine.high %v832, %v832
    %v841 = vcombine.high %v839, %v839
    %v843 = vunpack.c.l.s4 1966171168
    %v844 = vunpack.c.0.s8 %v843
    %v845 = vlaneseq
    %v846 = vshrl.u32 %v845, 7
    %v847 = vsub.s32 %v844, %v846
    %v848 = vrot.slane %v832, %v847
    %v850 = vunpack.c.l.s4 1966171168
    %v851 = vunpack.c.0.s8 %v850
    %v852 = vlaneseq
    %v853 = vshrl.u32 %v852, 7
    %v854 = vsub.s32 %v851, %v853
    %v855 = vrot.slane %v839, %v854
    %v857 = vunpack.c.l.s4 1966171168
    %v858 = vunpack.c.0.s8 %v857
    %v859 = vlaneseq
    %v860 = vshrl.u32 %v859, 7
    %v861 = vsub.s32 %v858, %v860
    %v862 = vrot.slane %v840, %v861
    %v864 = vunpack.c.l.s4 1966171168
    %v865 = vunpack.c.0.s8 %v864
    %v866 = vlaneseq
    %v867 = vshrl.u32 %v866, 7
    %v868 = vsub.s32 %v865, %v867
    %v869 = vrot.slane %v841, %v868
    %v870 = vcombine.high %v848, %v848
    %v871 = vcombine.high %v855, %v855
    %v872 = vcombine.high %v862, %v862
    %v873 = vcombine.high %v869, %v869
    %v874 = vlaneseq
    %v875 = vshrl.u32 %v874, 7
    %v876 = vsub.s32 0, %v875
    %v877 = vrot.slane %v799, %v876
    %v878 = vlaneseq
    %v879 = vshrl.u32 %v878, 7
    %v880 = vsub.s32 0, %v879
    %v881 = vrot.slane %v813, %v880
    %v882 = vlaneseq
    %v883 = vshrl.u32 %v882, 7
    %v884 = vsub.s32 0, %v883
    %v885 = vrot.slane %v821, %v884
    %v886 = vlaneseq
    %v887 = vshrl.u32 %v886, 7
    %v888 = vsub.s32 0, %v887
    %v889 = vrot.slane %v823, %v888
    %v890 = vlaneseq
    %v891 = vshrl.u32 %v890, 7
    %v892 = vsub.s32 0, %v891
    %v893 = vrot.slane %v806, %v892
    %v894 = vlaneseq
    %v895 = vshrl.u32 %v894, 7
    %v896 = vsub.s32 0, %v895
    %v897 = vrot.slane %v820, %v896
    %v898 = vlaneseq
    %v899 = vshrl.u32 %v898, 7
    %v900 = vsub.s32 0, %v899
    %v901 = vrot.slane %v822, %v900
    %v902 = vlaneseq
    %v903 = vshrl.u32 %v902, 7
    %v904 = vsub.s32 0, %v903
    %v905 = vrot.slane %v824, %v904
    %v906 = vlaneseq
    %v907 = vshrl.u32 %v906, 7
    %v908 = vsub.s32 0, %v907
    %v909 = vrot.slane %v848, %v908
    %v910 = vlaneseq
    %v911 = vshrl.u32 %v910, 7
    %v912 = vsub.s32 0, %v911
    %v913 = vrot.slane %v862, %v912
    %v914 = vlaneseq
    %v915 = vshrl.u32 %v914, 7
    %v916 = vsub.s32 0, %v915
    %v917 = vrot.slane %v870, %v916
    %v918 = vlaneseq
    %v919 = vshrl.u32 %v918, 7
    %v920 = vsub.s32 0, %v919
    %v921 = vrot.slane %v872, %v920
    %v922 = vlaneseq
    %v923 = vshrl.u32 %v922, 7
    %v924 = vsub.s32 0, %v923
    %v925 = vrot.slane %v855, %v924
    %v926 = vlaneseq
    %v927 = vshrl.u32 %v926, 7
    %v928 = vsub.s32 0, %v927
    %v929 = vrot.slane %v869, %v928
    %v930 = vlaneseq
    %v931 = vshrl.u32 %v930, 7
    %v932 = vsub.s32 0, %v931
    %v933 = vrot.slane %v871, %v932
    %v934 = vlaneseq
    %v935 = vshrl.u32 %v934, 7
    %v936 = vsub.s32 0, %v935
    %v937 = vrot.slane %v873, %v936
    %v954 = vmul.f32 %v877, %v258
    %v955 = vmul.f32 %v877, %v259
    %v956 = vmul.f32 %v881, %v258
    %v957 = vmul.f32 %v881, %v259
    %v958 = vmul.f32 %v885, %v258
    %v959 = vmul.f32 %v885, %v259
    %v960 = vmul.f32 %v889, %v258
    %v961 = vmul.f32 %v889, %v259
    %v962 = vmul.f32 %v893, %v258
    %v963 = vmul.f32 %v893, %v259
    %v964 = vmul.f32 %v897, %v258
    %v965 = vmul.f32 %v897, %v259
    %v966 = vmul.f32 %v901, %v258
    %v967 = vmul.f32 %v901, %v259
    %v968 = vmul.f32 %v905, %v258
    %v969 = vmul.f32 %v905, %v259
    %v970 = vmul.f32 %v909, %v258
    %v971 = vmul.f32 %v909, %v259
    %v972 = vmul.f32 %v913, %v258
    %v973 = vmul.f32 %v913, %v259
    %v974 = vmul.f32 %v917, %v258
    %v975 = vmul.f32 %v917, %v259
    %v976 = vmul.f32 %v921, %v258
    %v977 = vmul.f32 %v921, %v259
    %v978 = vmul.f32 %v925, %v258
    %v979 = vmul.f32 %v925, %v259
    %v980 = vmul.f32 %v929, %v258
    %v981 = vmul.f32 %v929, %v259
    %v982 = vmul.f32 %v933, %v258
    %v983 = vmul.f32 %v933, %v259
    %v984 = vmul.f32 %v937, %v258
    %v985 = vmul.f32 %v937, %v259
    %v986 = vadd.f32 %v742, %v954
    %v987 = vadd.f32 %v743, %v955
    %v988 = vadd.f32 %v744, %v956
    %v989 = vadd.f32 %v745, %v957
    %v990 = vadd.f32 %v746, %v958
    %v991 = vadd.f32 %v747, %v959
    %v992 = vadd.f32 %v748, %v960
    %v993 = vadd.f32 %v749, %v961
    %v994 = vadd.f32 %v750, %v962
    %v995 = vadd.f32 %v751, %v963
    %v996 = vadd.f32 %v752, %v964
    %v997 = vadd.f32 %v753, %v965
    %v998 = vadd.f32 %v754, %v966
    %v999 = vadd.f32 %v755, %v967
    %v1000 = vadd.f32 %v756, %v968
    %v1001 = vadd.f32 %v757, %v969
    %v1002 = vadd.f32 %v758, %v970
    %v1003 = vadd.f32 %v759, %v971
    %v1004 = vadd.f32 %v760, %v972
    %v1005 = vadd.f32 %v761, %v973
    %v1006 = vadd.f32 %v762, %v974
    %v1007 = vadd.f32 %v763, %v975
    %v1008 = vadd.f32 %v764, %v976
    %v1009 = vadd.f32 %v765, %v977
    %v1010 = vadd.f32 %v766, %v978
    %v1011 = vadd.f32 %v767, %v979
    %v1012 = vadd.f32 %v768, %v980
    %v1013 = vadd.f32 %v769, %v981
    %v1014 = vadd.f32 %v770, %v982
    %v1015 = vadd.f32 %v771, %v983
    %v1016 = vadd.f32 %v772, %v984
    %v1017 = vadd.f32 %v773, %v985
    %v1020 = vcombine.high %v46, %v46
    %v1022 = vunpack.c.l.s4 1966171168
    %v1023 = vunpack.c.0.s8 %v1022
    %v1024 = vlaneseq
    %v1025 = vshrl.u32 %v1024, 7
    %v1026 = vsub.s32 %v1023, %v1025
    %v1027 = vrot.slane %v46, %v1026
    %v1029 = vunpack.c.l.s4 1966171168
    %v1030 = vunpack.c.0.s8 %v1029
    %v1031 = vlaneseq
    %v1032 = vshrl.u32 %v1031, 7
    %v1033 = vsub.s32 %v1030, %v1032
    %v1034 = vrot.slane %v1020, %v1033
    %v1035 = vcombine.high %v1027, %v1027
    %v1036 = vcombine.high %v1034, %v1034
    %v1038 = vunpack.c.l.s4 1966171168
    %v1039 = vunpack.c.0.s8 %v1038
    %v1040 = vlaneseq
    %v1041 = vshrl.u32 %v1040, 7
    %v1042 = vsub.s32 %v1039, %v1041
    %v1043 = vrot.slane %v1027, %v1042
    %v1045 = vunpack.c.l.s4 1966171168
    %v1046 = vunpack.c.0.s8 %v1045
    %v1047 = vlaneseq
    %v1048 = vshrl.u32 %v1047, 7
    %v1049 = vsub.s32 %v1046, %v1048
    %v1050 = vrot.slane %v1034, %v1049
    %v1052 = vunpack.c.l.s4 1966171168
    %v1053 = vunpack.c.0.s8 %v1052
    %v1054 = vlaneseq
    %v1055 = vshrl.u32 %v1054, 7
    %v1056 = vsub.s32 %v1053, %v1055
    %v1057 = vrot.slane %v1035, %v1056
    %v1059 = vunpack.c.l.s4 1966171168
    %v1060 = vunpack.c.0.s8 %v1059
    %v1061 = vlaneseq
    %v1062 = vshrl.u32 %v1061, 7
    %v1063 = vsub.s32 %v1060, %v1062
    %v1064 = vrot.slane %v1036, %v1063
    %v1065 = vcombine.high %v1043, %v1043
    %v1066 = vcombine.high %v1050, %v1050
    %v1067 = vcombine.high %v1057, %v1057
    %v1068 = vcombine.high %v1064, %v1064
    %v1069 = vcombine.high %v47, %v47
    %v1071 = vunpack.c.l.s4 1966171168
    %v1072 = vunpack.c.0.s8 %v1071
    %v1073 = vlaneseq
    %v1074 = vshrl.u32 %v1073, 7
    %v1075 = vsub.s32 %v1072, %v1074
    %v1076 = vrot.slane %v47, %v1075
    %v1078 = vunpack.c.l.s4 1966171168
    %v1079 = vunpack.c.0.s8 %v1078
    %v1080 = vlaneseq
    %v1081 = vshrl.u32 %v1080, 7
    %v1082 = vsub.s32 %v1079, %v1081
    %v1083 = vrot.slane %v1069, %v1082
    %v1084 = vcombine.high %v1076, %v1076
    %v1085 = vcombine.high %v1083, %v1083
    %v1087 = vunpack.c.l.s4 1966171168
    %v1088 = vunpack.c.0.s8 %v1087
    %v1089 = vlaneseq
    %v1090 = vshrl.u32 %v1089, 7
    %v1091 = vsub.s32 %v1088, %v1090
    %v1092 = vrot.slane %v1076, %v1091
    %v1094 = vunpack.c.l.s4 1966171168
    %v1095 = vunpack.c.0.s8 %v1094
    %v1096 = vlaneseq
    %v1097 = vshrl.u32 %v1096, 7
    %v1098 = vsub.s32 %v1095, %v1097
    %v1099 = vrot.slane %v1083, %v1098
    %v1101 = vunpack.c.l.s4 1966171168
    %v1102 = vunpack.c.0.s8 %v1101
    %v1103 = vlaneseq
    %v1104 = vshrl.u32 %v1103, 7
    %v1105 = vsub.s32 %v1102, %v1104
    %v1106 = vrot.slane %v1084, %v1105
    %v1108 = vunpack.c.l.s4 1966171168
    %v1109 = vunpack.c.0.s8 %v1108
    %v1110 = vlaneseq
    %v1111 = vshrl.u32 %v1110, 7
    %v1112 = vsub.s32 %v1109, %v1111
    %v1113 = vrot.slane %v1085, %v1112
    %v1114 = vcombine.high %v1092, %v1092
    %v1115 = vcombine.high %v1099, %v1099
    %v1116 = vcombine.high %v1106, %v1106
    %v1117 = vcombine.high %v1113, %v1113
    %v1118 = vlaneseq
    %v1119 = vshrl.u32 %v1118, 7
    %v1120 = vsub.s32 0, %v1119
    %v1121 = vrot.slane %v1043, %v1120
    %v1122 = vlaneseq
    %v1123 = vshrl.u32 %v1122, 7
    %v1124 = vsub.s32 0, %v1123
    %v1125 = vrot.slane %v1057, %v1124
    %v1126 = vlaneseq
    %v1127 = vshrl.u32 %v1126, 7
    %v1128 = vsub.s32 0, %v1127
    %v1129 = vrot.slane %v1065, %v1128
    %v1130 = vlaneseq
    %v1131 = vshrl.u32 %v1130, 7
    %v1132 = vsub.s32 0, %v1131
    %v1133 = vrot.slane %v1067, %v1132
    %v1134 = vlaneseq
    %v1135 = vshrl.u32 %v1134, 7
    %v1136 = vsub.s32 0, %v1135
    %v1137 = vrot.slane %v1050, %v1136
    %v1138 = vlaneseq
    %v1139 = vshrl.u32 %v1138, 7
    %v1140 = vsub.s32 0, %v1139
    %v1141 = vrot.slane %v1064, %v1140
    %v1142 = vlaneseq
    %v1143 = vshrl.u32 %v1142, 7
    %v1144 = vsub.s32 0, %v1143
    %v1145 = vrot.slane %v1066, %v1144
    %v1146 = vlaneseq
    %v1147 = vshrl.u32 %v1146, 7
    %v1148 = vsub.s32 0, %v1147
    %v1149 = vrot.slane %v1068, %v1148
    %v1150 = vlaneseq
    %v1151 = vshrl.u32 %v1150, 7
    %v1152 = vsub.s32 0, %v1151
    %v1153 = vrot.slane %v1092, %v1152
    %v1154 = vlaneseq
    %v1155 = vshrl.u32 %v1154, 7
    %v1156 = vsub.s32 0, %v1155
    %v1157 = vrot.slane %v1106, %v1156
    %v1158 = vlaneseq
    %v1159 = vshrl.u32 %v1158, 7
    %v1160 = vsub.s32 0, %v1159
    %v1161 = vrot.slane %v1114, %v1160
    %v1162 = vlaneseq
    %v1163 = vshrl.u32 %v1162, 7
    %v1164 = vsub.s32 0, %v1163
    %v1165 = vrot.slane %v1116, %v1164
    %v1166 = vlaneseq
    %v1167 = vshrl.u32 %v1166, 7
    %v1168 = vsub.s32 0, %v1167
    %v1169 = vrot.slane %v1099, %v1168
    %v1170 = vlaneseq
    %v1171 = vshrl.u32 %v1170, 7
    %v1172 = vsub.s32 0, %v1171
    %v1173 = vrot.slane %v1113, %v1172
    %v1174 = vlaneseq
    %v1175 = vshrl.u32 %v1174, 7
    %v1176 = vsub.s32 0, %v1175
    %v1177 = vrot.slane %v1115, %v1176
    %v1178 = vlaneseq
    %v1179 = vshrl.u32 %v1178, 7
    %v1180 = vsub.s32 0, %v1179
    %v1181 = vrot.slane %v1117, %v1180
    %v1198 = vmul.f32 %v1121, %v260
    %v1199 = vmul.f32 %v1121, %v261
    %v1200 = vmul.f32 %v1125, %v260
    %v1201 = vmul.f32 %v1125, %v261
    %v1202 = vmul.f32 %v1129, %v260
    %v1203 = vmul.f32 %v1129, %v261
    %v1204 = vmul.f32 %v1133, %v260
    %v1205 = vmul.f32 %v1133, %v261
    %v1206 = vmul.f32 %v1137, %v260
    %v1207 = vmul.f32 %v1137, %v261
    %v1208 = vmul.f32 %v1141, %v260
    %v1209 = vmul.f32 %v1141, %v261
    %v1210 = vmul.f32 %v1145, %v260
    %v1211 = vmul.f32 %v1145, %v261
    %v1212 = vmul.f32 %v1149, %v260
    %v1213 = vmul.f32 %v1149, %v261
    %v1214 = vmul.f32 %v1153, %v260
    %v1215 = vmul.f32 %v1153, %v261
    %v1216 = vmul.f32 %v1157, %v260
    %v1217 = vmul.f32 %v1157, %v261
    %v1218 = vmul.f32 %v1161, %v260
    %v1219 = vmul.f32 %v1161, %v261
    %v1220 = vmul.f32 %v1165, %v260
    %v1221 = vmul.f32 %v1165, %v261
    %v1222 = vmul.f32 %v1169, %v260
    %v1223 = vmul.f32 %v1169, %v261
    %v1224 = vmul.f32 %v1173, %v260
    %v1225 = vmul.f32 %v1173, %v261
    %v1226 = vmul.f32 %v1177, %v260
    %v1227 = vmul.f32 %v1177, %v261
    %v1228 = vmul.f32 %v1181, %v260
    %v1229 = vmul.f32 %v1181, %v261
    %v1230 = vadd.f32 %v986, %v1198
    %v1231 = vadd.f32 %v987, %v1199
    %v1232 = vadd.f32 %v988, %v1200
    %v1233 = vadd.f32 %v989, %v1201
    %v1234 = vadd.f32 %v990, %v1202
    %v1235 = vadd.f32 %v991, %v1203
    %v1236 = vadd.f32 %v992, %v1204
    %v1237 = vadd.f32 %v993, %v1205
    %v1238 = vadd.f32 %v994, %v1206
    %v1239 = vadd.f32 %v995, %v1207
    %v1240 = vadd.f32 %v996, %v1208
    %v1241 = vadd.f32 %v997, %v1209
    %v1242 = vadd.f32 %v998, %v1210
    %v1243 = vadd.f32 %v999, %v1211
    %v1244 = vadd.f32 %v1000, %v1212
    %v1245 = vadd.f32 %v1001, %v1213
    %v1246 = vadd.f32 %v1002, %v1214
    %v1247 = vadd.f32 %v1003, %v1215
    %v1248 = vadd.f32 %v1004, %v1216
    %v1249 = vadd.f32 %v1005, %v1217
    %v1250 = vadd.f32 %v1006, %v1218
    %v1251 = vadd.f32 %v1007, %v1219
    %v1252 = vadd.f32 %v1008, %v1220
    %v1253 = vadd.f32 %v1009, %v1221
    %v1254 = vadd.f32 %v1010, %v1222
    %v1255 = vadd.f32 %v1011, %v1223
    %v1256 = vadd.f32 %v1012, %v1224
    %v1257 = vadd.f32 %v1013, %v1225
    %v1258 = vadd.f32 %v1014, %v1226
    %v1259 = vadd.f32 %v1015, %v1227
    %v1260 = vadd.f32 %v1016, %v1228
    %v1261 = vadd.f32 %v1017, %v1229
    %v1264 = vcombine.high %v48, %v48
    %v1266 = vunpack.c.l.s4 1966171168
    %v1267 = vunpack.c.0.s8 %v1266
    %v1268 = vlaneseq
    %v1269 = vshrl.u32 %v1268, 7
    %v1270 = vsub.s32 %v1267, %v1269
    %v1271 = vrot.slane %v48, %v1270
    %v1273 = vunpack.c.l.s4 1966171168
    %v1274 = vunpack.c.0.s8 %v1273
    %v1275 = vlaneseq
    %v1276 = vshrl.u32 %v1275, 7
    %v1277 = vsub.s32 %v1274, %v1276
    %v1278 = vrot.slane %v1264, %v1277
    %v1279 = vcombine.high %v1271, %v1271
    %v1280 = vcombine.high %v1278, %v1278
    %v1282 = vunpack.c.l.s4 1966171168
    %v1283 = vunpack.c.0.s8 %v1282
    %v1284 = vlaneseq
    %v1285 = vshrl.u32 %v1284, 7
    %v1286 = vsub.s32 %v1283, %v1285
    %v1287 = vrot.slane %v1271, %v1286
    %v1289 = vunpack.c.l.s4 1966171168
    %v1290 = vunpack.c.0.s8 %v1289
    %v1291 = vlaneseq
    %v1292 = vshrl.u32 %v1291, 7
    %v1293 = vsub.s32 %v1290, %v1292
    %v1294 = vrot.slane %v1278, %v1293
    %v1296 = vunpack.c.l.s4 1966171168
    %v1297 = vunpack.c.0.s8 %v1296
    %v1298 = vlaneseq
    %v1299 = vshrl.u32 %v1298, 7
    %v1300 = vsub.s32 %v1297, %v1299
    %v1301 = vrot.slane %v1279, %v1300
    %v1303 = vunpack.c.l.s4 1966171168
    %v1304 = vunpack.c.0.s8 %v1303
    %v1305 = vlaneseq
    %v1306 = vshrl.u32 %v1305, 7
    %v1307 = vsub.s32 %v1304, %v1306
    %v1308 = vrot.slane %v1280, %v1307
    %v1309 = vcombine.high %v1287, %v1287
    %v1310 = vcombine.high %v1294, %v1294
    %v1311 = vcombine.high %v1301, %v1301
    %v1312 = vcombine.high %v1308, %v1308
    %v1313 = vcombine.high %v49, %v49
    %v1315 = vunpack.c.l.s4 1966171168
    %v1316 = vunpack.c.0.s8 %v1315
    %v1317 = vlaneseq
    %v1318 = vshrl.u32 %v1317, 7
    %v1319 = vsub.s32 %v1316, %v1318
    %v1320 = vrot.slane %v49, %v1319
    %v1322 = vunpack.c.l.s4 1966171168
    %v1323 = vunpack.c.0.s8 %v1322
    %v1324 = vlaneseq
    %v1325 = vshrl.u32 %v1324, 7
    %v1326 = vsub.s32 %v1323, %v1325
    %v1327 = vrot.slane %v1313, %v1326
    %v1328 = vcombine.high %v1320, %v1320
    %v1329 = vcombine.high %v1327, %v1327
    %v1331 = vunpack.c.l.s4 1966171168
    %v1332 = vunpack.c.0.s8 %v1331
    %v1333 = vlaneseq
    %v1334 = vshrl.u32 %v1333, 7
    %v1335 = vsub.s32 %v1332, %v1334
    %v1336 = vrot.slane %v1320, %v1335
    %v1338 = vunpack.c.l.s4 1966171168
    %v1339 = vunpack.c.0.s8 %v1338
    %v1340 = vlaneseq
    %v1341 = vshrl.u32 %v1340, 7
    %v1342 = vsub.s32 %v1339, %v1341
    %v1343 = vrot.slane %v1327, %v1342
    %v1345 = vunpack.c.l.s4 1966171168
    %v1346 = vunpack.c.0.s8 %v1345
    %v1347 = vlaneseq
    %v1348 = vshrl.u32 %v1347, 7
    %v1349 = vsub.s32 %v1346, %v1348
    %v1350 = vrot.slane %v1328, %v1349
    %v1352 = vunpack.c.l.s4 1966171168
    %v1353 = vunpack.c.0.s8 %v1352
    %v1354 = vlaneseq
    %v1355 = vshrl.u32 %v1354, 7
    %v1356 = vsub.s32 %v1353, %v1355
    %v1357 = vrot.slane %v1329, %v1356
    %v1358 = vcombine.high %v1336, %v1336
    %v1359 = vcombine.high %v1343, %v1343
    %v1360 = vcombine.high %v1350, %v1350
    %v1361 = vcombine.high %v1357, %v1357
    %v1362 = vlaneseq
    %v1363 = vshrl.u32 %v1362, 7
    %v1364 = vsub.s32 0, %v1363
    %v1365 = vrot.slane %v1287, %v1364
    %v1366 = vlaneseq
    %v1367 = vshrl.u32 %v1366, 7
    %v1368 = vsub.s32 0, %v1367
    %v1369 = vrot.slane %v1301, %v1368
    %v1370 = vlaneseq
    %v1371 = vshrl.u32 %v1370, 7
    %v1372 = vsub.s32 0, %v1371
    %v1373 = vrot.slane %v1309, %v1372
    %v1374 = vlaneseq
    %v1375 = vshrl.u32 %v1374, 7
    %v1376 = vsub.s32 0, %v1375
    %v1377 = vrot.slane %v1311, %v1376
    %v1378 = vlaneseq
    %v1379 = vshrl.u32 %v1378, 7
    %v1380 = vsub.s32 0, %v1379
    %v1381 = vrot.slane %v1294, %v1380
    %v1382 = vlaneseq
    %v1383 = vshrl.u32 %v1382, 7
    %v1384 = vsub.s32 0, %v1383
    %v1385 = vrot.slane %v1308, %v1384
    %v1386 = vlaneseq
    %v1387 = vshrl.u32 %v1386, 7
    %v1388 = vsub.s32 0, %v1387
    %v1389 = vrot.slane %v1310, %v1388
    %v1390 = vlaneseq
    %v1391 = vshrl.u32 %v1390, 7
    %v1392 = vsub.s32 0, %v1391
    %v1393 = vrot.slane %v1312, %v1392
    %v1394 = vlaneseq
    %v1395 = vshrl.u32 %v1394, 7
    %v1396 = vsub.s32 0, %v1395
    %v1397 = vrot.slane %v1336, %v1396
    %v1398 = vlaneseq
    %v1399 = vshrl.u32 %v1398, 7
    %v1400 = vsub.s32 0, %v1399
    %v1401 = vrot.slane %v1350, %v1400
    %v1402 = vlaneseq
    %v1403 = vshrl.u32 %v1402, 7
    %v1404 = vsub.s32 0, %v1403
    %v1405 = vrot.slane %v1358, %v1404
    %v1406 = vlaneseq
    %v1407 = vshrl.u32 %v1406, 7
    %v1408 = vsub.s32 0, %v1407
    %v1409 = vrot.slane %v1360, %v1408
    %v1410 = vlaneseq
    %v1411 = vshrl.u32 %v1410, 7
    %v1412 = vsub.s32 0, %v1411
    %v1413 = vrot.slane %v1343, %v1412
    %v1414 = vlaneseq
    %v1415 = vshrl.u32 %v1414, 7
    %v1416 = vsub.s32 0, %v1415
    %v1417 = vrot.slane %v1357, %v1416
    %v1418 = vlaneseq
    %v1419 = vshrl.u32 %v1418, 7
    %v1420 = vsub.s32 0, %v1419
    %v1421 = vrot.slane %v1359, %v1420
    %v1422 = vlaneseq
    %v1423 = vshrl.u32 %v1422, 7
    %v1424 = vsub.s32 0, %v1423
    %v1425 = vrot.slane %v1361, %v1424
    %v1442 = vmul.f32 %v1365, %v262
    %v1443 = vmul.f32 %v1365, %v263
    %v1444 = vmul.f32 %v1369, %v262
    %v1445 = vmul.f32 %v1369, %v263
    %v1446 = vmul.f32 %v1373, %v262
    %v1447 = vmul.f32 %v1373, %v263
    %v1448 = vmul.f32 %v1377, %v262
    %v1449 = vmul.f32 %v1377, %v263
    %v1450 = vmul.f32 %v1381, %v262
    %v1451 = vmul.f32 %v1381, %v263
    %v1452 = vmul.f32 %v1385, %v262
    %v1453 = vmul.f32 %v1385, %v263
    %v1454 = vmul.f32 %v1389, %v262
    %v1455 = vmul.f32 %v1389, %v263
    %v1456 = vmul.f32 %v1393, %v262
    %v1457 = vmul.f32 %v1393, %v263
    %v1458 = vmul.f32 %v1397, %v262
    %v1459 = vmul.f32 %v1397, %v263
    %v1460 = vmul.f32 %v1401, %v262
    %v1461 = vmul.f32 %v1401, %v263
    %v1462 = vmul.f32 %v1405, %v262
    %v1463 = vmul.f32 %v1405, %v263
    %v1464 = vmul.f32 %v1409, %v262
    %v1465 = vmul.f32 %v1409, %v263
    %v1466 = vmul.f32 %v1413, %v262
    %v1467 = vmul.f32 %v1413, %v263
    %v1468 = vmul.f32 %v1417, %v262
    %v1469 = vmul.f32 %v1417, %v263
    %v1470 = vmul.f32 %v1421, %v262
    %v1471 = vmul.f32 %v1421, %v263
    %v1472 = vmul.f32 %v1425, %v262
    %v1473 = vmul.f32 %v1425, %v263
    %v1474 = vadd.f32 %v1230, %v1442
    %v1475 = vadd.f32 %v1231, %v1443
    %v1476 = vadd.f32 %v1232, %v1444
    %v1477 = vadd.f32 %v1233, %v1445
    %v1478 = vadd.f32 %v1234, %v1446
    %v1479 = vadd.f32 %v1235, %v1447
    %v1480 = vadd.f32 %v1236, %v1448
    %v1481 = vadd.f32 %v1237, %v1449
    %v1482 = vadd.f32 %v1238, %v1450
    %v1483 = vadd.f32 %v1239, %v1451
    %v1484 = vadd.f32 %v1240, %v1452
    %v1485 = vadd.f32 %v1241, %v1453
    %v1486 = vadd.f32 %v1242, %v1454
    %v1487 = vadd.f32 %v1243, %v1455
    %v1488 = vadd.f32 %v1244, %v1456
    %v1489 = vadd.f32 %v1245, %v1457
    %v1490 = vadd.f32 %v1246, %v1458
    %v1491 = vadd.f32 %v1247, %v1459
    %v1492 = vadd.f32 %v1248, %v1460
    %v1493 = vadd.f32 %v1249, %v1461
    %v1494 = vadd.f32 %v1250, %v1462
    %v1495 = vadd.f32 %v1251, %v1463
    %v1496 = vadd.f32 %v1252, %v1464
    %v1497 = vadd.f32 %v1253, %v1465
    %v1498 = vadd.f32 %v1254, %v1466
    %v1499 = vadd.f32 %v1255, %v1467
    %v1500 = vadd.f32 %v1256, %v1468
    %v1501 = vadd.f32 %v1257, %v1469
    %v1502 = vadd.f32 %v1258, %v1470
    %v1503 = vadd.f32 %v1259, %v1471
    %v1504 = vadd.f32 %v1260, %v1472
    %v1505 = vadd.f32 %v1261, %v1473
    %v1508 = vcombine.high %v50, %v50
    %v1510 = vunpack.c.l.s4 1966171168
    %v1511 = vunpack.c.0.s8 %v1510
    %v1512 = vlaneseq
    %v1513 = vshrl.u32 %v1512, 7
    %v1514 = vsub.s32 %v1511, %v1513
    %v1515 = vrot.slane %v50, %v1514
    %v1517 = vunpack.c.l.s4 1966171168
    %v1518 = vunpack.c.0.s8 %v1517
    %v1519 = vlaneseq
    %v1520 = vshrl.u32 %v1519, 7
    %v1521 = vsub.s32 %v1518, %v1520
    %v1522 = vrot.slane %v1508, %v1521
    %v1523 = vcombine.high %v1515, %v1515
    %v1524 = vcombine.high %v1522, %v1522
    %v1526 = vunpack.c.l.s4 1966171168
    %v1527 = vunpack.c.0.s8 %v1526
    %v1528 = vlaneseq
    %v1529 = vshrl.u32 %v1528, 7
    %v1530 = vsub.s32 %v1527, %v1529
    %v1531 = vrot.slane %v1515, %v1530
    %v1533 = vunpack.c.l.s4 1966171168
    %v1534 = vunpack.c.0.s8 %v1533
    %v1535 = vlaneseq
    %v1536 = vshrl.u32 %v1535, 7
    %v1537 = vsub.s32 %v1534, %v1536
    %v1538 = vrot.slane %v1522, %v1537
    %v1540 = vunpack.c.l.s4 1966171168
    %v1541 = vunpack.c.0.s8 %v1540
    %v1542 = vlaneseq
    %v1543 = vshrl.u32 %v1542, 7
    %v1544 = vsub.s32 %v1541, %v1543
    %v1545 = vrot.slane %v1523, %v1544
    %v1547 = vunpack.c.l.s4 1966171168
    %v1548 = vunpack.c.0.s8 %v1547
    %v1549 = vlaneseq
    %v1550 = vshrl.u32 %v1549, 7
    %v1551 = vsub.s32 %v1548, %v1550
    %v1552 = vrot.slane %v1524, %v1551
    %v1553 = vcombine.high %v1531, %v1531
    %v1554 = vcombine.high %v1538, %v1538
    %v1555 = vcombine.high %v1545, %v1545
    %v1556 = vcombine.high %v1552, %v1552
    %v1557 = vcombine.high %v51, %v51
    %v1559 = vunpack.c.l.s4 1966171168
    %v1560 = vunpack.c.0.s8 %v1559
    %v1561 = vlaneseq
    %v1562 = vshrl.u32 %v1561, 7
    %v1563 = vsub.s32 %v1560, %v1562
    %v1564 = vrot.slane %v51, %v1563
    %v1566 = vunpack.c.l.s4 1966171168
    %v1567 = vunpack.c.0.s8 %v1566
    %v1568 = vlaneseq
    %v1569 = vshrl.u32 %v1568, 7
    %v1570 = vsub.s32 %v1567, %v1569
    %v1571 = vrot.slane %v1557, %v1570
    %v1572 = vcombine.high %v1564, %v1564
    %v1573 = vcombine.high %v1571, %v1571
    %v1575 = vunpack.c.l.s4 1966171168
    %v1576 = vunpack.c.0.s8 %v1575
    %v1577 = vlaneseq
    %v1578 = vshrl.u32 %v1577, 7
    %v1579 = vsub.s32 %v1576, %v1578
    %v1580 = vrot.slane %v1564, %v1579
    %v1582 = vunpack.c.l.s4 1966171168
    %v1583 = vunpack.c.0.s8 %v1582
    %v1584 = vlaneseq
    %v1585 = vshrl.u32 %v1584, 7
    %v1586 = vsub.s32 %v1583, %v1585
    %v1587 = vrot.slane %v1571, %v1586
    %v1589 = vunpack.c.l.s4 1966171168
    %v1590 = vunpack.c.0.s8 %v1589
    %v1591 = vlaneseq
    %v1592 = vshrl.u32 %v1591, 7
    %v1593 = vsub.s32 %v1590, %v1592
    %v1594 = vrot.slane %v1572, %v1593
    %v1596 = vunpack.c.l.s4 1966171168
    %v1597 = vunpack.c.0.s8 %v1596
    %v1598 = vlaneseq
    %v1599 = vshrl.u32 %v1598, 7
    %v1600 = vsub.s32 %v1597, %v1599
    %v1601 = vrot.slane %v1573, %v1600
    %v1602 = vcombine.high %v1580, %v1580
    %v1603 = vcombine.high %v1587, %v1587
    %v1604 = vcombine.high %v1594, %v1594
    %v1605 = vcombine.high %v1601, %v1601
    %v1606 = vlaneseq
    %v1607 = vshrl.u32 %v1606, 7
    %v1608 = vsub.s32 0, %v1607
    %v1609 = vrot.slane %v1531, %v1608
    %v1610 = vlaneseq
    %v1611 = vshrl.u32 %v1610, 7
    %v1612 = vsub.s32 0, %v1611
    %v1613 = vrot.slane %v1545, %v1612
    %v1614 = vlaneseq
    %v1615 = vshrl.u32 %v1614, 7
    %v1616 = vsub.s32 0, %v1615
    %v1617 = vrot.slane %v1553, %v1616
    %v1618 = vlaneseq
    %v1619 = vshrl.u32 %v1618, 7
    %v1620 = vsub.s32 0, %v1619
    %v1621 = vrot.slane %v1555, %v1620
    %v1622 = vlaneseq
    %v1623 = vshrl.u32 %v1622, 7
    %v1624 = vsub.s32 0, %v1623
    %v1625 = vrot.slane %v1538, %v1624
    %v1626 = vlaneseq
    %v1627 = vshrl.u32 %v1626, 7
    %v1628 = vsub.s32 0, %v1627
    %v1629 = vrot.slane %v1552, %v1628
    %v1630 = vlaneseq
    %v1631 = vshrl.u32 %v1630, 7
    %v1632 = vsub.s32 0, %v1631
    %v1633 = vrot.slane %v1554, %v1632
    %v1634 = vlaneseq
    %v1635 = vshrl.u32 %v1634, 7
    %v1636 = vsub.s32 0, %v1635
    %v1637 = vrot.slane %v1556, %v1636
    %v1638 = vlaneseq
    %v1639 = vshrl.u32 %v1638, 7
    %v1640 = vsub.s32 0, %v1639
    %v1641 = vrot.slane %v1580, %v1640
    %v1642 = vlaneseq
    %v1643 = vshrl.u32 %v1642, 7
    %v1644 = vsub.s32 0, %v1643
    %v1645 = vrot.slane %v1594, %v1644
    %v1646 = vlaneseq
    %v1647 = vshrl.u32 %v1646, 7
    %v1648 = vsub.s32 0, %v1647
    %v1649 = vrot.slane %v1602, %v1648
    %v1650 = vlaneseq
    %v1651 = vshrl.u32 %v1650, 7
    %v1652 = vsub.s32 0, %v1651
    %v1653 = vrot.slane %v1604, %v1652
    %v1654 = vlaneseq
    %v1655 = vshrl.u32 %v1654, 7
    %v1656 = vsub.s32 0, %v1655
    %v1657 = vrot.slane %v1587, %v1656
    %v1658 = vlaneseq
    %v1659 = vshrl.u32 %v1658, 7
    %v1660 = vsub.s32 0, %v1659
    %v1661 = vrot.slane %v1601, %v1660
    %v1662 = vlaneseq
    %v1663 = vshrl.u32 %v1662, 7
    %v1664 = vsub.s32 0, %v1663
    %v1665 = vrot.slane %v1603, %v1664
    %v1666 = vlaneseq
    %v1667 = vshrl.u32 %v1666, 7
    %v1668 = vsub.s32 0, %v1667
    %v1669 = vrot.slane %v1605, %v1668
    %v1686 = vmul.f32 %v1609, %v264
    %v1687 = vmul.f32 %v1609, %v265
    %v1688 = vmul.f32 %v1613, %v264
    %v1689 = vmul.f32 %v1613, %v265
    %v1690 = vmul.f32 %v1617, %v264
    %v1691 = vmul.f32 %v1617, %v265
    %v1692 = vmul.f32 %v1621, %v264
    %v1693 = vmul.f32 %v1621, %v265
    %v1694 = vmul.f32 %v1625, %v264
    %v1695 = vmul.f32 %v1625, %v265
    %v1696 = vmul.f32 %v1629, %v264
    %v1697 = vmul.f32 %v1629, %v265
    %v1698 = vmul.f32 %v1633, %v264
    %v1699 = vmul.f32 %v1633, %v265
    %v1700 = vmul.f32 %v1637, %v264
    %v1701 = vmul.f32 %v1637, %v265
    %v1702 = vmul.f32 %v1641, %v264
    %v1703 = vmul.f32 %v1641, %v265
    %v1704 = vmul.f32 %v1645, %v264
    %v1705 = vmul.f32 %v1645, %v265
    %v1706 = vmul.f32 %v1649, %v264
    %v1707 = vmul.f32 %v1649, %v265
    %v1708 = vmul.f32 %v1653, %v264
    %v1709 = vmul.f32 %v1653, %v265
    %v1710 = vmul.f32 %v1657, %v264
    %v1711 = vmul.f32 %v1657, %v265
    %v1712 = vmul.f32 %v1661, %v264
    %v1713 = vmul.f32 %v1661, %v265
    %v1714 = vmul.f32 %v1665, %v264
    %v1715 = vmul.f32 %v1665, %v265
    %v1716 = vmul.f32 %v1669, %v264
    %v1717 = vmul.f32 %v1669, %v265
    %v1718 = vadd.f32 %v1474, %v1686
    %v1719 = vadd.f32 %v1475, %v1687
    %v1720 = vadd.f32 %v1476, %v1688
    %v1721 = vadd.f32 %v1477, %v1689
    %v1722 = vadd.f32 %v1478, %v1690
    %v1723 = vadd.f32 %v1479, %v1691
    %v1724 = vadd.f32 %v1480, %v1692
    %v1725 = vadd.f32 %v1481, %v1693
    %v1726 = vadd.f32 %v1482, %v1694
    %v1727 = vadd.f32 %v1483, %v1695
    %v1728 = vadd.f32 %v1484, %v1696
    %v1729 = vadd.f32 %v1485, %v1697
    %v1730 = vadd.f32 %v1486, %v1698
    %v1731 = vadd.f32 %v1487, %v1699
    %v1732 = vadd.f32 %v1488, %v1700
    %v1733 = vadd.f32 %v1489, %v1701
    %v1734 = vadd.f32 %v1490, %v1702
    %v1735 = vadd.f32 %v1491, %v1703
    %v1736 = vadd.f32 %v1492, %v1704
    %v1737 = vadd.f32 %v1493, %v1705
    %v1738 = vadd.f32 %v1494, %v1706
    %v1739 = vadd.f32 %v1495, %v1707
    %v1740 = vadd.f32 %v1496, %v1708
    %v1741 = vadd.f32 %v1497, %v1709
    %v1742 = vadd.f32 %v1498, %v1710
    %v1743 = vadd.f32 %v1499, %v1711
    %v1744 = vadd.f32 %v1500, %v1712
    %v1745 = vadd.f32 %v1501, %v1713
    %v1746 = vadd.f32 %v1502, %v1714
    %v1747 = vadd.f32 %v1503, %v1715
    %v1748 = vadd.f32 %v1504, %v1716
    %v1749 = vadd.f32 %v1505, %v1717
    %v1752 = vcombine.high %v52, %v52
    %v1754 = vunpack.c.l.s4 1966171168
    %v1755 = vunpack.c.0.s8 %v1754
    %v1756 = vlaneseq
    %v1757 = vshrl.u32 %v1756, 7
    %v1758 = vsub.s32 %v1755, %v1757
    %v1759 = vrot.slane %v52, %v1758
    %v1761 = vunpack.c.l.s4 1966171168
    %v1762 = vunpack.c.0.s8 %v1761
    %v1763 = vlaneseq
    %v1764 = vshrl.u32 %v1763, 7
    %v1765 = vsub.s32 %v1762, %v1764
    %v1766 = vrot.slane %v1752, %v1765
    %v1767 = vcombine.high %v1759, %v1759
    %v1768 = vcombine.high %v1766, %v1766
    %v1770 = vunpack.c.l.s4 1966171168
    %v1771 = vunpack.c.0.s8 %v1770
    %v1772 = vlaneseq
    %v1773 = vshrl.u32 %v1772, 7
    %v1774 = vsub.s32 %v1771, %v1773
    %v1775 = vrot.slane %v1759, %v1774
    %v1777 = vunpack.c.l.s4 1966171168
    %v1778 = vunpack.c.0.s8 %v1777
    %v1779 = vlaneseq
    %v1780 = vshrl.u32 %v1779, 7
    %v1781 = vsub.s32 %v1778, %v1780
    %v1782 = vrot.slane %v1766, %v1781
    %v1784 = vunpack.c.l.s4 1966171168
    %v1785 = vunpack.c.0.s8 %v1784
    %v1786 = vlaneseq
    %v1787 = vshrl.u32 %v1786, 7
    %v1788 = vsub.s32 %v1785, %v1787
    %v1789 = vrot.slane %v1767, %v1788
    %v1791 = vunpack.c.l.s4 1966171168
    %v1792 = vunpack.c.0.s8 %v1791
    %v1793 = vlaneseq
    %v1794 = vshrl.u32 %v1793, 7
    %v1795 = vsub.s32 %v1792, %v1794
    %v1796 = vrot.slane %v1768, %v1795
    %v1797 = vcombine.high %v1775, %v1775
    %v1798 = vcombine.high %v1782, %v1782
    %v1799 = vcombine.high %v1789, %v1789
    %v1800 = vcombine.high %v1796, %v1796
    %v1801 = vcombine.high %v53, %v53
    %v1803 = vunpack.c.l.s4 1966171168
    %v1804 = vunpack.c.0.s8 %v1803
    %v1805 = vlaneseq
    %v1806 = vshrl.u32 %v1805, 7
    %v1807 = vsub.s32 %v1804, %v1806
    %v1808 = vrot.slane %v53, %v1807
    %v1810 = vunpack.c.l.s4 1966171168
    %v1811 = vunpack.c.0.s8 %v1810
    %v1812 = vlaneseq
    %v1813 = vshrl.u32 %v1812, 7
    %v1814 = vsub.s32 %v1811, %v1813
    %v1815 = vrot.slane %v1801, %v1814
    %v1816 = vcombine.high %v1808, %v1808
    %v1817 = vcombine.high %v1815, %v1815
    %v1819 = vunpack.c.l.s4 1966171168
    %v1820 = vunpack.c.0.s8 %v1819
    %v1821 = vlaneseq
    %v1822 = vshrl.u32 %v1821, 7
    %v1823 = vsub.s32 %v1820, %v1822
    %v1824 = vrot.slane %v1808, %v1823
    %v1826 = vunpack.c.l.s4 1966171168
    %v1827 = vunpack.c.0.s8 %v1826
    %v1828 = vlaneseq
    %v1829 = vshrl.u32 %v1828, 7
    %v1830 = vsub.s32 %v1827, %v1829
    %v1831 = vrot.slane %v1815, %v1830
    %v1833 = vunpack.c.l.s4 1966171168
    %v1834 = vunpack.c.0.s8 %v1833
    %v1835 = vlaneseq
    %v1836 = vshrl.u32 %v1835, 7
    %v1837 = vsub.s32 %v1834, %v1836
    %v1838 = vrot.slane %v1816, %v1837
    %v1840 = vunpack.c.l.s4 1966171168
    %v1841 = vunpack.c.0.s8 %v1840
    %v1842 = vlaneseq
    %v1843 = vshrl.u32 %v1842, 7
    %v1844 = vsub.s32 %v1841, %v1843
    %v1845 = vrot.slane %v1817, %v1844
    %v1846 = vcombine.high %v1824, %v1824
    %v1847 = vcombine.high %v1831, %v1831
    %v1848 = vcombine.high %v1838, %v1838
    %v1849 = vcombine.high %v1845, %v1845
    %v1850 = vlaneseq
    %v1851 = vshrl.u32 %v1850, 7
    %v1852 = vsub.s32 0, %v1851
    %v1853 = vrot.slane %v1775, %v1852
    %v1854 = vlaneseq
    %v1855 = vshrl.u32 %v1854, 7
    %v1856 = vsub.s32 0, %v1855
    %v1857 = vrot.slane %v1789, %v1856
    %v1858 = vlaneseq
    %v1859 = vshrl.u32 %v1858, 7
    %v1860 = vsub.s32 0, %v1859
    %v1861 = vrot.slane %v1797, %v1860
    %v1862 = vlaneseq
    %v1863 = vshrl.u32 %v1862, 7
    %v1864 = vsub.s32 0, %v1863
    %v1865 = vrot.slane %v1799, %v1864
    %v1866 = vlaneseq
    %v1867 = vshrl.u32 %v1866, 7
    %v1868 = vsub.s32 0, %v1867
    %v1869 = vrot.slane %v1782, %v1868
    %v1870 = vlaneseq
    %v1871 = vshrl.u32 %v1870, 7
    %v1872 = vsub.s32 0, %v1871
    %v1873 = vrot.slane %v1796, %v1872
    %v1874 = vlaneseq
    %v1875 = vshrl.u32 %v1874, 7
    %v1876 = vsub.s32 0, %v1875
    %v1877 = vrot.slane %v1798, %v1876
    %v1878 = vlaneseq
    %v1879 = vshrl.u32 %v1878, 7
    %v1880 = vsub.s32 0, %v1879
    %v1881 = vrot.slane %v1800, %v1880
    %v1882 = vlaneseq
    %v1883 = vshrl.u32 %v1882, 7
    %v1884 = vsub.s32 0, %v1883
    %v1885 = vrot.slane %v1824, %v1884
    %v1886 = vlaneseq
    %v1887 = vshrl.u32 %v1886, 7
    %v1888 = vsub.s32 0, %v1887
    %v1889 = vrot.slane %v1838, %v1888
    %v1890 = vlaneseq
    %v1891 = vshrl.u32 %v1890, 7
    %v1892 = vsub.s32 0, %v1891
    %v1893 = vrot.slane %v1846, %v1892
    %v1894 = vlaneseq
    %v1895 = vshrl.u32 %v1894, 7
    %v1896 = vsub.s32 0, %v1895
    %v1897 = vrot.slane %v1848, %v1896
    %v1898 = vlaneseq
    %v1899 = vshrl.u32 %v1898, 7
    %v1900 = vsub.s32 0, %v1899
    %v1901 = vrot.slane %v1831, %v1900
    %v1902 = vlaneseq
    %v1903 = vshrl.u32 %v1902, 7
    %v1904 = vsub.s32 0, %v1903
    %v1905 = vrot.slane %v1845, %v1904
    %v1906 = vlaneseq
    %v1907 = vshrl.u32 %v1906, 7
    %v1908 = vsub.s32 0, %v1907
    %v1909 = vrot.slane %v1847, %v1908
    %v1910 = vlaneseq
    %v1911 = vshrl.u32 %v1910, 7
    %v1912 = vsub.s32 0, %v1911
    %v1913 = vrot.slane %v1849, %v1912
    %v1930 = vmul.f32 %v1853, %v266
    %v1931 = vmul.f32 %v1853, %v267
    %v1932 = vmul.f32 %v1857, %v266
    %v1933 = vmul.f32 %v1857, %v267
    %v1934 = vmul.f32 %v1861, %v266
    %v1935 = vmul.f32 %v1861, %v267
    %v1936 = vmul.f32 %v1865, %v266
    %v1937 = vmul.f32 %v1865, %v267
    %v1938 = vmul.f32 %v1869, %v266
    %v1939 = vmul.f32 %v1869, %v267
    %v1940 = vmul.f32 %v1873, %v266
    %v1941 = vmul.f32 %v1873, %v267
    %v1942 = vmul.f32 %v1877, %v266
    %v1943 = vmul.f32 %v1877, %v267
    %v1944 = vmul.f32 %v1881, %v266
    %v1945 = vmul.f32 %v1881, %v267
    %v1946 = vmul.f32 %v1885, %v266
    %v1947 = vmul.f32 %v1885, %v267
    %v1948 = vmul.f32 %v1889, %v266
    %v1949 = vmul.f32 %v1889, %v267
    %v1950 = vmul.f32 %v1893, %v266
    %v1951 = vmul.f32 %v1893, %v267
    %v1952 = vmul.f32 %v1897, %v266
    %v1953 = vmul.f32 %v1897, %v267
    %v1954 = vmul.f32 %v1901, %v266
    %v1955 = vmul.f32 %v1901, %v267
    %v1956 = vmul.f32 %v1905, %v266
    %v1957 = vmul.f32 %v1905, %v267
    %v1958 = vmul.f32 %v1909, %v266
    %v1959 = vmul.f32 %v1909, %v267
    %v1960 = vmul.f32 %v1913, %v266
    %v1961 = vmul.f32 %v1913, %v267
    %v1962 = vadd.f32 %v1718, %v1930
    %v1963 = vadd.f32 %v1719, %v1931
    %v1964 = vadd.f32 %v1720, %v1932
    %v1965 = vadd.f32 %v1721, %v1933
    %v1966 = vadd.f32 %v1722, %v1934
    %v1967 = vadd.f32 %v1723, %v1935
    %v1968 = vadd.f32 %v1724, %v1936
    %v1969 = vadd.f32 %v1725, %v1937
    %v1970 = vadd.f32 %v1726, %v1938
    %v1971 = vadd.f32 %v1727, %v1939
    %v1972 = vadd.f32 %v1728, %v1940
    %v1973 = vadd.f32 %v1729, %v1941
    %v1974 = vadd.f32 %v1730, %v1942
    %v1975 = vadd.f32 %v1731, %v1943
    %v1976 = vadd.f32 %v1732, %v1944
    %v1977 = vadd.f32 %v1733, %v1945
    %v1978 = vadd.f32 %v1734, %v1946
    %v1979 = vadd.f32 %v1735, %v1947
    %v1980 = vadd.f32 %v1736, %v1948
    %v1981 = vadd.f32 %v1737, %v1949
    %v1982 = vadd.f32 %v1738, %v1950
    %v1983 = vadd.f32 %v1739, %v1951
    %v1984 = vadd.f32 %v1740, %v1952
    %v1985 = vadd.f32 %v1741, %v1953
    %v1986 = vadd.f32 %v1742, %v1954
    %v1987 = vadd.f32 %v1743, %v1955
    %v1988 = vadd.f32 %v1744, %v1956
    %v1989 = vadd.f32 %v1745, %v1957
    %v1990 = vadd.f32 %v1746, %v1958
    %v1991 = vadd.f32 %v1747, %v1959
    %v1992 = vadd.f32 %v1748, %v1960
    %v1993 = vadd.f32 %v1749, %v1961
    %v1996 = vcombine.high %v54, %v54
    %v1998 = vunpack.c.l.s4 1966171168
    %v1999 = vunpack.c.0.s8 %v1998
    %v2000 = vlaneseq
    %v2001 = vshrl.u32 %v2000, 7
    %v2002 = vsub.s32 %v1999, %v2001
    %v2003 = vrot.slane %v54, %v2002
    %v2005 = vunpack.c.l.s4 1966171168
    %v2006 = vunpack.c.0.s8 %v2005
    %v2007 = vlaneseq
    %v2008 = vshrl.u32 %v2007, 7
    %v2009 = vsub.s32 %v2006, %v2008
    %v2010 = vrot.slane %v1996, %v2009
    %v2011 = vcombine.high %v2003, %v2003
    %v2012 = vcombine.high %v2010, %v2010
    %v2014 = vunpack.c.l.s4 1966171168
    %v2015 = vunpack.c.0.s8 %v2014
    %v2016 = vlaneseq
    %v2017 = vshrl.u32 %v2016, 7
    %v2018 = vsub.s32 %v2015, %v2017
    %v2019 = vrot.slane %v2003, %v2018
    %v2021 = vunpack.c.l.s4 1966171168
    %v2022 = vunpack.c.0.s8 %v2021
    %v2023 = vlaneseq
    %v2024 = vshrl.u32 %v2023, 7
    %v2025 = vsub.s32 %v2022, %v2024
    %v2026 = vrot.slane %v2010, %v2025
    %v2028 = vunpack.c.l.s4 1966171168
    %v2029 = vunpack.c.0.s8 %v2028
    %v2030 = vlaneseq
    %v2031 = vshrl.u32 %v2030, 7
    %v2032 = vsub.s32 %v2029, %v2031
    %v2033 = vrot.slane %v2011, %v2032
    %v2035 = vunpack.c.l.s4 1966171168
    %v2036 = vunpack.c.0.s8 %v2035
    %v2037 = vlaneseq
    %v2038 = vshrl.u32 %v2037, 7
    %v2039 = vsub.s32 %v2036, %v2038
    %v2040 = vrot.slane %v2012, %v2039
    %v2041 = vcombine.high %v2019, %v2019
    %v2042 = vcombine.high %v2026, %v2026
    %v2043 = vcombine.high %v2033, %v2033
    %v2044 = vcombine.high %v2040, %v2040
    %v2045 = vcombine.high %v55, %v55
    %v2047 = vunpack.c.l.s4 1966171168
    %v2048 = vunpack.c.0.s8 %v2047
    %v2049 = vlaneseq
    %v2050 = vshrl.u32 %v2049, 7
    %v2051 = vsub.s32 %v2048, %v2050
    %v2052 = vrot.slane %v55, %v2051
    %v2054 = vunpack.c.l.s4 1966171168
    %v2055 = vunpack.c.0.s8 %v2054
    %v2056 = vlaneseq
    %v2057 = vshrl.u32 %v2056, 7
    %v2058 = vsub.s32 %v2055, %v2057
    %v2059 = vrot.slane %v2045, %v2058
    %v2060 = vcombine.high %v2052, %v2052
    %v2061 = vcombine.high %v2059, %v2059
    %v2063 = vunpack.c.l.s4 1966171168
    %v2064 = vunpack.c.0.s8 %v2063
    %v2065 = vlaneseq
    %v2066 = vshrl.u32 %v2065, 7
    %v2067 = vsub.s32 %v2064, %v2066
    %v2068 = vrot.slane %v2052, %v2067
    %v2070 = vunpack.c.l.s4 1966171168
    %v2071 = vunpack.c.0.s8 %v2070
    %v2072 = vlaneseq
    %v2073 = vshrl.u32 %v2072, 7
    %v2074 = vsub.s32 %v2071, %v2073
    %v2075 = vrot.slane %v2059, %v2074
    %v2077 = vunpack.c.l.s4 1966171168
    %v2078 = vunpack.c.0.s8 %v2077
    %v2079 = vlaneseq
    %v2080 = vshrl.u32 %v2079, 7
    %v2081 = vsub.s32 %v2078, %v2080
    %v2082 = vrot.slane %v2060, %v2081
    %v2084 = vunpack.c.l.s4 1966171168
    %v2085 = vunpack.c.0.s8 %v2084
    %v2086 = vlaneseq
    %v2087 = vshrl.u32 %v2086, 7
    %v2088 = vsub.s32 %v2085, %v2087
    %v2089 = vrot.slane %v2061, %v2088
    %v2090 = vcombine.high %v2068, %v2068
    %v2091 = vcombine.high %v2075, %v2075
    %v2092 = vcombine.high %v2082, %v2082
    %v2093 = vcombine.high %v2089, %v2089
    %v2094 = vlaneseq
    %v2095 = vshrl.u32 %v2094, 7
    %v2096 = vsub.s32 0, %v2095
    %v2097 = vrot.slane %v2019, %v2096
    %v2098 = vlaneseq
    %v2099 = vshrl.u32 %v2098, 7
    %v2100 = vsub.s32 0, %v2099
    %v2101 = vrot.slane %v2033, %v2100
    %v2102 = vlaneseq
    %v2103 = vshrl.u32 %v2102, 7
    %v2104 = vsub.s32 0, %v2103
    %v2105 = vrot.slane %v2041, %v2104
    %v2106 = vlaneseq
    %v2107 = vshrl.u32 %v2106, 7
    %v2108 = vsub.s32 0, %v2107
    %v2109 = vrot.slane %v2043, %v2108
    %v2110 = vlaneseq
    %v2111 = vshrl.u32 %v2110, 7
    %v2112 = vsub.s32 0, %v2111
    %v2113 = vrot.slane %v2026, %v2112
    %v2114 = vlaneseq
    %v2115 = vshrl.u32 %v2114, 7
    %v2116 = vsub.s32 0, %v2115
    %v2117 = vrot.slane %v2040, %v2116
    %v2118 = vlaneseq
    %v2119 = vshrl.u32 %v2118, 7
    %v2120 = vsub.s32 0, %v2119
    %v2121 = vrot.slane %v2042, %v2120
    %v2122 = vlaneseq
    %v2123 = vshrl.u32 %v2122, 7
    %v2124 = vsub.s32 0, %v2123
    %v2125 = vrot.slane %v2044, %v2124
    %v2126 = vlaneseq
    %v2127 = vshrl.u32 %v2126, 7
    %v2128 = vsub.s32 0, %v2127
    %v2129 = vrot.slane %v2068, %v2128
    %v2130 = vlaneseq
    %v2131 = vshrl.u32 %v2130, 7
    %v2132 = vsub.s32 0, %v2131
    %v2133 = vrot.slane %v2082, %v2132
    %v2134 = vlaneseq
    %v2135 = vshrl.u32 %v2134, 7
    %v2136 = vsub.s32 0, %v2135
    %v2137 = vrot.slane %v2090, %v2136
    %v2138 = vlaneseq
    %v2139 = vshrl.u32 %v2138, 7
    %v2140 = vsub.s32 0, %v2139
    %v2141 = vrot.slane %v2092, %v2140
    %v2142 = vlaneseq
    %v2143 = vshrl.u32 %v2142, 7
    %v2144 = vsub.s32 0, %v2143
    %v2145 = vrot.slane %v2075, %v2144
    %v2146 = vlaneseq
    %v2147 = vshrl.u32 %v2146, 7
    %v2148 = vsub.s32 0, %v2147
    %v2149 = vrot.slane %v2089, %v2148
    %v2150 = vlaneseq
    %v2151 = vshrl.u32 %v2150, 7
    %v2152 = vsub.s32 0, %v2151
    %v2153 = vrot.slane %v2091, %v2152
    %v2154 = vlaneseq
    %v2155 = vshrl.u32 %v2154, 7
    %v2156 = vsub.s32 0, %v2155
    %v2157 = vrot.slane %v2093, %v2156
    %v2174 = vmul.f32 %v2097, %v268
    %v2175 = vmul.f32 %v2097, %v269
    %v2176 = vmul.f32 %v2101, %v268
    %v2177 = vmul.f32 %v2101, %v269
    %v2178 = vmul.f32 %v2105, %v268
    %v2179 = vmul.f32 %v2105, %v269
    %v2180 = vmul.f32 %v2109, %v268
    %v2181 = vmul.f32 %v2109, %v269
    %v2182 = vmul.f32 %v2113, %v268
    %v2183 = vmul.f32 %v2113, %v269
    %v2184 = vmul.f32 %v2117, %v268
    %v2185 = vmul.f32 %v2117, %v269
    %v2186 = vmul.f32 %v2121, %v268
    %v2187 = vmul.f32 %v2121, %v269
    %v2188 = vmul.f32 %v2125, %v268
    %v2189 = vmul.f32 %v2125, %v269
    %v2190 = vmul.f32 %v2129, %v268
    %v2191 = vmul.f32 %v2129, %v269
    %v2192 = vmul.f32 %v2133, %v268
    %v2193 = vmul.f32 %v2133, %v269
    %v2194 = vmul.f32 %v2137, %v268
    %v2195 = vmul.f32 %v2137, %v269
    %v2196 = vmul.f32 %v2141, %v268
    %v2197 = vmul.f32 %v2141, %v269
    %v2198 = vmul.f32 %v2145, %v268
    %v2199 = vmul.f32 %v2145, %v269
    %v2200 = vmul.f32 %v2149, %v268
    %v2201 = vmul.f32 %v2149, %v269
    %v2202 = vmul.f32 %v2153, %v268
    %v2203 = vmul.f32 %v2153, %v269
    %v2204 = vmul.f32 %v2157, %v268
    %v2205 = vmul.f32 %v2157, %v269
    %v2206 = vadd.f32 %v1962, %v2174
    %v2207 = vadd.f32 %v1963, %v2175
    %v2208 = vadd.f32 %v1964, %v2176
    %v2209 = vadd.f32 %v1965, %v2177
    %v2210 = vadd.f32 %v1966, %v2178
    %v2211 = vadd.f32 %v1967, %v2179
    %v2212 = vadd.f32 %v1968, %v2180
    %v2213 = vadd.f32 %v1969, %v2181
    %v2214 = vadd.f32 %v1970, %v2182
    %v2215 = vadd.f32 %v1971, %v2183
    %v2216 = vadd.f32 %v1972, %v2184
    %v2217 = vadd.f32 %v1973, %v2185
    %v2218 = vadd.f32 %v1974, %v2186
    %v2219 = vadd.f32 %v1975, %v2187
    %v2220 = vadd.f32 %v1976, %v2188
    %v2221 = vadd.f32 %v1977, %v2189
    %v2222 = vadd.f32 %v1978, %v2190
    %v2223 = vadd.f32 %v1979, %v2191
    %v2224 = vadd.f32 %v1980, %v2192
    %v2225 = vadd.f32 %v1981, %v2193
    %v2226 = vadd.f32 %v1982, %v2194
    %v2227 = vadd.f32 %v1983, %v2195
    %v2228 = vadd.f32 %v1984, %v2196
    %v2229 = vadd.f32 %v1985, %v2197
    %v2230 = vadd.f32 %v1986, %v2198
    %v2231 = vadd.f32 %v1987, %v2199
    %v2232 = vadd.f32 %v1988, %v2200
    %v2233 = vadd.f32 %v1989, %v2201
    %v2234 = vadd.f32 %v1990, %v2202
    %v2235 = vadd.f32 %v1991, %v2203
    %v2236 = vadd.f32 %v1992, %v2204
    %v2237 = vadd.f32 %v1993, %v2205
    %v2240 = vcombine.high %v56, %v56
    %v2242 = vunpack.c.l.s4 1966171168
    %v2243 = vunpack.c.0.s8 %v2242
    %v2244 = vlaneseq
    %v2245 = vshrl.u32 %v2244, 7
    %v2246 = vsub.s32 %v2243, %v2245
    %v2247 = vrot.slane %v56, %v2246
    %v2249 = vunpack.c.l.s4 1966171168
    %v2250 = vunpack.c.0.s8 %v2249
    %v2251 = vlaneseq
    %v2252 = vshrl.u32 %v2251, 7
    %v2253 = vsub.s32 %v2250, %v2252
    %v2254 = vrot.slane %v2240, %v2253
    %v2255 = vcombine.high %v2247, %v2247
    %v2256 = vcombine.high %v2254, %v2254
    %v2258 = vunpack.c.l.s4 1966171168
    %v2259 = vunpack.c.0.s8 %v2258
    %v2260 = vlaneseq
    %v2261 = vshrl.u32 %v2260, 7
    %v2262 = vsub.s32 %v2259, %v2261
    %v2263 = vrot.slane %v2247, %v2262
    %v2265 = vunpack.c.l.s4 1966171168
    %v2266 = vunpack.c.0.s8 %v2265
    %v2267 = vlaneseq
    %v2268 = vshrl.u32 %v2267, 7
    %v2269 = vsub.s32 %v2266, %v2268
    %v2270 = vrot.slane %v2254, %v2269
    %v2272 = vunpack.c.l.s4 1966171168
    %v2273 = vunpack.c.0.s8 %v2272
    %v2274 = vlaneseq
    %v2275 = vshrl.u32 %v2274, 7
    %v2276 = vsub.s32 %v2273, %v2275
    %v2277 = vrot.slane %v2255, %v2276
    %v2279 = vunpack.c.l.s4 1966171168
    %v2280 = vunpack.c.0.s8 %v2279
    %v2281 = vlaneseq
    %v2282 = vshrl.u32 %v2281, 7
    %v2283 = vsub.s32 %v2280, %v2282
    %v2284 = vrot.slane %v2256, %v2283
    %v2285 = vcombine.high %v2263, %v2263
    %v2286 = vcombine.high %v2270, %v2270
    %v2287 = vcombine.high %v2277, %v2277
    %v2288 = vcombine.high %v2284, %v2284
    %v2289 = vcombine.high %v57, %v57
    %v2291 = vunpack.c.l.s4 1966171168
    %v2292 = vunpack.c.0.s8 %v2291
    %v2293 = vlaneseq
    %v2294 = vshrl.u32 %v2293, 7
    %v2295 = vsub.s32 %v2292, %v2294
    %v2296 = vrot.slane %v57, %v2295
    %v2298 = vunpack.c.l.s4 1966171168
    %v2299 = vunpack.c.0.s8 %v2298
    %v2300 = vlaneseq
    %v2301 = vshrl.u32 %v2300, 7
    %v2302 = vsub.s32 %v2299, %v2301
    %v2303 = vrot.slane %v2289, %v2302
    %v2304 = vcombine.high %v2296, %v2296
    %v2305 = vcombine.high %v2303, %v2303
    %v2307 = vunpack.c.l.s4 1966171168
    %v2308 = vunpack.c.0.s8 %v2307
    %v2309 = vlaneseq
    %v2310 = vshrl.u32 %v2309, 7
    %v2311 = vsub.s32 %v2308, %v2310
    %v2312 = vrot.slane %v2296, %v2311
    %v2314 = vunpack.c.l.s4 1966171168
    %v2315 = vunpack.c.0.s8 %v2314
    %v2316 = vlaneseq
    %v2317 = vshrl.u32 %v2316, 7
    %v2318 = vsub.s32 %v2315, %v2317
    %v2319 = vrot.slane %v2303, %v2318
    %v2321 = vunpack.c.l.s4 1966171168
    %v2322 = vunpack.c.0.s8 %v2321
    %v2323 = vlaneseq
    %v2324 = vshrl.u32 %v2323, 7
    %v2325 = vsub.s32 %v2322, %v2324
    %v2326 = vrot.slane %v2304, %v2325
    %v2328 = vunpack.c.l.s4 1966171168
    %v2329 = vunpack.c.0.s8 %v2328
    %v2330 = vlaneseq
    %v2331 = vshrl.u32 %v2330, 7
    %v2332 = vsub.s32 %v2329, %v2331
    %v2333 = vrot.slane %v2305, %v2332
    %v2334 = vcombine.high %v2312, %v2312
    %v2335 = vcombine.high %v2319, %v2319
    %v2336 = vcombine.high %v2326, %v2326
    %v2337 = vcombine.high %v2333, %v2333
    %v2338 = vlaneseq
    %v2339 = vshrl.u32 %v2338, 7
    %v2340 = vsub.s32 0, %v2339
    %v2341 = vrot.slane %v2263, %v2340
    %v2342 = vlaneseq
    %v2343 = vshrl.u32 %v2342, 7
    %v2344 = vsub.s32 0, %v2343
    %v2345 = vrot.slane %v2277, %v2344
    %v2346 = vlaneseq
    %v2347 = vshrl.u32 %v2346, 7
    %v2348 = vsub.s32 0, %v2347
    %v2349 = vrot.slane %v2285, %v2348
    %v2350 = vlaneseq
    %v2351 = vshrl.u32 %v2350, 7
    %v2352 = vsub.s32 0, %v2351
    %v2353 = vrot.slane %v2287, %v2352
    %v2354 = vlaneseq
    %v2355 = vshrl.u32 %v2354, 7
    %v2356 = vsub.s32 0, %v2355
    %v2357 = vrot.slane %v2270, %v2356
    %v2358 = vlaneseq
    %v2359 = vshrl.u32 %v2358, 7
    %v2360 = vsub.s32 0, %v2359
    %v2361 = vrot.slane %v2284, %v2360
    %v2362 = vlaneseq
    %v2363 = vshrl.u32 %v2362, 7
    %v2364 = vsub.s32 0, %v2363
    %v2365 = vrot.slane %v2286, %v2364
    %v2366 = vlaneseq
    %v2367 = vshrl.u32 %v2366, 7
    %v2368 = vsub.s32 0, %v2367
    %v2369 = vrot.slane %v2288, %v2368
    %v2370 = vlaneseq
    %v2371 = vshrl.u32 %v2370, 7
    %v2372 = vsub.s32 0, %v2371
    %v2373 = vrot.slane %v2312, %v2372
    %v2374 = vlaneseq
    %v2375 = vshrl.u32 %v2374, 7
    %v2376 = vsub.s32 0, %v2375
    %v2377 = vrot.slane %v2326, %v2376
    %v2378 = vlaneseq
    %v2379 = vshrl.u32 %v2378, 7
    %v2380 = vsub.s32 0, %v2379
    %v2381 = vrot.slane %v2334, %v2380
    %v2382 = vlaneseq
    %v2383 = vshrl.u32 %v2382, 7
    %v2384 = vsub.s32 0, %v2383
    %v2385 = vrot.slane %v2336, %v2384
    %v2386 = vlaneseq
    %v2387 = vshrl.u32 %v2386, 7
    %v2388 = vsub.s32 0, %v2387
    %v2389 = vrot.slane %v2319, %v2388
    %v2390 = vlaneseq
    %v2391 = vshrl.u32 %v2390, 7
    %v2392 = vsub.s32 0, %v2391
    %v2393 = vrot.slane %v2333, %v2392
    %v2394 = vlaneseq
    %v2395 = vshrl.u32 %v2394, 7
    %v2396 = vsub.s32 0, %v2395
    %v2397 = vrot.slane %v2335, %v2396
    %v2398 = vlaneseq
    %v2399 = vshrl.u32 %v2398, 7
    %v2400 = vsub.s32 0, %v2399
    %v2401 = vrot.slane %v2337, %v2400
    %v2418 = vmul.f32 %v2341, %v270
    %v2419 = vmul.f32 %v2341, %v271
    %v2420 = vmul.f32 %v2345, %v270
    %v2421 = vmul.f32 %v2345, %v271
    %v2422 = vmul.f32 %v2349, %v270
    %v2423 = vmul.f32 %v2349, %v271
    %v2424 = vmul.f32 %v2353, %v270
    %v2425 = vmul.f32 %v2353, %v271
    %v2426 = vmul.f32 %v2357, %v270
    %v2427 = vmul.f32 %v2357, %v271
    %v2428 = vmul.f32 %v2361, %v270
    %v2429 = vmul.f32 %v2361, %v271
    %v2430 = vmul.f32 %v2365, %v270
    %v2431 = vmul.f32 %v2365, %v271
    %v2432 = vmul.f32 %v2369, %v270
    %v2433 = vmul.f32 %v2369, %v271
    %v2434 = vmul.f32 %v2373, %v270
    %v2435 = vmul.f32 %v2373, %v271
    %v2436 = vmul.f32 %v2377, %v270
    %v2437 = vmul.f32 %v2377, %v271
    %v2438 = vmul.f32 %v2381, %v270
    %v2439 = vmul.f32 %v2381, %v271
    %v2440 = vmul.f32 %v2385, %v270
    %v2441 = vmul.f32 %v2385, %v271
    %v2442 = vmul.f32 %v2389, %v270
    %v2443 = vmul.f32 %v2389, %v271
    %v2444 = vmul.f32 %v2393, %v270
    %v2445 = vmul.f32 %v2393, %v271
    %v2446 = vmul.f32 %v2397, %v270
    %v2447 = vmul.f32 %v2397, %v271
    %v2448 = vmul.f32 %v2401, %v270
    %v2449 = vmul.f32 %v2401, %v271
    %v2450 = vadd.f32 %v2206, %v2418
    %v2451 = vadd.f32 %v2207, %v2419
    %v2452 = vadd.f32 %v2208, %v2420
    %v2453 = vadd.f32 %v2209, %v2421
    %v2454 = vadd.f32 %v2210, %v2422
    %v2455 = vadd.f32 %v2211, %v2423
    %v2456 = vadd.f32 %v2212, %v2424
    %v2457 = vadd.f32 %v2213, %v2425
    %v2458 = vadd.f32 %v2214, %v2426
    %v2459 = vadd.f32 %v2215, %v2427
    %v2460 = vadd.f32 %v2216, %v2428
    %v2461 = vadd.f32 %v2217, %v2429
    %v2462 = vadd.f32 %v2218, %v2430
    %v2463 = vadd.f32 %v2219, %v2431
    %v2464 = vadd.f32 %v2220, %v2432
    %v2465 = vadd.f32 %v2221, %v2433
    %v2466 = vadd.f32 %v2222, %v2434
    %v2467 = vadd.f32 %v2223, %v2435
    %v2468 = vadd.f32 %v2224, %v2436
    %v2469 = vadd.f32 %v2225, %v2437
    %v2470 = vadd.f32 %v2226, %v2438
    %v2471 = vadd.f32 %v2227, %v2439
    %v2472 = vadd.f32 %v2228, %v2440
    %v2473 = vadd.f32 %v2229, %v2441
    %v2474 = vadd.f32 %v2230, %v2442
    %v2475 = vadd.f32 %v2231, %v2443
    %v2476 = vadd.f32 %v2232, %v2444
    %v2477 = vadd.f32 %v2233, %v2445
    %v2478 = vadd.f32 %v2234, %v2446
    %v2479 = vadd.f32 %v2235, %v2447
    %v2480 = vadd.f32 %v2236, %v2448
    %v2481 = vadd.f32 %v2237, %v2449
    %v2484 = vcombine.high %v58, %v58
    %v2486 = vunpack.c.l.s4 1966171168
    %v2487 = vunpack.c.0.s8 %v2486
    %v2488 = vlaneseq
    %v2489 = vshrl.u32 %v2488, 7
    %v2490 = vsub.s32 %v2487, %v2489
    %v2491 = vrot.slane %v58, %v2490
    %v2493 = vunpack.c.l.s4 1966171168
    %v2494 = vunpack.c.0.s8 %v2493
    %v2495 = vlaneseq
    %v2496 = vshrl.u32 %v2495, 7
    %v2497 = vsub.s32 %v2494, %v2496
    %v2498 = vrot.slane %v2484, %v2497
    %v2499 = vcombine.high %v2491, %v2491
    %v2500 = vcombine.high %v2498, %v2498
    %v2502 = vunpack.c.l.s4 1966171168
    %v2503 = vunpack.c.0.s8 %v2502
    %v2504 = vlaneseq
    %v2505 = vshrl.u32 %v2504, 7
    %v2506 = vsub.s32 %v2503, %v2505
    %v2507 = vrot.slane %v2491, %v2506
    %v2509 = vunpack.c.l.s4 1966171168
    %v2510 = vunpack.c.0.s8 %v2509
    %v2511 = vlaneseq
    %v2512 = vshrl.u32 %v2511, 7
    %v2513 = vsub.s32 %v2510, %v2512
    %v2514 = vrot.slane %v2498, %v2513
    %v2516 = vunpack.c.l.s4 1966171168
    %v2517 = vunpack.c.0.s8 %v2516
    %v2518 = vlaneseq
    %v2519 = vshrl.u32 %v2518, 7
    %v2520 = vsub.s32 %v2517, %v2519
    %v2521 = vrot.slane %v2499, %v2520
    %v2523 = vunpack.c.l.s4 1966171168
    %v2524 = vunpack.c.0.s8 %v2523
    %v2525 = vlaneseq
    %v2526 = vshrl.u32 %v2525, 7
    %v2527 = vsub.s32 %v2524, %v2526
    %v2528 = vrot.slane %v2500, %v2527
    %v2529 = vcombine.high %v2507, %v2507
    %v2530 = vcombine.high %v2514, %v2514
    %v2531 = vcombine.high %v2521, %v2521
    %v2532 = vcombine.high %v2528, %v2528
    %v2533 = vcombine.high %v59, %v59
    %v2535 = vunpack.c.l.s4 1966171168
    %v2536 = vunpack.c.0.s8 %v2535
    %v2537 = vlaneseq
    %v2538 = vshrl.u32 %v2537, 7
    %v2539 = vsub.s32 %v2536, %v2538
    %v2540 = vrot.slane %v59, %v2539
    %v2542 = vunpack.c.l.s4 1966171168
    %v2543 = vunpack.c.0.s8 %v2542
    %v2544 = vlaneseq
    %v2545 = vshrl.u32 %v2544, 7
    %v2546 = vsub.s32 %v2543, %v2545
    %v2547 = vrot.slane %v2533, %v2546
    %v2548 = vcombine.high %v2540, %v2540
    %v2549 = vcombine.high %v2547, %v2547
    %v2551 = vunpack.c.l.s4 1966171168
    %v2552 = vunpack.c.0.s8 %v2551
    %v2553 = vlaneseq
    %v2554 = vshrl.u32 %v2553, 7
    %v2555 = vsub.s32 %v2552, %v2554
    %v2556 = vrot.slane %v2540, %v2555
    %v2558 = vunpack.c.l.s4 1966171168
    %v2559 = vunpack.c.0.s8 %v2558
    %v2560 = vlaneseq
    %v2561 = vshrl.u32 %v2560, 7
    %v2562 = vsub.s32 %v2559, %v2561
    %v2563 = vrot.slane %v2547, %v2562
    %v2565 = vunpack.c.l.s4 1966171168
    %v2566 = vunpack.c.0.s8 %v2565
    %v2567 = vlaneseq
    %v2568 = vshrl.u32 %v2567, 7
    %v2569 = vsub.s32 %v2566, %v2568
    %v2570 = vrot.slane %v2548, %v2569
    %v2572 = vunpack.c.l.s4 1966171168
    %v2573 = vunpack.c.0.s8 %v2572
    %v2574 = vlaneseq
    %v2575 = vshrl.u32 %v2574, 7
    %v2576 = vsub.s32 %v2573, %v2575
    %v2577 = vrot.slane %v2549, %v2576
    %v2578 = vcombine.high %v2556, %v2556
    %v2579 = vcombine.high %v2563, %v2563
    %v2580 = vcombine.high %v2570, %v2570
    %v2581 = vcombine.high %v2577, %v2577
    %v2582 = vlaneseq
    %v2583 = vshrl.u32 %v2582, 7
    %v2584 = vsub.s32 0, %v2583
    %v2585 = vrot.slane %v2507, %v2584
    %v2586 = vlaneseq
    %v2587 = vshrl.u32 %v2586, 7
    %v2588 = vsub.s32 0, %v2587
    %v2589 = vrot.slane %v2521, %v2588
    %v2590 = vlaneseq
    %v2591 = vshrl.u32 %v2590, 7
    %v2592 = vsub.s32 0, %v2591
    %v2593 = vrot.slane %v2529, %v2592
    %v2594 = vlaneseq
    %v2595 = vshrl.u32 %v2594, 7
    %v2596 = vsub.s32 0, %v2595
    %v2597 = vrot.slane %v2531, %v2596
    %v2598 = vlaneseq
    %v2599 = vshrl.u32 %v2598, 7
    %v2600 = vsub.s32 0, %v2599
    %v2601 = vrot.slane %v2514, %v2600
    %v2602 = vlaneseq
    %v2603 = vshrl.u32 %v2602, 7
    %v2604 = vsub.s32 0, %v2603
    %v2605 = vrot.slane %v2528, %v2604
    %v2606 = vlaneseq
    %v2607 = vshrl.u32 %v2606, 7
    %v2608 = vsub.s32 0, %v2607
    %v2609 = vrot.slane %v2530, %v2608
    %v2610 = vlaneseq
    %v2611 = vshrl.u32 %v2610, 7
    %v2612 = vsub.s32 0, %v2611
    %v2613 = vrot.slane %v2532, %v2612
    %v2614 = vlaneseq
    %v2615 = vshrl.u32 %v2614, 7
    %v2616 = vsub.s32 0, %v2615
    %v2617 = vrot.slane %v2556, %v2616
    %v2618 = vlaneseq
    %v2619 = vshrl.u32 %v2618, 7
    %v2620 = vsub.s32 0, %v2619
    %v2621 = vrot.slane %v2570, %v2620
    %v2622 = vlaneseq
    %v2623 = vshrl.u32 %v2622, 7
    %v2624 = vsub.s32 0, %v2623
    %v2625 = vrot.slane %v2578, %v2624
    %v2626 = vlaneseq
    %v2627 = vshrl.u32 %v2626, 7
    %v2628 = vsub.s32 0, %v2627
    %v2629 = vrot.slane %v2580, %v2628
    %v2630 = vlaneseq
    %v2631 = vshrl.u32 %v2630, 7
    %v2632 = vsub.s32 0, %v2631
    %v2633 = vrot.slane %v2563, %v2632
    %v2634 = vlaneseq
    %v2635 = vshrl.u32 %v2634, 7
    %v2636 = vsub.s32 0, %v2635
    %v2637 = vrot.slane %v2577, %v2636
    %v2638 = vlaneseq
    %v2639 = vshrl.u32 %v2638, 7
    %v2640 = vsub.s32 0, %v2639
    %v2641 = vrot.slane %v2579, %v2640
    %v2642 = vlaneseq
    %v2643 = vshrl.u32 %v2642, 7
    %v2644 = vsub.s32 0, %v2643
    %v2645 = vrot.slane %v2581, %v2644
    %v2662 = vmul.f32 %v2585, %v272
    %v2663 = vmul.f32 %v2585, %v273
    %v2664 = vmul.f32 %v2589, %v272
    %v2665 = vmul.f32 %v2589, %v273
    %v2666 = vmul.f32 %v2593, %v272
    %v2667 = vmul.f32 %v2593, %v273
    %v2668 = vmul.f32 %v2597, %v272
    %v2669 = vmul.f32 %v2597, %v273
    %v2670 = vmul.f32 %v2601, %v272
    %v2671 = vmul.f32 %v2601, %v273
    %v2672 = vmul.f32 %v2605, %v272
    %v2673 = vmul.f32 %v2605, %v273
    %v2674 = vmul.f32 %v2609, %v272
    %v2675 = vmul.f32 %v2609, %v273
    %v2676 = vmul.f32 %v2613, %v272
    %v2677 = vmul.f32 %v2613, %v273
    %v2678 = vmul.f32 %v2617, %v272
    %v2679 = vmul.f32 %v2617, %v273
    %v2680 = vmul.f32 %v2621, %v272
    %v2681 = vmul.f32 %v2621, %v273
    %v2682 = vmul.f32 %v2625, %v272
    %v2683 = vmul.f32 %v2625, %v273
    %v2684 = vmul.f32 %v2629, %v272
    %v2685 = vmul.f32 %v2629, %v273
    %v2686 = vmul.f32 %v2633, %v272
    %v2687 = vmul.f32 %v2633, %v273
    %v2688 = vmul.f32 %v2637, %v272
    %v2689 = vmul.f32 %v2637, %v273
    %v2690 = vmul.f32 %v2641, %v272
    %v2691 = vmul.f32 %v2641, %v273
    %v2692 = vmul.f32 %v2645, %v272
    %v2693 = vmul.f32 %v2645, %v273
    %v2694 = vadd.f32 %v2450, %v2662
    %v2695 = vadd.f32 %v2451, %v2663
    %v2696 = vadd.f32 %v2452, %v2664
    %v2697 = vadd.f32 %v2453, %v2665
    %v2698 = vadd.f32 %v2454, %v2666
    %v2699 = vadd.f32 %v2455, %v2667
    %v2700 = vadd.f32 %v2456, %v2668
    %v2701 = vadd.f32 %v2457, %v2669
    %v2702 = vadd.f32 %v2458, %v2670
    %v2703 = vadd.f32 %v2459, %v2671
    %v2704 = vadd.f32 %v2460, %v2672
    %v2705 = vadd.f32 %v2461, %v2673
    %v2706 = vadd.f32 %v2462, %v2674
    %v2707 = vadd.f32 %v2463, %v2675
    %v2708 = vadd.f32 %v2464, %v2676
    %v2709 = vadd.f32 %v2465, %v2677
    %v2710 = vadd.f32 %v2466, %v2678
    %v2711 = vadd.f32 %v2467, %v2679
    %v2712 = vadd.f32 %v2468, %v2680
    %v2713 = vadd.f32 %v2469, %v2681
    %v2714 = vadd.f32 %v2470, %v2682
    %v2715 = vadd.f32 %v2471, %v2683
    %v2716 = vadd.f32 %v2472, %v2684
    %v2717 = vadd.f32 %v2473, %v2685
    %v2718 = vadd.f32 %v2474, %v2686
    %v2719 = vadd.f32 %v2475, %v2687
    %v2720 = vadd.f32 %v2476, %v2688
    %v2721 = vadd.f32 %v2477, %v2689
    %v2722 = vadd.f32 %v2478, %v2690
    %v2723 = vadd.f32 %v2479, %v2691
    %v2724 = vadd.f32 %v2480, %v2692
    %v2725 = vadd.f32 %v2481, %v2693
    %v2728 = vcombine.high %v60, %v60
    %v2730 = vunpack.c.l.s4 1966171168
    %v2731 = vunpack.c.0.s8 %v2730
    %v2732 = vlaneseq
    %v2733 = vshrl.u32 %v2732, 7
    %v2734 = vsub.s32 %v2731, %v2733
    %v2735 = vrot.slane %v60, %v2734
    %v2737 = vunpack.c.l.s4 1966171168
    %v2738 = vunpack.c.0.s8 %v2737
    %v2739 = vlaneseq
    %v2740 = vshrl.u32 %v2739, 7
    %v2741 = vsub.s32 %v2738, %v2740
    %v2742 = vrot.slane %v2728, %v2741
    %v2743 = vcombine.high %v2735, %v2735
    %v2744 = vcombine.high %v2742, %v2742
    %v2746 = vunpack.c.l.s4 1966171168
    %v2747 = vunpack.c.0.s8 %v2746
    %v2748 = vlaneseq
    %v2749 = vshrl.u32 %v2748, 7
    %v2750 = vsub.s32 %v2747, %v2749
    %v2751 = vrot.slane %v2735, %v2750
    %v2753 = vunpack.c.l.s4 1966171168
    %v2754 = vunpack.c.0.s8 %v2753
    %v2755 = vlaneseq
    %v2756 = vshrl.u32 %v2755, 7
    %v2757 = vsub.s32 %v2754, %v2756
    %v2758 = vrot.slane %v2742, %v2757
    %v2760 = vunpack.c.l.s4 1966171168
    %v2761 = vunpack.c.0.s8 %v2760
    %v2762 = vlaneseq
    %v2763 = vshrl.u32 %v2762, 7
    %v2764 = vsub.s32 %v2761, %v2763
    %v2765 = vrot.slane %v2743, %v2764
    %v2767 = vunpack.c.l.s4 1966171168
    %v2768 = vunpack.c.0.s8 %v2767
    %v2769 = vlaneseq
    %v2770 = vshrl.u32 %v2769, 7
    %v2771 = vsub.s32 %v2768, %v2770
    %v2772 = vrot.slane %v2744, %v2771
    %v2773 = vcombine.high %v2751, %v2751
    %v2774 = vcombine.high %v2758, %v2758
    %v2775 = vcombine.high %v2765, %v2765
    %v2776 = vcombine.high %v2772, %v2772
    %v2777 = vcombine.high %v61, %v61
    %v2779 = vunpack.c.l.s4 1966171168
    %v2780 = vunpack.c.0.s8 %v2779
    %v2781 = vlaneseq
    %v2782 = vshrl.u32 %v2781, 7
    %v2783 = vsub.s32 %v2780, %v2782
    %v2784 = vrot.slane %v61, %v2783
    %v2786 = vunpack.c.l.s4 1966171168
    %v2787 = vunpack.c.0.s8 %v2786
    %v2788 = vlaneseq
    %v2789 = vshrl.u32 %v2788, 7
    %v2790 = vsub.s32 %v2787, %v2789
    %v2791 = vrot.slane %v2777, %v2790
    %v2792 = vcombine.high %v2784, %v2784
    %v2793 = vcombine.high %v2791, %v2791
    %v2795 = vunpack.c.l.s4 1966171168
    %v2796 = vunpack.c.0.s8 %v2795
    %v2797 = vlaneseq
    %v2798 = vshrl.u32 %v2797, 7
    %v2799 = vsub.s32 %v2796, %v2798
    %v2800 = vrot.slane %v2784, %v2799
    %v2802 = vunpack.c.l.s4 1966171168
    %v2803 = vunpack.c.0.s8 %v2802
    %v2804 = vlaneseq
    %v2805 = vshrl.u32 %v2804, 7
    %v2806 = vsub.s32 %v2803, %v2805
    %v2807 = vrot.slane %v2791, %v2806
    %v2809 = vunpack.c.l.s4 1966171168
    %v2810 = vunpack.c.0.s8 %v2809
    %v2811 = vlaneseq
    %v2812 = vshrl.u32 %v2811, 7
    %v2813 = vsub.s32 %v2810, %v2812
    %v2814 = vrot.slane %v2792, %v2813
    %v2816 = vunpack.c.l.s4 1966171168
    %v2817 = vunpack.c.0.s8 %v2816
    %v2818 = vlaneseq
    %v2819 = vshrl.u32 %v2818, 7
    %v2820 = vsub.s32 %v2817, %v2819
    %v2821 = vrot.slane %v2793, %v2820
    %v2822 = vcombine.high %v2800, %v2800
    %v2823 = vcombine.high %v2807, %v2807
    %v2824 = vcombine.high %v2814, %v2814
    %v2825 = vcombine.high %v2821, %v2821
    %v2826 = vlaneseq
    %v2827 = vshrl.u32 %v2826, 7
    %v2828 = vsub.s32 0, %v2827
    %v2829 = vrot.slane %v2751, %v2828
    %v2830 = vlaneseq
    %v2831 = vshrl.u32 %v2830, 7
    %v2832 = vsub.s32 0, %v2831
    %v2833 = vrot.slane %v2765, %v2832
    %v2834 = vlaneseq
    %v2835 = vshrl.u32 %v2834, 7
    %v2836 = vsub.s32 0, %v2835
    %v2837 = vrot.slane %v2773, %v2836
    %v2838 = vlaneseq
    %v2839 = vshrl.u32 %v2838, 7
    %v2840 = vsub.s32 0, %v2839
    %v2841 = vrot.slane %v2775, %v2840
    %v2842 = vlaneseq
    %v2843 = vshrl.u32 %v2842, 7
    %v2844 = vsub.s32 0, %v2843
    %v2845 = vrot.slane %v2758, %v2844
    %v2846 = vlaneseq
    %v2847 = vshrl.u32 %v2846, 7
    %v2848 = vsub.s32 0, %v2847
    %v2849 = vrot.slane %v2772, %v2848
    %v2850 = vlaneseq
    %v2851 = vshrl.u32 %v2850, 7
    %v2852 = vsub.s32 0, %v2851
    %v2853 = vrot.slane %v2774, %v2852
    %v2854 = vlaneseq
    %v2855 = vshrl.u32 %v2854, 7
    %v2856 = vsub.s32 0, %v2855
    %v2857 = vrot.slane %v2776, %v2856
    %v2858 = vlaneseq
    %v2859 = vshrl.u32 %v2858, 7
    %v2860 = vsub.s32 0, %v2859
    %v2861 = vrot.slane %v2800, %v2860
    %v2862 = vlaneseq
    %v2863 = vshrl.u32 %v2862, 7
    %v2864 = vsub.s32 0, %v2863
    %v2865 = vrot.slane %v2814, %v2864
    %v2866 = vlaneseq
    %v2867 = vshrl.u32 %v2866, 7
    %v2868 = vsub.s32 0, %v2867
    %v2869 = vrot.slane %v2822, %v2868
    %v2870 = vlaneseq
    %v2871 = vshrl.u32 %v2870, 7
    %v2872 = vsub.s32 0, %v2871
    %v2873 = vrot.slane %v2824, %v2872
    %v2874 = vlaneseq
    %v2875 = vshrl.u32 %v2874, 7
    %v2876 = vsub.s32 0, %v2875
    %v2877 = vrot.slane %v2807, %v2876
    %v2878 = vlaneseq
    %v2879 = vshrl.u32 %v2878, 7
    %v2880 = vsub.s32 0, %v2879
    %v2881 = vrot.slane %v2821, %v2880
    %v2882 = vlaneseq
    %v2883 = vshrl.u32 %v2882, 7
    %v2884 = vsub.s32 0, %v2883
    %v2885 = vrot.slane %v2823, %v2884
    %v2886 = vlaneseq
    %v2887 = vshrl.u32 %v2886, 7
    %v2888 = vsub.s32 0, %v2887
    %v2889 = vrot.slane %v2825, %v2888
    %v2906 = vmul.f32 %v2829, %v274
    %v2907 = vmul.f32 %v2829, %v275
    %v2908 = vmul.f32 %v2833, %v274
    %v2909 = vmul.f32 %v2833, %v275
    %v2910 = vmul.f32 %v2837, %v274
    %v2911 = vmul.f32 %v2837, %v275
    %v2912 = vmul.f32 %v2841, %v274
    %v2913 = vmul.f32 %v2841, %v275
    %v2914 = vmul.f32 %v2845, %v274
    %v2915 = vmul.f32 %v2845, %v275
    %v2916 = vmul.f32 %v2849, %v274
    %v2917 = vmul.f32 %v2849, %v275
    %v2918 = vmul.f32 %v2853, %v274
    %v2919 = vmul.f32 %v2853, %v275
    %v2920 = vmul.f32 %v2857, %v274
    %v2921 = vmul.f32 %v2857, %v275
    %v2922 = vmul.f32 %v2861, %v274
    %v2923 = vmul.f32 %v2861, %v275
    %v2924 = vmul.f32 %v2865, %v274
    %v2925 = vmul.f32 %v2865, %v275
    %v2926 = vmul.f32 %v2869, %v274
    %v2927 = vmul.f32 %v2869, %v275
    %v2928 = vmul.f32 %v2873, %v274
    %v2929 = vmul.f32 %v2873, %v275
    %v2930 = vmul.f32 %v2877, %v274
    %v2931 = vmul.f32 %v2877, %v275
    %v2932 = vmul.f32 %v2881, %v274
    %v2933 = vmul.f32 %v2881, %v275
    %v2934 = vmul.f32 %v2885, %v274
    %v2935 = vmul.f32 %v2885, %v275
    %v2936 = vmul.f32 %v2889, %v274
    %v2937 = vmul.f32 %v2889, %v275
    %v2938 = vadd.f32 %v2694, %v2906
    %v2939 = vadd.f32 %v2695, %v2907
    %v2940 = vadd.f32 %v2696, %v2908
    %v2941 = vadd.f32 %v2697, %v2909
    %v2942 = vadd.f32 %v2698, %v2910
    %v2943 = vadd.f32 %v2699, %v2911
    %v2944 = vadd.f32 %v2700, %v2912
    %v2945 = vadd.f32 %v2701, %v2913
    %v2946 = vadd.f32 %v2702, %v2914
    %v2947 = vadd.f32 %v2703, %v2915
    %v2948 = vadd.f32 %v2704, %v2916
    %v2949 = vadd.f32 %v2705, %v2917
    %v2950 = vadd.f32 %v2706, %v2918
    %v2951 = vadd.f32 %v2707, %v2919
    %v2952 = vadd.f32 %v2708, %v2920
    %v2953 = vadd.f32 %v2709, %v2921
    %v2954 = vadd.f32 %v2710, %v2922
    %v2955 = vadd.f32 %v2711, %v2923
    %v2956 = vadd.f32 %v2712, %v2924
    %v2957 = vadd.f32 %v2713, %v2925
    %v2958 = vadd.f32 %v2714, %v2926
    %v2959 = vadd.f32 %v2715, %v2927
    %v2960 = vadd.f32 %v2716, %v2928
    %v2961 = vadd.f32 %v2717, %v2929
    %v2962 = vadd.f32 %v2718, %v2930
    %v2963 = vadd.f32 %v2719, %v2931
    %v2964 = vadd.f32 %v2720, %v2932
    %v2965 = vadd.f32 %v2721, %v2933
    %v2966 = vadd.f32 %v2722, %v2934
    %v2967 = vadd.f32 %v2723, %v2935
    %v2968 = vadd.f32 %v2724, %v2936
    %v2969 = vadd.f32 %v2725, %v2937
    %v2972 = vcombine.high %v62, %v62
    %v2974 = vunpack.c.l.s4 1966171168
    %v2975 = vunpack.c.0.s8 %v2974
    %v2976 = vlaneseq
    %v2977 = vshrl.u32 %v2976, 7
    %v2978 = vsub.s32 %v2975, %v2977
    %v2979 = vrot.slane %v62, %v2978
    %v2981 = vunpack.c.l.s4 1966171168
    %v2982 = vunpack.c.0.s8 %v2981
    %v2983 = vlaneseq
    %v2984 = vshrl.u32 %v2983, 7
    %v2985 = vsub.s32 %v2982, %v2984
    %v2986 = vrot.slane %v2972, %v2985
    %v2987 = vcombine.high %v2979, %v2979
    %v2988 = vcombine.high %v2986, %v2986
    %v2990 = vunpack.c.l.s4 1966171168
    %v2991 = vunpack.c.0.s8 %v2990
    %v2992 = vlaneseq
    %v2993 = vshrl.u32 %v2992, 7
    %v2994 = vsub.s32 %v2991, %v2993
    %v2995 = vrot.slane %v2979, %v2994
    %v2997 = vunpack.c.l.s4 1966171168
    %v2998 = vunpack.c.0.s8 %v2997
    %v2999 = vlaneseq
    %v3000 = vshrl.u32 %v2999, 7
    %v3001 = vsub.s32 %v2998, %v3000
    %v3002 = vrot.slane %v2986, %v3001
    %v3004 = vunpack.c.l.s4 1966171168
    %v3005 = vunpack.c.0.s8 %v3004
    %v3006 = vlaneseq
    %v3007 = vshrl.u32 %v3006, 7
    %v3008 = vsub.s32 %v3005, %v3007
    %v3009 = vrot.slane %v2987, %v3008
    %v3011 = vunpack.c.l.s4 1966171168
    %v3012 = vunpack.c.0.s8 %v3011
    %v3013 = vlaneseq
    %v3014 = vshrl.u32 %v3013, 7
    %v3015 = vsub.s32 %v3012, %v3014
    %v3016 = vrot.slane %v2988, %v3015
    %v3017 = vcombine.high %v2995, %v2995
    %v3018 = vcombine.high %v3002, %v3002
    %v3019 = vcombine.high %v3009, %v3009
    %v3020 = vcombine.high %v3016, %v3016
    %v3021 = vcombine.high %v63, %v63
    %v3023 = vunpack.c.l.s4 1966171168
    %v3024 = vunpack.c.0.s8 %v3023
    %v3025 = vlaneseq
    %v3026 = vshrl.u32 %v3025, 7
    %v3027 = vsub.s32 %v3024, %v3026
    %v3028 = vrot.slane %v63, %v3027
    %v3030 = vunpack.c.l.s4 1966171168
    %v3031 = vunpack.c.0.s8 %v3030
    %v3032 = vlaneseq
    %v3033 = vshrl.u32 %v3032, 7
    %v3034 = vsub.s32 %v3031, %v3033
    %v3035 = vrot.slane %v3021, %v3034
    %v3036 = vcombine.high %v3028, %v3028
    %v3037 = vcombine.high %v3035, %v3035
    %v3039 = vunpack.c.l.s4 1966171168
    %v3040 = vunpack.c.0.s8 %v3039
    %v3041 = vlaneseq
    %v3042 = vshrl.u32 %v3041, 7
    %v3043 = vsub.s32 %v3040, %v3042
    %v3044 = vrot.slane %v3028, %v3043
    %v3046 = vunpack.c.l.s4 1966171168
    %v3047 = vunpack.c.0.s8 %v3046
    %v3048 = vlaneseq
    %v3049 = vshrl.u32 %v3048, 7
    %v3050 = vsub.s32 %v3047, %v3049
    %v3051 = vrot.slane %v3035, %v3050
    %v3053 = vunpack.c.l.s4 1966171168
    %v3054 = vunpack.c.0.s8 %v3053
    %v3055 = vlaneseq
    %v3056 = vshrl.u32 %v3055, 7
    %v3057 = vsub.s32 %v3054, %v3056
    %v3058 = vrot.slane %v3036, %v3057
    %v3060 = vunpack.c.l.s4 1966171168
    %v3061 = vunpack.c.0.s8 %v3060
    %v3062 = vlaneseq
    %v3063 = vshrl.u32 %v3062, 7
    %v3064 = vsub.s32 %v3061, %v3063
    %v3065 = vrot.slane %v3037, %v3064
    %v3066 = vcombine.high %v3044, %v3044
    %v3067 = vcombine.high %v3051, %v3051
    %v3068 = vcombine.high %v3058, %v3058
    %v3069 = vcombine.high %v3065, %v3065
    %v3070 = vlaneseq
    %v3071 = vshrl.u32 %v3070, 7
    %v3072 = vsub.s32 0, %v3071
    %v3073 = vrot.slane %v2995, %v3072
    %v3074 = vlaneseq
    %v3075 = vshrl.u32 %v3074, 7
    %v3076 = vsub.s32 0, %v3075
    %v3077 = vrot.slane %v3009, %v3076
    %v3078 = vlaneseq
    %v3079 = vshrl.u32 %v3078, 7
    %v3080 = vsub.s32 0, %v3079
    %v3081 = vrot.slane %v3017, %v3080
    %v3082 = vlaneseq
    %v3083 = vshrl.u32 %v3082, 7
    %v3084 = vsub.s32 0, %v3083
    %v3085 = vrot.slane %v3019, %v3084
    %v3086 = vlaneseq
    %v3087 = vshrl.u32 %v3086, 7
    %v3088 = vsub.s32 0, %v3087
    %v3089 = vrot.slane %v3002, %v3088
    %v3090 = vlaneseq
    %v3091 = vshrl.u32 %v3090, 7
    %v3092 = vsub.s32 0, %v3091
    %v3093 = vrot.slane %v3016, %v3092
    %v3094 = vlaneseq
    %v3095 = vshrl.u32 %v3094, 7
    %v3096 = vsub.s32 0, %v3095
    %v3097 = vrot.slane %v3018, %v3096
    %v3098 = vlaneseq
    %v3099 = vshrl.u32 %v3098, 7
    %v3100 = vsub.s32 0, %v3099
    %v3101 = vrot.slane %v3020, %v3100
    %v3102 = vlaneseq
    %v3103 = vshrl.u32 %v3102, 7
    %v3104 = vsub.s32 0, %v3103
    %v3105 = vrot.slane %v3044, %v3104
    %v3106 = vlaneseq
    %v3107 = vshrl.u32 %v3106, 7
    %v3108 = vsub.s32 0, %v3107
    %v3109 = vrot.slane %v3058, %v3108
    %v3110 = vlaneseq
    %v3111 = vshrl.u32 %v3110, 7
    %v3112 = vsub.s32 0, %v3111
    %v3113 = vrot.slane %v3066, %v3112
    %v3114 = vlaneseq
    %v3115 = vshrl.u32 %v3114, 7
    %v3116 = vsub.s32 0, %v3115
    %v3117 = vrot.slane %v3068, %v3116
    %v3118 = vlaneseq
    %v3119 = vshrl.u32 %v3118, 7
    %v3120 = vsub.s32 0, %v3119
    %v3121 = vrot.slane %v3051, %v3120
    %v3122 = vlaneseq
    %v3123 = vshrl.u32 %v3122, 7
    %v3124 = vsub.s32 0, %v3123
    %v3125 = vrot.slane %v3065, %v3124
    %v3126 = vlaneseq
    %v3127 = vshrl.u32 %v3126, 7
    %v3128 = vsub.s32 0, %v3127
    %v3129 = vrot.slane %v3067, %v3128
    %v3130 = vlaneseq
    %v3131 = vshrl.u32 %v3130, 7
    %v3132 = vsub.s32 0, %v3131
    %v3133 = vrot.slane %v3069, %v3132
    %v3150 = vmul.f32 %v3073, %v276
    %v3151 = vmul.f32 %v3073, %v277
    %v3152 = vmul.f32 %v3077, %v276
    %v3153 = vmul.f32 %v3077, %v277
    %v3154 = vmul.f32 %v3081, %v276
    %v3155 = vmul.f32 %v3081, %v277
    %v3156 = vmul.f32 %v3085, %v276
    %v3157 = vmul.f32 %v3085, %v277
    %v3158 = vmul.f32 %v3089, %v276
    %v3159 = vmul.f32 %v3089, %v277
    %v3160 = vmul.f32 %v3093, %v276
    %v3161 = vmul.f32 %v3093, %v277
    %v3162 = vmul.f32 %v3097, %v276
    %v3163 = vmul.f32 %v3097, %v277
    %v3164 = vmul.f32 %v3101, %v276
    %v3165 = vmul.f32 %v3101, %v277
    %v3166 = vmul.f32 %v3105, %v276
    %v3167 = vmul.f32 %v3105, %v277
    %v3168 = vmul.f32 %v3109, %v276
    %v3169 = vmul.f32 %v3109, %v277
    %v3170 = vmul.f32 %v3113, %v276
    %v3171 = vmul.f32 %v3113, %v277
    %v3172 = vmul.f32 %v3117, %v276
    %v3173 = vmul.f32 %v3117, %v277
    %v3174 = vmul.f32 %v3121, %v276
    %v3175 = vmul.f32 %v3121, %v277
    %v3176 = vmul.f32 %v3125, %v276
    %v3177 = vmul.f32 %v3125, %v277
    %v3178 = vmul.f32 %v3129, %v276
    %v3179 = vmul.f32 %v3129, %v277
    %v3180 = vmul.f32 %v3133, %v276
    %v3181 = vmul.f32 %v3133, %v277
    %v3182 = vadd.f32 %v2938, %v3150
    %v3183 = vadd.f32 %v2939, %v3151
    %v3184 = vadd.f32 %v2940, %v3152
    %v3185 = vadd.f32 %v2941, %v3153
    %v3186 = vadd.f32 %v2942, %v3154
    %v3187 = vadd.f32 %v2943, %v3155
    %v3188 = vadd.f32 %v2944, %v3156
    %v3189 = vadd.f32 %v2945, %v3157
    %v3190 = vadd.f32 %v2946, %v3158
    %v3191 = vadd.f32 %v2947, %v3159
    %v3192 = vadd.f32 %v2948, %v3160
    %v3193 = vadd.f32 %v2949, %v3161
    %v3194 = vadd.f32 %v2950, %v3162
    %v3195 = vadd.f32 %v2951, %v3163
    %v3196 = vadd.f32 %v2952, %v3164
    %v3197 = vadd.f32 %v2953, %v3165
    %v3198 = vadd.f32 %v2954, %v3166
    %v3199 = vadd.f32 %v2955, %v3167
    %v3200 = vadd.f32 %v2956, %v3168
    %v3201 = vadd.f32 %v2957, %v3169
    %v3202 = vadd.f32 %v2958, %v3170
    %v3203 = vadd.f32 %v2959, %v3171
    %v3204 = vadd.f32 %v2960, %v3172
    %v3205 = vadd.f32 %v2961, %v3173
    %v3206 = vadd.f32 %v2962, %v3174
    %v3207 = vadd.f32 %v2963, %v3175
    %v3208 = vadd.f32 %v2964, %v3176
    %v3209 = vadd.f32 %v2965, %v3177
    %v3210 = vadd.f32 %v2966, %v3178
    %v3211 = vadd.f32 %v2967, %v3179
    %v3212 = vadd.f32 %v2968, %v3180
    %v3213 = vadd.f32 %v2969, %v3181
    %v3216 = vcombine.high %v64, %v64
    %v3218 = vunpack.c.l.s4 1966171168
    %v3219 = vunpack.c.0.s8 %v3218
    %v3220 = vlaneseq
    %v3221 = vshrl.u32 %v3220, 7
    %v3222 = vsub.s32 %v3219, %v3221
    %v3223 = vrot.slane %v64, %v3222
    %v3225 = vunpack.c.l.s4 1966171168
    %v3226 = vunpack.c.0.s8 %v3225
    %v3227 = vlaneseq
    %v3228 = vshrl.u32 %v3227, 7
    %v3229 = vsub.s32 %v3226, %v3228
    %v3230 = vrot.slane %v3216, %v3229
    %v3231 = vcombine.high %v3223, %v3223
    %v3232 = vcombine.high %v3230, %v3230
    %v3234 = vunpack.c.l.s4 1966171168
    %v3235 = vunpack.c.0.s8 %v3234
    %v3236 = vlaneseq
    %v3237 = vshrl.u32 %v3236, 7
    %v3238 = vsub.s32 %v3235, %v3237
    %v3239 = vrot.slane %v3223, %v3238
    %v3241 = vunpack.c.l.s4 1966171168
    %v3242 = vunpack.c.0.s8 %v3241
    %v3243 = vlaneseq
    %v3244 = vshrl.u32 %v3243, 7
    %v3245 = vsub.s32 %v3242, %v3244
    %v3246 = vrot.slane %v3230, %v3245
    %v3248 = vunpack.c.l.s4 1966171168
    %v3249 = vunpack.c.0.s8 %v3248
    %v3250 = vlaneseq
    %v3251 = vshrl.u32 %v3250, 7
    %v3252 = vsub.s32 %v3249, %v3251
    %v3253 = vrot.slane %v3231, %v3252
    %v3255 = vunpack.c.l.s4 1966171168
    %v3256 = vunpack.c.0.s8 %v3255
    %v3257 = vlaneseq
    %v3258 = vshrl.u32 %v3257, 7
    %v3259 = vsub.s32 %v3256, %v3258
    %v3260 = vrot.slane %v3232, %v3259
    %v3261 = vcombine.high %v3239, %v3239
    %v3262 = vcombine.high %v3246, %v3246
    %v3263 = vcombine.high %v3253, %v3253
    %v3264 = vcombine.high %v3260, %v3260
    %v3265 = vcombine.high %v65, %v65
    %v3267 = vunpack.c.l.s4 1966171168
    %v3268 = vunpack.c.0.s8 %v3267
    %v3269 = vlaneseq
    %v3270 = vshrl.u32 %v3269, 7
    %v3271 = vsub.s32 %v3268, %v3270
    %v3272 = vrot.slane %v65, %v3271
    %v3274 = vunpack.c.l.s4 1966171168
    %v3275 = vunpack.c.0.s8 %v3274
    %v3276 = vlaneseq
    %v3277 = vshrl.u32 %v3276, 7
    %v3278 = vsub.s32 %v3275, %v3277
    %v3279 = vrot.slane %v3265, %v3278
    %v3280 = vcombine.high %v3272, %v3272
    %v3281 = vcombine.high %v3279, %v3279
    %v3283 = vunpack.c.l.s4 1966171168
    %v3284 = vunpack.c.0.s8 %v3283
    %v3285 = vlaneseq
    %v3286 = vshrl.u32 %v3285, 7
    %v3287 = vsub.s32 %v3284, %v3286
    %v3288 = vrot.slane %v3272, %v3287
    %v3290 = vunpack.c.l.s4 1966171168
    %v3291 = vunpack.c.0.s8 %v3290
    %v3292 = vlaneseq
    %v3293 = vshrl.u32 %v3292, 7
    %v3294 = vsub.s32 %v3291, %v3293
    %v3295 = vrot.slane %v3279, %v3294
    %v3297 = vunpack.c.l.s4 1966171168
    %v3298 = vunpack.c.0.s8 %v3297
    %v3299 = vlaneseq
    %v3300 = vshrl.u32 %v3299, 7
    %v3301 = vsub.s32 %v3298, %v3300
    %v3302 = vrot.slane %v3280, %v3301
    %v3304 = vunpack.c.l.s4 1966171168
    %v3305 = vunpack.c.0.s8 %v3304
    %v3306 = vlaneseq
    %v3307 = vshrl.u32 %v3306, 7
    %v3308 = vsub.s32 %v3305, %v3307
    %v3309 = vrot.slane %v3281, %v3308
    %v3310 = vcombine.high %v3288, %v3288
    %v3311 = vcombine.high %v3295, %v3295
    %v3312 = vcombine.high %v3302, %v3302
    %v3313 = vcombine.high %v3309, %v3309
    %v3314 = vlaneseq
    %v3315 = vshrl.u32 %v3314, 7
    %v3316 = vsub.s32 0, %v3315
    %v3317 = vrot.slane %v3239, %v3316
    %v3318 = vlaneseq
    %v3319 = vshrl.u32 %v3318, 7
    %v3320 = vsub.s32 0, %v3319
    %v3321 = vrot.slane %v3253, %v3320
    %v3322 = vlaneseq
    %v3323 = vshrl.u32 %v3322, 7
    %v3324 = vsub.s32 0, %v3323
    %v3325 = vrot.slane %v3261, %v3324
    %v3326 = vlaneseq
    %v3327 = vshrl.u32 %v3326, 7
    %v3328 = vsub.s32 0, %v3327
    %v3329 = vrot.slane %v3263, %v3328
    %v3330 = vlaneseq
    %v3331 = vshrl.u32 %v3330, 7
    %v3332 = vsub.s32 0, %v3331
    %v3333 = vrot.slane %v3246, %v3332
    %v3334 = vlaneseq
    %v3335 = vshrl.u32 %v3334, 7
    %v3336 = vsub.s32 0, %v3335
    %v3337 = vrot.slane %v3260, %v3336
    %v3338 = vlaneseq
    %v3339 = vshrl.u32 %v3338, 7
    %v3340 = vsub.s32 0, %v3339
    %v3341 = vrot.slane %v3262, %v3340
    %v3342 = vlaneseq
    %v3343 = vshrl.u32 %v3342, 7
    %v3344 = vsub.s32 0, %v3343
    %v3345 = vrot.slane %v3264, %v3344
    %v3346 = vlaneseq
    %v3347 = vshrl.u32 %v3346, 7
    %v3348 = vsub.s32 0, %v3347
    %v3349 = vrot.slane %v3288, %v3348
    %v3350 = vlaneseq
    %v3351 = vshrl.u32 %v3350, 7
    %v3352 = vsub.s32 0, %v3351
    %v3353 = vrot.slane %v3302, %v3352
    %v3354 = vlaneseq
    %v3355 = vshrl.u32 %v3354, 7
    %v3356 = vsub.s32 0, %v3355
    %v3357 = vrot.slane %v3310, %v3356
    %v3358 = vlaneseq
    %v3359 = vshrl.u32 %v3358, 7
    %v3360 = vsub.s32 0, %v3359
    %v3361 = vrot.slane %v3312, %v3360
    %v3362 = vlaneseq
    %v3363 = vshrl.u32 %v3362, 7
    %v3364 = vsub.s32 0, %v3363
    %v3365 = vrot.slane %v3295, %v3364
    %v3366 = vlaneseq
    %v3367 = vshrl.u32 %v3366, 7
    %v3368 = vsub.s32 0, %v3367
    %v3369 = vrot.slane %v3309, %v3368
    %v3370 = vlaneseq
    %v3371 = vshrl.u32 %v3370, 7
    %v3372 = vsub.s32 0, %v3371
    %v3373 = vrot.slane %v3311, %v3372
    %v3374 = vlaneseq
    %v3375 = vshrl.u32 %v3374, 7
    %v3376 = vsub.s32 0, %v3375
    %v3377 = vrot.slane %v3313, %v3376
    %v3394 = vmul.f32 %v3317, %v278
    %v3395 = vmul.f32 %v3317, %v279
    %v3396 = vmul.f32 %v3321, %v278
    %v3397 = vmul.f32 %v3321, %v279
    %v3398 = vmul.f32 %v3325, %v278
    %v3399 = vmul.f32 %v3325, %v279
    %v3400 = vmul.f32 %v3329, %v278
    %v3401 = vmul.f32 %v3329, %v279
    %v3402 = vmul.f32 %v3333, %v278
    %v3403 = vmul.f32 %v3333, %v279
    %v3404 = vmul.f32 %v3337, %v278
    %v3405 = vmul.f32 %v3337, %v279
    %v3406 = vmul.f32 %v3341, %v278
    %v3407 = vmul.f32 %v3341, %v279
    %v3408 = vmul.f32 %v3345, %v278
    %v3409 = vmul.f32 %v3345, %v279
    %v3410 = vmul.f32 %v3349, %v278
    %v3411 = vmul.f32 %v3349, %v279
    %v3412 = vmul.f32 %v3353, %v278
    %v3413 = vmul.f32 %v3353, %v279
    %v3414 = vmul.f32 %v3357, %v278
    %v3415 = vmul.f32 %v3357, %v279
    %v3416 = vmul.f32 %v3361, %v278
    %v3417 = vmul.f32 %v3361, %v279
    %v3418 = vmul.f32 %v3365, %v278
    %v3419 = vmul.f32 %v3365, %v279
    %v3420 = vmul.f32 %v3369, %v278
    %v3421 = vmul.f32 %v3369, %v279
    %v3422 = vmul.f32 %v3373, %v278
    %v3423 = vmul.f32 %v3373, %v279
    %v3424 = vmul.f32 %v3377, %v278
    %v3425 = vmul.f32 %v3377, %v279
    %v3426 = vadd.f32 %v3182, %v3394
    %v3427 = vadd.f32 %v3183, %v3395
    %v3428 = vadd.f32 %v3184, %v3396
    %v3429 = vadd.f32 %v3185, %v3397
    %v3430 = vadd.f32 %v3186, %v3398
    %v3431 = vadd.f32 %v3187, %v3399
    %v3432 = vadd.f32 %v3188, %v3400
    %v3433 = vadd.f32 %v3189, %v3401
    %v3434 = vadd.f32 %v3190, %v3402
    %v3435 = vadd.f32 %v3191, %v3403
    %v3436 = vadd.f32 %v3192, %v3404
    %v3437 = vadd.f32 %v3193, %v3405
    %v3438 = vadd.f32 %v3194, %v3406
    %v3439 = vadd.f32 %v3195, %v3407
    %v3440 = vadd.f32 %v3196, %v3408
    %v3441 = vadd.f32 %v3197, %v3409
    %v3442 = vadd.f32 %v3198, %v3410
    %v3443 = vadd.f32 %v3199, %v3411
    %v3444 = vadd.f32 %v3200, %v3412
    %v3445 = vadd.f32 %v3201, %v3413
    %v3446 = vadd.f32 %v3202, %v3414
    %v3447 = vadd.f32 %v3203, %v3415
    %v3448 = vadd.f32 %v3204, %v3416
    %v3449 = vadd.f32 %v3205, %v3417
    %v3450 = vadd.f32 %v3206, %v3418
    %v3451 = vadd.f32 %v3207, %v3419
    %v3452 = vadd.f32 %v3208, %v3420
    %v3453 = vadd.f32 %v3209, %v3421
    %v3454 = vadd.f32 %v3210, %v3422
    %v3455 = vadd.f32 %v3211, %v3423
    %v3456 = vadd.f32 %v3212, %v3424
    %v3457 = vadd.f32 %v3213, %v3425
    %v3460 = vcombine.high %v66, %v66
    %v3462 = vunpack.c.l.s4 1966171168
    %v3463 = vunpack.c.0.s8 %v3462
    %v3464 = vlaneseq
    %v3465 = vshrl.u32 %v3464, 7
    %v3466 = vsub.s32 %v3463, %v3465
    %v3467 = vrot.slane %v66, %v3466
    %v3469 = vunpack.c.l.s4 1966171168
    %v3470 = vunpack.c.0.s8 %v3469
    %v3471 = vlaneseq
    %v3472 = vshrl.u32 %v3471, 7
    %v3473 = vsub.s32 %v3470, %v3472
    %v3474 = vrot.slane %v3460, %v3473
    %v3475 = vcombine.high %v3467, %v3467
    %v3476 = vcombine.high %v3474, %v3474
    %v3478 = vunpack.c.l.s4 1966171168
    %v3479 = vunpack.c.0.s8 %v3478
    %v3480 = vlaneseq
    %v3481 = vshrl.u32 %v3480, 7
    %v3482 = vsub.s32 %v3479, %v3481
    %v3483 = vrot.slane %v3467, %v3482
    %v3485 = vunpack.c.l.s4 1966171168
    %v3486 = vunpack.c.0.s8 %v3485
    %v3487 = vlaneseq
    %v3488 = vshrl.u32 %v3487, 7
    %v3489 = vsub.s32 %v3486, %v3488
    %v3490 = vrot.slane %v3474, %v3489
    %v3492 = vunpack.c.l.s4 1966171168
    %v3493 = vunpack.c.0.s8 %v3492
    %v3494 = vlaneseq
    %v3495 = vshrl.u32 %v3494, 7
    %v3496 = vsub.s32 %v3493, %v3495
    %v3497 = vrot.slane %v3475, %v3496
    %v3499 = vunpack.c.l.s4 1966171168
    %v3500 = vunpack.c.0.s8 %v3499
    %v3501 = vlaneseq
    %v3502 = vshrl.u32 %v3501, 7
    %v3503 = vsub.s32 %v3500, %v3502
    %v3504 = vrot.slane %v3476, %v3503
    %v3505 = vcombine.high %v3483, %v3483
    %v3506 = vcombine.high %v3490, %v3490
    %v3507 = vcombine.high %v3497, %v3497
    %v3508 = vcombine.high %v3504, %v3504
    %v3509 = vcombine.high %v67, %v67
    %v3511 = vunpack.c.l.s4 1966171168
    %v3512 = vunpack.c.0.s8 %v3511
    %v3513 = vlaneseq
    %v3514 = vshrl.u32 %v3513, 7
    %v3515 = vsub.s32 %v3512, %v3514
    %v3516 = vrot.slane %v67, %v3515
    %v3518 = vunpack.c.l.s4 1966171168
    %v3519 = vunpack.c.0.s8 %v3518
    %v3520 = vlaneseq
    %v3521 = vshrl.u32 %v3520, 7
    %v3522 = vsub.s32 %v3519, %v3521
    %v3523 = vrot.slane %v3509, %v3522
    %v3524 = vcombine.high %v3516, %v3516
    %v3525 = vcombine.high %v3523, %v3523
    %v3527 = vunpack.c.l.s4 1966171168
    %v3528 = vunpack.c.0.s8 %v3527
    %v3529 = vlaneseq
    %v3530 = vshrl.u32 %v3529, 7
    %v3531 = vsub.s32 %v3528, %v3530
    %v3532 = vrot.slane %v3516, %v3531
    %v3534 = vunpack.c.l.s4 1966171168
    %v3535 = vunpack.c.0.s8 %v3534
    %v3536 = vlaneseq
    %v3537 = vshrl.u32 %v3536, 7
    %v3538 = vsub.s32 %v3535, %v3537
    %v3539 = vrot.slane %v3523, %v3538
    %v3541 = vunpack.c.l.s4 1966171168
    %v3542 = vunpack.c.0.s8 %v3541
    %v3543 = vlaneseq
    %v3544 = vshrl.u32 %v3543, 7
    %v3545 = vsub.s32 %v3542, %v3544
    %v3546 = vrot.slane %v3524, %v3545
    %v3548 = vunpack.c.l.s4 1966171168
    %v3549 = vunpack.c.0.s8 %v3548
    %v3550 = vlaneseq
    %v3551 = vshrl.u32 %v3550, 7
    %v3552 = vsub.s32 %v3549, %v3551
    %v3553 = vrot.slane %v3525, %v3552
    %v3554 = vcombine.high %v3532, %v3532
    %v3555 = vcombine.high %v3539, %v3539
    %v3556 = vcombine.high %v3546, %v3546
    %v3557 = vcombine.high %v3553, %v3553
    %v3558 = vlaneseq
    %v3559 = vshrl.u32 %v3558, 7
    %v3560 = vsub.s32 0, %v3559
    %v3561 = vrot.slane %v3483, %v3560
    %v3562 = vlaneseq
    %v3563 = vshrl.u32 %v3562, 7
    %v3564 = vsub.s32 0, %v3563
    %v3565 = vrot.slane %v3497, %v3564
    %v3566 = vlaneseq
    %v3567 = vshrl.u32 %v3566, 7
    %v3568 = vsub.s32 0, %v3567
    %v3569 = vrot.slane %v3505, %v3568
    %v3570 = vlaneseq
    %v3571 = vshrl.u32 %v3570, 7
    %v3572 = vsub.s32 0, %v3571
    %v3573 = vrot.slane %v3507, %v3572
    %v3574 = vlaneseq
    %v3575 = vshrl.u32 %v3574, 7
    %v3576 = vsub.s32 0, %v3575
    %v3577 = vrot.slane %v3490, %v3576
    %v3578 = vlaneseq
    %v3579 = vshrl.u32 %v3578, 7
    %v3580 = vsub.s32 0, %v3579
    %v3581 = vrot.slane %v3504, %v3580
    %v3582 = vlaneseq
    %v3583 = vshrl.u32 %v3582, 7
    %v3584 = vsub.s32 0, %v3583
    %v3585 = vrot.slane %v3506, %v3584
    %v3586 = vlaneseq
    %v3587 = vshrl.u32 %v3586, 7
    %v3588 = vsub.s32 0, %v3587
    %v3589 = vrot.slane %v3508, %v3588
    %v3590 = vlaneseq
    %v3591 = vshrl.u32 %v3590, 7
    %v3592 = vsub.s32 0, %v3591
    %v3593 = vrot.slane %v3532, %v3592
    %v3594 = vlaneseq
    %v3595 = vshrl.u32 %v3594, 7
    %v3596 = vsub.s32 0, %v3595
    %v3597 = vrot.slane %v3546, %v3596
    %v3598 = vlaneseq
    %v3599 = vshrl.u32 %v3598, 7
    %v3600 = vsub.s32 0, %v3599
    %v3601 = vrot.slane %v3554, %v3600
    %v3602 = vlaneseq
    %v3603 = vshrl.u32 %v3602, 7
    %v3604 = vsub.s32 0, %v3603
    %v3605 = vrot.slane %v3556, %v3604
    %v3606 = vlaneseq
    %v3607 = vshrl.u32 %v3606, 7
    %v3608 = vsub.s32 0, %v3607
    %v3609 = vrot.slane %v3539, %v3608
    %v3610 = vlaneseq
    %v3611 = vshrl.u32 %v3610, 7
    %v3612 = vsub.s32 0, %v3611
    %v3613 = vrot.slane %v3553, %v3612
    %v3614 = vlaneseq
    %v3615 = vshrl.u32 %v3614, 7
    %v3616 = vsub.s32 0, %v3615
    %v3617 = vrot.slane %v3555, %v3616
    %v3618 = vlaneseq
    %v3619 = vshrl.u32 %v3618, 7
    %v3620 = vsub.s32 0, %v3619
    %v3621 = vrot.slane %v3557, %v3620
    %v3638 = vmul.f32 %v3561, %v280
    %v3639 = vmul.f32 %v3561, %v281
    %v3640 = vmul.f32 %v3565, %v280
    %v3641 = vmul.f32 %v3565, %v281
    %v3642 = vmul.f32 %v3569, %v280
    %v3643 = vmul.f32 %v3569, %v281
    %v3644 = vmul.f32 %v3573, %v280
    %v3645 = vmul.f32 %v3573, %v281
    %v3646 = vmul.f32 %v3577, %v280
    %v3647 = vmul.f32 %v3577, %v281
    %v3648 = vmul.f32 %v3581, %v280
    %v3649 = vmul.f32 %v3581, %v281
    %v3650 = vmul.f32 %v3585, %v280
    %v3651 = vmul.f32 %v3585, %v281
    %v3652 = vmul.f32 %v3589, %v280
    %v3653 = vmul.f32 %v3589, %v281
    %v3654 = vmul.f32 %v3593, %v280
    %v3655 = vmul.f32 %v3593, %v281
    %v3656 = vmul.f32 %v3597, %v280
    %v3657 = vmul.f32 %v3597, %v281
    %v3658 = vmul.f32 %v3601, %v280
    %v3659 = vmul.f32 %v3601, %v281
    %v3660 = vmul.f32 %v3605, %v280
    %v3661 = vmul.f32 %v3605, %v281
    %v3662 = vmul.f32 %v3609, %v280
    %v3663 = vmul.f32 %v3609, %v281
    %v3664 = vmul.f32 %v3613, %v280
    %v3665 = vmul.f32 %v3613, %v281
    %v3666 = vmul.f32 %v3617, %v280
    %v3667 = vmul.f32 %v3617, %v281
    %v3668 = vmul.f32 %v3621, %v280
    %v3669 = vmul.f32 %v3621, %v281
    %v3670 = vadd.f32 %v3426, %v3638
    %v3671 = vadd.f32 %v3427, %v3639
    %v3672 = vadd.f32 %v3428, %v3640
    %v3673 = vadd.f32 %v3429, %v3641
    %v3674 = vadd.f32 %v3430, %v3642
    %v3675 = vadd.f32 %v3431, %v3643
    %v3676 = vadd.f32 %v3432, %v3644
    %v3677 = vadd.f32 %v3433, %v3645
    %v3678 = vadd.f32 %v3434, %v3646
    %v3679 = vadd.f32 %v3435, %v3647
    %v3680 = vadd.f32 %v3436, %v3648
    %v3681 = vadd.f32 %v3437, %v3649
    %v3682 = vadd.f32 %v3438, %v3650
    %v3683 = vadd.f32 %v3439, %v3651
    %v3684 = vadd.f32 %v3440, %v3652
    %v3685 = vadd.f32 %v3441, %v3653
    %v3686 = vadd.f32 %v3442, %v3654
    %v3687 = vadd.f32 %v3443, %v3655
    %v3688 = vadd.f32 %v3444, %v3656
    %v3689 = vadd.f32 %v3445, %v3657
    %v3690 = vadd.f32 %v3446, %v3658
    %v3691 = vadd.f32 %v3447, %v3659
    %v3692 = vadd.f32 %v3448, %v3660
    %v3693 = vadd.f32 %v3449, %v3661
    %v3694 = vadd.f32 %v3450, %v3662
    %v3695 = vadd.f32 %v3451, %v3663
    %v3696 = vadd.f32 %v3452, %v3664
    %v3697 = vadd.f32 %v3453, %v3665
    %v3698 = vadd.f32 %v3454, %v3666
    %v3699 = vadd.f32 %v3455, %v3667
    %v3700 = vadd.f32 %v3456, %v3668
    %v3701 = vadd.f32 %v3457, %v3669
    %v3704 = vcombine.high %v68, %v68
    %v3706 = vunpack.c.l.s4 1966171168
    %v3707 = vunpack.c.0.s8 %v3706
    %v3708 = vlaneseq
    %v3709 = vshrl.u32 %v3708, 7
    %v3710 = vsub.s32 %v3707, %v3709
    %v3711 = vrot.slane %v68, %v3710
    %v3713 = vunpack.c.l.s4 1966171168
    %v3714 = vunpack.c.0.s8 %v3713
    %v3715 = vlaneseq
    %v3716 = vshrl.u32 %v3715, 7
    %v3717 = vsub.s32 %v3714, %v3716
    %v3718 = vrot.slane %v3704, %v3717
    %v3719 = vcombine.high %v3711, %v3711
    %v3720 = vcombine.high %v3718, %v3718
    %v3722 = vunpack.c.l.s4 1966171168
    %v3723 = vunpack.c.0.s8 %v3722
    %v3724 = vlaneseq
    %v3725 = vshrl.u32 %v3724, 7
    %v3726 = vsub.s32 %v3723, %v3725
    %v3727 = vrot.slane %v3711, %v3726
    %v3729 = vunpack.c.l.s4 1966171168
    %v3730 = vunpack.c.0.s8 %v3729
    %v3731 = vlaneseq
    %v3732 = vshrl.u32 %v3731, 7
    %v3733 = vsub.s32 %v3730, %v3732
    %v3734 = vrot.slane %v3718, %v3733
    %v3736 = vunpack.c.l.s4 1966171168
    %v3737 = vunpack.c.0.s8 %v3736
    %v3738 = vlaneseq
    %v3739 = vshrl.u32 %v3738, 7
    %v3740 = vsub.s32 %v3737, %v3739
    %v3741 = vrot.slane %v3719, %v3740
    %v3743 = vunpack.c.l.s4 1966171168
    %v3744 = vunpack.c.0.s8 %v3743
    %v3745 = vlaneseq
    %v3746 = vshrl.u32 %v3745, 7
    %v3747 = vsub.s32 %v3744, %v3746
    %v3748 = vrot.slane %v3720, %v3747
    %v3749 = vcombine.high %v3727, %v3727
    %v3750 = vcombine.high %v3734, %v3734
    %v3751 = vcombine.high %v3741, %v3741
    %v3752 = vcombine.high %v3748, %v3748
    %v3753 = vcombine.high %v69, %v69
    %v3755 = vunpack.c.l.s4 1966171168
    %v3756 = vunpack.c.0.s8 %v3755
    %v3757 = vlaneseq
    %v3758 = vshrl.u32 %v3757, 7
    %v3759 = vsub.s32 %v3756, %v3758
    %v3760 = vrot.slane %v69, %v3759
    %v3762 = vunpack.c.l.s4 1966171168
    %v3763 = vunpack.c.0.s8 %v3762
    %v3764 = vlaneseq
    %v3765 = vshrl.u32 %v3764, 7
    %v3766 = vsub.s32 %v3763, %v3765
    %v3767 = vrot.slane %v3753, %v3766
    %v3768 = vcombine.high %v3760, %v3760
    %v3769 = vcombine.high %v3767, %v3767
    %v3771 = vunpack.c.l.s4 1966171168
    %v3772 = vunpack.c.0.s8 %v3771
    %v3773 = vlaneseq
    %v3774 = vshrl.u32 %v3773, 7
    %v3775 = vsub.s32 %v3772, %v3774
    %v3776 = vrot.slane %v3760, %v3775
    %v3778 = vunpack.c.l.s4 1966171168
    %v3779 = vunpack.c.0.s8 %v3778
    %v3780 = vlaneseq
    %v3781 = vshrl.u32 %v3780, 7
    %v3782 = vsub.s32 %v3779, %v3781
    %v3783 = vrot.slane %v3767, %v3782
    %v3785 = vunpack.c.l.s4 1966171168
    %v3786 = vunpack.c.0.s8 %v3785
    %v3787 = vlaneseq
    %v3788 = vshrl.u32 %v3787, 7
    %v3789 = vsub.s32 %v3786, %v3788
    %v3790 = vrot.slane %v3768, %v3789
    %v3792 = vunpack.c.l.s4 1966171168
    %v3793 = vunpack.c.0.s8 %v3792
    %v3794 = vlaneseq
    %v3795 = vshrl.u32 %v3794, 7
    %v3796 = vsub.s32 %v3793, %v3795
    %v3797 = vrot.slane %v3769, %v3796
    %v3798 = vcombine.high %v3776, %v3776
    %v3799 = vcombine.high %v3783, %v3783
    %v3800 = vcombine.high %v3790, %v3790
    %v3801 = vcombine.high %v3797, %v3797
    %v3802 = vlaneseq
    %v3803 = vshrl.u32 %v3802, 7
    %v3804 = vsub.s32 0, %v3803
    %v3805 = vrot.slane %v3727, %v3804
    %v3806 = vlaneseq
    %v3807 = vshrl.u32 %v3806, 7
    %v3808 = vsub.s32 0, %v3807
    %v3809 = vrot.slane %v3741, %v3808
    %v3810 = vlaneseq
    %v3811 = vshrl.u32 %v3810, 7
    %v3812 = vsub.s32 0, %v3811
    %v3813 = vrot.slane %v3749, %v3812
    %v3814 = vlaneseq
    %v3815 = vshrl.u32 %v3814, 7
    %v3816 = vsub.s32 0, %v3815
    %v3817 = vrot.slane %v3751, %v3816
    %v3818 = vlaneseq
    %v3819 = vshrl.u32 %v3818, 7
    %v3820 = vsub.s32 0, %v3819
    %v3821 = vrot.slane %v3734, %v3820
    %v3822 = vlaneseq
    %v3823 = vshrl.u32 %v3822, 7
    %v3824 = vsub.s32 0, %v3823
    %v3825 = vrot.slane %v3748, %v3824
    %v3826 = vlaneseq
    %v3827 = vshrl.u32 %v3826, 7
    %v3828 = vsub.s32 0, %v3827
    %v3829 = vrot.slane %v3750, %v3828
    %v3830 = vlaneseq
    %v3831 = vshrl.u32 %v3830, 7
    %v3832 = vsub.s32 0, %v3831
    %v3833 = vrot.slane %v3752, %v3832
    %v3834 = vlaneseq
    %v3835 = vshrl.u32 %v3834, 7
    %v3836 = vsub.s32 0, %v3835
    %v3837 = vrot.slane %v3776, %v3836
    %v3838 = vlaneseq
    %v3839 = vshrl.u32 %v3838, 7
    %v3840 = vsub.s32 0, %v3839
    %v3841 = vrot.slane %v3790, %v3840
    %v3842 = vlaneseq
    %v3843 = vshrl.u32 %v3842, 7
    %v3844 = vsub.s32 0, %v3843
    %v3845 = vrot.slane %v3798, %v3844
    %v3846 = vlaneseq
    %v3847 = vshrl.u32 %v3846, 7
    %v3848 = vsub.s32 0, %v3847
    %v3849 = vrot.slane %v3800, %v3848
    %v3850 = vlaneseq
    %v3851 = vshrl.u32 %v3850, 7
    %v3852 = vsub.s32 0, %v3851
    %v3853 = vrot.slane %v3783, %v3852
    %v3854 = vlaneseq
    %v3855 = vshrl.u32 %v3854, 7
    %v3856 = vsub.s32 0, %v3855
    %v3857 = vrot.slane %v3797, %v3856
    %v3858 = vlaneseq
    %v3859 = vshrl.u32 %v3858, 7
    %v3860 = vsub.s32 0, %v3859
    %v3861 = vrot.slane %v3799, %v3860
    %v3862 = vlaneseq
    %v3863 = vshrl.u32 %v3862, 7
    %v3864 = vsub.s32 0, %v3863
    %v3865 = vrot.slane %v3801, %v3864
    %v3882 = vmul.f32 %v3805, %v282
    %v3883 = vmul.f32 %v3805, %v283
    %v3884 = vmul.f32 %v3809, %v282
    %v3885 = vmul.f32 %v3809, %v283
    %v3886 = vmul.f32 %v3813, %v282
    %v3887 = vmul.f32 %v3813, %v283
    %v3888 = vmul.f32 %v3817, %v282
    %v3889 = vmul.f32 %v3817, %v283
    %v3890 = vmul.f32 %v3821, %v282
    %v3891 = vmul.f32 %v3821, %v283
    %v3892 = vmul.f32 %v3825, %v282
    %v3893 = vmul.f32 %v3825, %v283
    %v3894 = vmul.f32 %v3829, %v282
    %v3895 = vmul.f32 %v3829, %v283
    %v3896 = vmul.f32 %v3833, %v282
    %v3897 = vmul.f32 %v3833, %v283
    %v3898 = vmul.f32 %v3837, %v282
    %v3899 = vmul.f32 %v3837, %v283
    %v3900 = vmul.f32 %v3841, %v282
    %v3901 = vmul.f32 %v3841, %v283
    %v3902 = vmul.f32 %v3845, %v282
    %v3903 = vmul.f32 %v3845, %v283
    %v3904 = vmul.f32 %v3849, %v282
    %v3905 = vmul.f32 %v3849, %v283
    %v3906 = vmul.f32 %v3853, %v282
    %v3907 = vmul.f32 %v3853, %v283
    %v3908 = vmul.f32 %v3857, %v282
    %v3909 = vmul.f32 %v3857, %v283
    %v3910 = vmul.f32 %v3861, %v282
    %v3911 = vmul.f32 %v3861, %v283
    %v3912 = vmul.f32 %v3865, %v282
    %v3913 = vmul.f32 %v3865, %v283
    %v3914 = vadd.f32 %v3670, %v3882
    %v3915 = vadd.f32 %v3671, %v3883
    %v3916 = vadd.f32 %v3672, %v3884
    %v3917 = vadd.f32 %v3673, %v3885
    %v3918 = vadd.f32 %v3674, %v3886
    %v3919 = vadd.f32 %v3675, %v3887
    %v3920 = vadd.f32 %v3676, %v3888
    %v3921 = vadd.f32 %v3677, %v3889
    %v3922 = vadd.f32 %v3678, %v3890
    %v3923 = vadd.f32 %v3679, %v3891
    %v3924 = vadd.f32 %v3680, %v3892
    %v3925 = vadd.f32 %v3681, %v3893
    %v3926 = vadd.f32 %v3682, %v3894
    %v3927 = vadd.f32 %v3683, %v3895
    %v3928 = vadd.f32 %v3684, %v3896
    %v3929 = vadd.f32 %v3685, %v3897
    %v3930 = vadd.f32 %v3686, %v3898
    %v3931 = vadd.f32 %v3687, %v3899
    %v3932 = vadd.f32 %v3688, %v3900
    %v3933 = vadd.f32 %v3689, %v3901
    %v3934 = vadd.f32 %v3690, %v3902
    %v3935 = vadd.f32 %v3691, %v3903
    %v3936 = vadd.f32 %v3692, %v3904
    %v3937 = vadd.f32 %v3693, %v3905
    %v3938 = vadd.f32 %v3694, %v3906
    %v3939 = vadd.f32 %v3695, %v3907
    %v3940 = vadd.f32 %v3696, %v3908
    %v3941 = vadd.f32 %v3697, %v3909
    %v3942 = vadd.f32 %v3698, %v3910
    %v3943 = vadd.f32 %v3699, %v3911
    %v3944 = vadd.f32 %v3700, %v3912
    %v3945 = vadd.f32 %v3701, %v3913
    %v3948 = vcombine.high %v70, %v70
    %v3950 = vunpack.c.l.s4 1966171168
    %v3951 = vunpack.c.0.s8 %v3950
    %v3952 = vlaneseq
    %v3953 = vshrl.u32 %v3952, 7
    %v3954 = vsub.s32 %v3951, %v3953
    %v3955 = vrot.slane %v70, %v3954
    %v3957 = vunpack.c.l.s4 1966171168
    %v3958 = vunpack.c.0.s8 %v3957
    %v3959 = vlaneseq
    %v3960 = vshrl.u32 %v3959, 7
    %v3961 = vsub.s32 %v3958, %v3960
    %v3962 = vrot.slane %v3948, %v3961
    %v3963 = vcombine.high %v3955, %v3955
    %v3964 = vcombine.high %v3962, %v3962
    %v3966 = vunpack.c.l.s4 1966171168
    %v3967 = vunpack.c.0.s8 %v3966
    %v3968 = vlaneseq
    %v3969 = vshrl.u32 %v3968, 7
    %v3970 = vsub.s32 %v3967, %v3969
    %v3971 = vrot.slane %v3955, %v3970
    %v3973 = vunpack.c.l.s4 1966171168
    %v3974 = vunpack.c.0.s8 %v3973
    %v3975 = vlaneseq
    %v3976 = vshrl.u32 %v3975, 7
    %v3977 = vsub.s32 %v3974, %v3976
    %v3978 = vrot.slane %v3962, %v3977
    %v3980 = vunpack.c.l.s4 1966171168
    %v3981 = vunpack.c.0.s8 %v3980
    %v3982 = vlaneseq
    %v3983 = vshrl.u32 %v3982, 7
    %v3984 = vsub.s32 %v3981, %v3983
    %v3985 = vrot.slane %v3963, %v3984
    %v3987 = vunpack.c.l.s4 1966171168
    %v3988 = vunpack.c.0.s8 %v3987
    %v3989 = vlaneseq
    %v3990 = vshrl.u32 %v3989, 7
    %v3991 = vsub.s32 %v3988, %v3990
    %v3992 = vrot.slane %v3964, %v3991
    %v3993 = vcombine.high %v3971, %v3971
    %v3994 = vcombine.high %v3978, %v3978
    %v3995 = vcombine.high %v3985, %v3985
    %v3996 = vcombine.high %v3992, %v3992
    %v3997 = vcombine.high %v71, %v71
    %v3999 = vunpack.c.l.s4 1966171168
    %v4000 = vunpack.c.0.s8 %v3999
    %v4001 = vlaneseq
    %v4002 = vshrl.u32 %v4001, 7
    %v4003 = vsub.s32 %v4000, %v4002
    %v4004 = vrot.slane %v71, %v4003
    %v4006 = vunpack.c.l.s4 1966171168
    %v4007 = vunpack.c.0.s8 %v4006
    %v4008 = vlaneseq
    %v4009 = vshrl.u32 %v4008, 7
    %v4010 = vsub.s32 %v4007, %v4009
    %v4011 = vrot.slane %v3997, %v4010
    %v4012 = vcombine.high %v4004, %v4004
    %v4013 = vcombine.high %v4011, %v4011
    %v4015 = vunpack.c.l.s4 1966171168
    %v4016 = vunpack.c.0.s8 %v4015
    %v4017 = vlaneseq
    %v4018 = vshrl.u32 %v4017, 7
    %v4019 = vsub.s32 %v4016, %v4018
    %v4020 = vrot.slane %v4004, %v4019
    %v4022 = vunpack.c.l.s4 1966171168
    %v4023 = vunpack.c.0.s8 %v4022
    %v4024 = vlaneseq
    %v4025 = vshrl.u32 %v4024, 7
    %v4026 = vsub.s32 %v4023, %v4025
    %v4027 = vrot.slane %v4011, %v4026
    %v4029 = vunpack.c.l.s4 1966171168
    %v4030 = vunpack.c.0.s8 %v4029
    %v4031 = vlaneseq
    %v4032 = vshrl.u32 %v4031, 7
    %v4033 = vsub.s32 %v4030, %v4032
    %v4034 = vrot.slane %v4012, %v4033
    %v4036 = vunpack.c.l.s4 1966171168
    %v4037 = vunpack.c.0.s8 %v4036
    %v4038 = vlaneseq
    %v4039 = vshrl.u32 %v4038, 7
    %v4040 = vsub.s32 %v4037, %v4039
    %v4041 = vrot.slane %v4013, %v4040
    %v4042 = vcombine.high %v4020, %v4020
    %v4043 = vcombine.high %v4027, %v4027
    %v4044 = vcombine.high %v4034, %v4034
    %v4045 = vcombine.high %v4041, %v4041
    %v4046 = vlaneseq
    %v4047 = vshrl.u32 %v4046, 7
    %v4048 = vsub.s32 0, %v4047
    %v4049 = vrot.slane %v3971, %v4048
    %v4050 = vlaneseq
    %v4051 = vshrl.u32 %v4050, 7
    %v4052 = vsub.s32 0, %v4051
    %v4053 = vrot.slane %v3985, %v4052
    %v4054 = vlaneseq
    %v4055 = vshrl.u32 %v4054, 7
    %v4056 = vsub.s32 0, %v4055
    %v4057 = vrot.slane %v3993, %v4056
    %v4058 = vlaneseq
    %v4059 = vshrl.u32 %v4058, 7
    %v4060 = vsub.s32 0, %v4059
    %v4061 = vrot.slane %v3995, %v4060
    %v4062 = vlaneseq
    %v4063 = vshrl.u32 %v4062, 7
    %v4064 = vsub.s32 0, %v4063
    %v4065 = vrot.slane %v3978, %v4064
    %v4066 = vlaneseq
    %v4067 = vshrl.u32 %v4066, 7
    %v4068 = vsub.s32 0, %v4067
    %v4069 = vrot.slane %v3992, %v4068
    %v4070 = vlaneseq
    %v4071 = vshrl.u32 %v4070, 7
    %v4072 = vsub.s32 0, %v4071
    %v4073 = vrot.slane %v3994, %v4072
    %v4074 = vlaneseq
    %v4075 = vshrl.u32 %v4074, 7
    %v4076 = vsub.s32 0, %v4075
    %v4077 = vrot.slane %v3996, %v4076
    %v4078 = vlaneseq
    %v4079 = vshrl.u32 %v4078, 7
    %v4080 = vsub.s32 0, %v4079
    %v4081 = vrot.slane %v4020, %v4080
    %v4082 = vlaneseq
    %v4083 = vshrl.u32 %v4082, 7
    %v4084 = vsub.s32 0, %v4083
    %v4085 = vrot.slane %v4034, %v4084
    %v4086 = vlaneseq
    %v4087 = vshrl.u32 %v4086, 7
    %v4088 = vsub.s32 0, %v4087
    %v4089 = vrot.slane %v4042, %v4088
    %v4090 = vlaneseq
    %v4091 = vshrl.u32 %v4090, 7
    %v4092 = vsub.s32 0, %v4091
    %v4093 = vrot.slane %v4044, %v4092
    %v4094 = vlaneseq
    %v4095 = vshrl.u32 %v4094, 7
    %v4096 = vsub.s32 0, %v4095
    %v4097 = vrot.slane %v4027, %v4096
    %v4098 = vlaneseq
    %v4099 = vshrl.u32 %v4098, 7
    %v4100 = vsub.s32 0, %v4099
    %v4101 = vrot.slane %v4041, %v4100
    %v4102 = vlaneseq
    %v4103 = vshrl.u32 %v4102, 7
    %v4104 = vsub.s32 0, %v4103
    %v4105 = vrot.slane %v4043, %v4104
    %v4106 = vlaneseq
    %v4107 = vshrl.u32 %v4106, 7
    %v4108 = vsub.s32 0, %v4107
    %v4109 = vrot.slane %v4045, %v4108
    %v4126 = vmul.f32 %v4049, %v284
    %v4127 = vmul.f32 %v4049, %v285
    %v4128 = vmul.f32 %v4053, %v284
    %v4129 = vmul.f32 %v4053, %v285
    %v4130 = vmul.f32 %v4057, %v284
    %v4131 = vmul.f32 %v4057, %v285
    %v4132 = vmul.f32 %v4061, %v284
    %v4133 = vmul.f32 %v4061, %v285
    %v4134 = vmul.f32 %v4065, %v284
    %v4135 = vmul.f32 %v4065, %v285
    %v4136 = vmul.f32 %v4069, %v284
    %v4137 = vmul.f32 %v4069, %v285
    %v4138 = vmul.f32 %v4073, %v284
    %v4139 = vmul.f32 %v4073, %v285
    %v4140 = vmul.f32 %v4077, %v284
    %v4141 = vmul.f32 %v4077, %v285
    %v4142 = vmul.f32 %v4081, %v284
    %v4143 = vmul.f32 %v4081, %v285
    %v4144 = vmul.f32 %v4085, %v284
    %v4145 = vmul.f32 %v4085, %v285
    %v4146 = vmul.f32 %v4089, %v284
    %v4147 = vmul.f32 %v4089, %v285
    %v4148 = vmul.f32 %v4093, %v284
    %v4149 = vmul.f32 %v4093, %v285
    %v4150 = vmul.f32 %v4097, %v284
    %v4151 = vmul.f32 %v4097, %v285
    %v4152 = vmul.f32 %v4101, %v284
    %v4153 = vmul.f32 %v4101, %v285
    %v4154 = vmul.f32 %v4105, %v284
    %v4155 = vmul.f32 %v4105, %v285
    %v4156 = vmul.f32 %v4109, %v284
    %v4157 = vmul.f32 %v4109, %v285
    %v4158 = vadd.f32 %v3914, %v4126
    %v4159 = vadd.f32 %v3915, %v4127
    %v4160 = vadd.f32 %v3916, %v4128
    %v4161 = vadd.f32 %v3917, %v4129
    %v4162 = vadd.f32 %v3918, %v4130
    %v4163 = vadd.f32 %v3919, %v4131
    %v4164 = vadd.f32 %v3920, %v4132
    %v4165 = vadd.f32 %v3921, %v4133
    %v4166 = vadd.f32 %v3922, %v4134
    %v4167 = vadd.f32 %v3923, %v4135
    %v4168 = vadd.f32 %v3924, %v4136
    %v4169 = vadd.f32 %v3925, %v4137
    %v4170 = vadd.f32 %v3926, %v4138
    %v4171 = vadd.f32 %v3927, %v4139
    %v4172 = vadd.f32 %v3928, %v4140
    %v4173 = vadd.f32 %v3929, %v4141
    %v4174 = vadd.f32 %v3930, %v4142
    %v4175 = vadd.f32 %v3931, %v4143
    %v4176 = vadd.f32 %v3932, %v4144
    %v4177 = vadd.f32 %v3933, %v4145
    %v4178 = vadd.f32 %v3934, %v4146
    %v4179 = vadd.f32 %v3935, %v4147
    %v4180 = vadd.f32 %v3936, %v4148
    %v4181 = vadd.f32 %v3937, %v4149
    %v4182 = vadd.f32 %v3938, %v4150
    %v4183 = vadd.f32 %v3939, %v4151
    %v4184 = vadd.f32 %v3940, %v4152
    %v4185 = vadd.f32 %v3941, %v4153
    %v4186 = vadd.f32 %v3942, %v4154
    %v4187 = vadd.f32 %v3943, %v4155
    %v4188 = vadd.f32 %v3944, %v4156
    %v4189 = vadd.f32 %v3945, %v4157
    %4190 = vst [vmem:[#allocation7] sm:$0xff] %v4158
    %4191 = vst [vmem:[#allocation7 + $0x8] sm:$0xff] %v4159
    %4192 = vst [vmem:[#allocation7 + $0x10] sm:$0xff] %v4160
    %4193 = vst [vmem:[#allocation7 + $0x18] sm:$0xff] %v4161
    %4194 = vst [vmem:[#allocation7 + $0x20] sm:$0xff] %v4162
    %4195 = vst [vmem:[#allocation7 + $0x28] sm:$0xff] %v4163
    %4196 = vst [vmem:[#allocation7 + $0x30] sm:$0xff] %v4164
    %4197 = vst [vmem:[#allocation7 + $0x38] sm:$0xff] %v4165
    %4198 = vst [vmem:[#allocation7 + $0x40] sm:$0xff] %v4166
    %4199 = vst [vmem:[#allocation7 + $0x48] sm:$0xff] %v4167
    %4200 = vst [vmem:[#allocation7 + $0x50] sm:$0xff] %v4168
    %4201 = vst [vmem:[#allocation7 + $0x58] sm:$0xff] %v4169
    %4202 = vst [vmem:[#allocation7 + $0x60] sm:$0xff] %v4170
    %4203 = vst [vmem:[#allocation7 + $0x68] sm:$0xff] %v4171
    %4204 = vst [vmem:[#allocation7 + $0x70] sm:$0xff] %v4172
    %4205 = vst [vmem:[#allocation7 + $0x78] sm:$0xff] %v4173
    %4206 = vst [vmem:[#allocation7 + $0x80] sm:$0xff] %v4174
    %4207 = vst [vmem:[#allocation7 + $0x88] sm:$0xff] %v4175
    %4208 = vst [vmem:[#allocation7 + $0x90] sm:$0xff] %v4176
    %4209 = vst [vmem:[#allocation7 + $0x98] sm:$0xff] %v4177
    %4210 = vst [vmem:[#allocation7 + $0xa0] sm:$0xff] %v4178
    %4211 = vst [vmem:[#allocation7 + $0xa8] sm:$0xff] %v4179
    %4212 = vst [vmem:[#allocation7 + $0xb0] sm:$0xff] %v4180
    %4213 = vst [vmem:[#allocation7 + $0xb8] sm:$0xff] %v4181
    %4214 = vst [vmem:[#allocation7 + $0xc0] sm:$0xff] %v4182
    %4215 = vst [vmem:[#allocation7 + $0xc8] sm:$0xff] %v4183
    %4216 = vst [vmem:[#allocation7 + $0xd0] sm:$0xff] %v4184
    %4217 = vst [vmem:[#allocation7 + $0xd8] sm:$0xff] %v4185
    %4218 = vst [vmem:[#allocation7 + $0xe0] sm:$0xff] %v4186
    %4219 = vst [vmem:[#allocation7 + $0xe8] sm:$0xff] %v4187
    %4220 = vst [vmem:[#allocation7 + $0xf0] sm:$0xff] %v4188
    %4221 = vst [vmem:[#allocation7 + $0xf8] sm:$0xff] %v4189
    // Predicated region
    $region18: #{tpu_custom_call.1} parent=1 // pred_check
      _
    $region19: #{tpu_custom_call.1} parent=1 // pred_check_branch
      %4223 = sbr.rel (0) target = $region21
    $region20: #{tpu_custom_call.1} parent=1 // pred_region
      %s4225 = ssub.s32 4096, 4096
      %4226 = vsyncadd [#allocation4], %s4225
      %s4227 = sshll.u32 [#allocation7], 4
      %s4228 = int_to_ptr.vmem [resolvable:$true] %s4227
      %4233 = dma.vmem_to_hbm [thread:$0]  %s4228, 4096, %s2, [#allocation4], 128, 128, 8
    $region21: #{tpu_custom_call.1} parent=1 // pred_fallthru
      _
    // Predicated region
    $region22: #{tpu_custom_call.1} parent=1 // pred_check
      _
    $region23: #{tpu_custom_call.1} parent=1 // pred_check_branch
      %4235 = sbr.rel (0) target = $region25
    $region24: #{tpu_custom_call.1} parent=1 // pred_region
      %4236 = dma.done [#allocation4], 4096
    $region25: #{tpu_custom_call.1} parent=1 // pred_fallthru
      _
    %4237 = vsyncpa [#allocation3], 1
    %4238 = vsyncpa [#allocation6], 1
    %4239 = vsyncpa [#allocation4], 1

</llo_original>
